<compile_context>
chip_gen: v7x
topology: tpu7x:2x2x1
jax: 0.10.0
libtpu: 0.0.40
codegen_flags: <defaults>
</compile_context>

<pallas_src>
import functools

import jax
import jax.numpy as jnp
from jax import lax
from jax.experimental import pallas as pl
from jax.experimental.pallas import tpu as pltpu


# ----------------------------- in-kernel helpers ----------------------------

def _conv3x3_cfirst(x, w2d, b_col, *, relu):
    """3x3 SAME conv on a channel-first image via a single im2col matmul.

    x:     (Cin, H, W) float32 (resident in VMEM/vregs)
    w2d:   (Cout, 9*Cin)   columns ordered (kh, kw, cin) row-major
    b_col: (Cout, 1)
    returns (Cout, H*W) float32  -- spatial dim on lanes (lane-dense).
    """
    cin, H, W = x.shape
    # Zero padding done in VMEM via concatenation (no HBM pad copy).
    zr = jnp.zeros((cin, 1, W), x.dtype)
    xp = jnp.concatenate([zr, x, zr], axis=1)            # (Cin, H+2, W)
    zc = jnp.zeros((cin, H + 2, 1), x.dtype)
    xp = jnp.concatenate([zc, xp, zc], axis=2)           # (Cin, H+2, W+2)
    # im2col: 9 shifted views stacked along the contraction axis (K = 9*Cin).
    taps = [xp[:, kh:kh + H, kw:kw + W] for kh in range(3) for kw in range(3)]
    xcat = jnp.concatenate(taps, axis=0).reshape(9 * cin, H * W)
    # One MXU matmul: (Cout, 9*Cin) @ (9*Cin, H*W) -> (Cout, H*W).
    y = jnp.dot(w2d, xcat, preferred_element_type=jnp.float32) + b_col
    if relu:
        y = jnp.maximum(y, 0.0)
    return y


def _dpt_head_kernel(x_ref, w1_ref, b1_ref, w2_ref, b2_ref, w3_ref, b3_ref,
                     *rest, upsample):
    # rest = (Mh, MwT, out) when upsample else (out,)
    if upsample:
        mh_ref, mwT_ref, o_ref = rest
    else:
        (o_ref,) = rest

    x = x_ref[0].astype(jnp.float32)                     # (Cin, H, W)
    _, H, W = x.shape
    c1 = w1_ref.shape[0]

    # conv1 (3x3).  ReLU replaces the upsample in the non-upsample branch.
    y = _conv3x3_cfirst(x, w1_ref[...], b1_ref[...], relu=not upsample)  # (C1, H*W)
    y3 = y.reshape(c1, H, W)

    if upsample:
        Ho, Wo = 2 * H, 2 * W
        # Separable bilinear x2 (align_corners=True) as two batched matmuls,
        # keeping channels as the batch dim and W on lanes throughout.
        #   along W: out[c,h,wo] = sum_w y3[c,h,w] * MwT[w,wo]
        mwT_b = jnp.broadcast_to(mwT_ref[...], (c1, W, Wo))
        yW = lax.dot_general(y3, mwT_b,
                             dimension_numbers=(((2,), (1,)), ((0,), (0,))),
                             preferred_element_type=jnp.float32)   # (C1, H, Wo)
        #   along H: out[c,ho,wo] = sum_h Mh[ho,h] * yW[c,h,wo]
        mh_b = jnp.broadcast_to(mh_ref[...], (c1, Ho, H))
        y3 = lax.dot_general(mh_b, yW,
                             dimension_numbers=(((2,), (1,)), ((0,), (0,))),
                             preferred_element_type=jnp.float32)   # (C1, Ho, Wo)

    # conv2 (3x3) + ReLU.
    y = _conv3x3_cfirst(y3, w2_ref[...], b2_ref[...], relu=True)   # (32, H'*W')

    # conv3 (1x1) + ReLU:  (Cout, 32) @ (32, H'*W').
    z = jnp.dot(w3_ref[...], y, preferred_element_type=jnp.float32) + b3_ref[...]
    o_ref[0] = jnp.maximum(z, 0.0).astype(o_ref.dtype)             # (Cout, H'*W')


# ------------------------------ host wrapper ---------------------------------

def _linear_resize_matrix(in_size, out_size):
    # PyTorch bilinear, align_corners=True, 1-D weights as a dense (out, in) matrix.
    src = jnp.arange(out_size, dtype=jnp.float32) * (in_size - 1) / (out_size - 1)
    lo = jnp.clip(jnp.floor(src).astype(jnp.int32), 0, in_size - 2)
    hi = jnp.minimum(lo + 1, in_size - 1)
    frac = src - lo.astype(jnp.float32)
    eye = jnp.eye(in_size, dtype=jnp.float32)
    return (1.0 - frac)[:, None] * eye[lo] + frac[:, None] * eye[hi]


def dpt_head_forward(x_nchw, params, upsample):
    """Fused DPTHead forward.  x_nchw: (N, Cin, H, W) -> (N, Cout, H', W')."""
    w1, b1, w2, b2, w3, b3 = params                      # HWIO conv weights
    N, Cin, H, W = x_nchw.shape
    C1 = w1.shape[-1]
    C2 = w2.shape[-1]
    Cout = w3.shape[-1]
    H2, W2 = (2 * H, 2 * W) if upsample else (H, W)

    # Host-side weight prep: matmul-friendly lane-dense 2-D slabs.
    w1m = w1.reshape(9 * Cin, C1).T                      # (C1, 9*Cin)
    w2m = w2.reshape(9 * C1, C2).T                       # (C2, 9*C1)
    w3m = w3.T                                           # (Cout, 32)
    b1c, b2c, b3c = b1.reshape(C1, 1), b2.reshape(C2, 1), b3.reshape(Cout, 1)

    operands = [x_nchw, w1m, b1c, w2m, b2c, w3m, b3c]
    in_specs = [
        pl.BlockSpec((1, Cin, H, W), lambda n: (n, 0, 0, 0)),
        pl.BlockSpec(w1m.shape, lambda n: (0, 0)),
        pl.BlockSpec(b1c.shape, lambda n: (0, 0)),
        pl.BlockSpec(w2m.shape, lambda n: (0, 0)),
        pl.BlockSpec(b2c.shape, lambda n: (0, 0)),
        pl.BlockSpec(w3m.shape, lambda n: (0, 0)),
        pl.BlockSpec(b3c.shape, lambda n: (0, 0)),
    ]
    if upsample:
        mh = _linear_resize_matrix(H, H2)                # (2H, H)
        mwT = _linear_resize_matrix(W, W2).T             # (W, 2W)
        operands += [mh, mwT]
        in_specs += [pl.BlockSpec(mh.shape, lambda n: (0, 0)),
                     pl.BlockSpec(mwT.shape, lambda n: (0, 0))]

    out = pl.pallas_call(
        functools.partial(_dpt_head_kernel, upsample=upsample),
        out_shape=jax.ShapeDtypeStruct((N, Cout, H2 * W2), x_nchw.dtype),
        grid=(N,),
        in_specs=in_specs,
        out_specs=pl.BlockSpec((1, Cout, H2 * W2), lambda n: (n, 0, 0)),
        compiler_params=pltpu.CompilerParams(dimension_semantics=("parallel",)),
    )(*operands)
    # Kernel emits a lane-dense (N, Cout, H*W) slab; this reshape is free in HBM.
    return out.reshape(N, Cout, H2, W2)


# ------------------------------ params / reference ---------------------------

def init_dpt_head_params(key, num_cnn_features, output_channels):
    c = num_cnn_features
    ks = jax.random.split(key, 6)
    # HWIO weight layout (same math as PyTorch OIHW convs).
    w1 = jax.random.normal(ks[0], (3, 3, c, c // 2), jnp.float32) / jnp.sqrt(9.0 * c)
    b1 = jax.random.normal(ks[1], (c // 2,), jnp.float32) * 0.01
    w2 = jax.random.normal(ks[2], (3, 3, c // 2, 32), jnp.float32) / jnp.sqrt(9.0 * (c // 2))
    b2 = jax.random.normal(ks[3], (32,), jnp.float32) * 0.01
    w3 = jax.random.normal(ks[4], (32, output_channels), jnp.float32) / jnp.sqrt(32.0)
    b3 = jax.random.normal(ks[5], (output_channels,), jnp.float32) * 0.01
    return (w1, b1, w2, b2, w3, b3)


def _ref_forward(x_nchw, params, upsample):
    w1, b1, w2, b2, w3, b3 = params
    dn = ("NCHW", "HWIO", "NCHW")
    y = lax.conv_general_dilated(x_nchw, w1, (1, 1), "SAME", dimension_numbers=dn)
    y = y + b1.reshape(1, -1, 1, 1)
    if upsample:
        H, W = y.shape[2], y.shape[3]
        Mh = _linear_resize_matrix(H, 2 * H)
        Mw = _linear_resize_matrix(W, 2 * W)
        y = jnp.einsum("oh,nchw,pw->ncop", Mh, y, Mw)
    else:
        y = jnp.maximum(y, 0.0)
    y = lax.conv_general_dilated(y, w2, (1, 1), "SAME", dimension_numbers=dn)
    y = jnp.maximum(y + b2.reshape(1, -1, 1, 1), 0.0)
    y = lax.conv_general_dilated(y, w3.reshape(1, 1, 32, -1), (1, 1), "SAME",
                                 dimension_numbers=dn)
    y = jnp.maximum(y + b3.reshape(1, -1, 1, 1), 0.0)
    return y


# --------------------------------- main --------------------------------------

if __name__ == "__main__":
    key = jax.random.PRNGKey(0)
    kx, kp = jax.random.split(key)

    N, C, H, W = 2, 4, 16, 16
    output_channels = 3
    x = jax.random.normal(kx, (N, C, H, W), jnp.float32)     # NCHW like PyTorch
    params = init_dpt_head_params(kp, C, output_channels)

    for upsample in (True, False):
        out = jax.block_until_ready(dpt_head_forward(x, params, upsample))
        ref = jax.block_until_ready(_ref_forward(x, params, upsample))
        assert out.shape == ref.shape, (out.shape, ref.shape)
        err = float(jnp.max(jnp.abs(out - ref)))
        assert err < 2e-4, f"mismatch (upsample={upsample}): max abs err {err}"

    print("KERNEL_OK")
</pallas_src>

<mosaic_0001>
module attributes {stable_mosaic.version = 11 : i64} {
  func.func @_dpt_head_kernel(%arg0: i32, %arg1: memref<1x4x16x16xf32, #tpu.memory_space<vmem>>, %arg2: memref<2x36xf32, #tpu.memory_space<vmem>>, %arg3: memref<2x1xf32, #tpu.memory_space<vmem>>, %arg4: memref<32x18xf32, #tpu.memory_space<vmem>>, %arg5: memref<32x1xf32, #tpu.memory_space<vmem>>, %arg6: memref<3x32xf32, #tpu.memory_space<vmem>>, %arg7: memref<3x1xf32, #tpu.memory_space<vmem>>, %arg8: memref<32x16xf32, #tpu.memory_space<vmem>>, %arg9: memref<16x32xf32, #tpu.memory_space<vmem>>, %arg10: memref<1x3x1024xf32, #tpu.memory_space<vmem>>) attributes {dimension_semantics = [#tpu.dimension_semantics<parallel>], iteration_bounds = array<i64: 2>, scalar_prefetch = 0 : i64, scratch_operands = 0 : i64, tpu.core_type = #tpu.core_type<tc>, window_params = [{transform_indices = @transform_0, window_bounds = array<i64: 1, 4, 16, 16>}, {pipeline_mode = #tpu.pipeline_mode<synchronous>, transform_indices = @transform_1, window_bounds = array<i64: 2, 36>}, {pipeline_mode = #tpu.pipeline_mode<synchronous>, transform_indices = @transform_2, window_bounds = array<i64: 2, 1>}, {pipeline_mode = #tpu.pipeline_mode<synchronous>, transform_indices = @transform_3, window_bounds = array<i64: 32, 18>}, {pipeline_mode = #tpu.pipeline_mode<synchronous>, transform_indices = @transform_4, window_bounds = array<i64: 32, 1>}, {pipeline_mode = #tpu.pipeline_mode<synchronous>, transform_indices = @transform_5, window_bounds = array<i64: 3, 32>}, {pipeline_mode = #tpu.pipeline_mode<synchronous>, transform_indices = @transform_6, window_bounds = array<i64: 3, 1>}, {pipeline_mode = #tpu.pipeline_mode<synchronous>, transform_indices = @transform_7, window_bounds = array<i64: 32, 16>}, {pipeline_mode = #tpu.pipeline_mode<synchronous>, transform_indices = @transform_8, window_bounds = array<i64: 16, 32>}, {transform_indices = @transform_9, window_bounds = array<i64: 1, 3, 1024>}]} {
    %c0 = arith.constant 0 : index
    %c0_0 = arith.constant 0 : index
    %c0_1 = arith.constant 0 : index
    %c0_2 = arith.constant 0 : index
    %0 = vector.load %arg1[%c0, %c0_0, %c0_1, %c0_2] : memref<1x4x16x16xf32, #tpu.memory_space<vmem>>, vector<1x4x16x16xf32>
    %1 = vector.shape_cast %0 : vector<1x4x16x16xf32> to vector<4x16x16xf32>
    %c0_3 = arith.constant 0 : index
    %c0_4 = arith.constant 0 : index
    %2 = vector.load %arg2[%c0_3, %c0_4] : memref<2x36xf32, #tpu.memory_space<vmem>>, vector<2x36xf32>
    %c0_5 = arith.constant 0 : index
    %c0_6 = arith.constant 0 : index
    %3 = vector.load %arg3[%c0_5, %c0_6] : memref<2x1xf32, #tpu.memory_space<vmem>>, vector<2x1xf32>
    %cst = arith.constant 0.000000e+00 : f32
    %4 = vector.broadcast %cst : f32 to vector<4x1x16xf32>
    %5 = tpu.concatenate %4, %1, %4 in 1 : vector<4x1x16xf32>, vector<4x16x16xf32>, vector<4x1x16xf32> -> vector<4x18x16xf32>
    %cst_7 = arith.constant 0.000000e+00 : f32
    %6 = vector.broadcast %cst_7 : f32 to vector<4x18x1xf32>
    %7 = tpu.concatenate %6, %5, %6 in 2 : vector<4x18x1xf32>, vector<4x18x16xf32>, vector<4x18x1xf32> -> vector<4x18x18xf32>
    %8 = vector.extract_strided_slice %7 {offsets = [0, 0, 0], sizes = [4, 16, 16], strides = [1, 1, 1]} : vector<4x18x18xf32> to vector<4x16x16xf32>
    %9 = vector.extract_strided_slice %7 {offsets = [0, 0, 1], sizes = [4, 16, 16], strides = [1, 1, 1]} : vector<4x18x18xf32> to vector<4x16x16xf32>
    %10 = vector.extract_strided_slice %7 {offsets = [0, 0, 2], sizes = [4, 16, 16], strides = [1, 1, 1]} : vector<4x18x18xf32> to vector<4x16x16xf32>
    %11 = vector.extract_strided_slice %7 {offsets = [0, 1, 0], sizes = [4, 16, 16], strides = [1, 1, 1]} : vector<4x18x18xf32> to vector<4x16x16xf32>
    %12 = vector.extract_strided_slice %7 {offsets = [0, 1, 1], sizes = [4, 16, 16], strides = [1, 1, 1]} : vector<4x18x18xf32> to vector<4x16x16xf32>
    %13 = vector.extract_strided_slice %7 {offsets = [0, 1, 2], sizes = [4, 16, 16], strides = [1, 1, 1]} : vector<4x18x18xf32> to vector<4x16x16xf32>
    %14 = vector.extract_strided_slice %7 {offsets = [0, 2, 0], sizes = [4, 16, 16], strides = [1, 1, 1]} : vector<4x18x18xf32> to vector<4x16x16xf32>
    %15 = vector.extract_strided_slice %7 {offsets = [0, 2, 1], sizes = [4, 16, 16], strides = [1, 1, 1]} : vector<4x18x18xf32> to vector<4x16x16xf32>
    %16 = vector.extract_strided_slice %7 {offsets = [0, 2, 2], sizes = [4, 16, 16], strides = [1, 1, 1]} : vector<4x18x18xf32> to vector<4x16x16xf32>
    %17 = tpu.concatenate %8, %9, %10, %11, %12, %13, %14, %15, %16 in 0 : vector<4x16x16xf32>, vector<4x16x16xf32>, vector<4x16x16xf32>, vector<4x16x16xf32>, vector<4x16x16xf32>, vector<4x16x16xf32>, vector<4x16x16xf32>, vector<4x16x16xf32>, vector<4x16x16xf32> -> vector<36x16x16xf32>
    %18 = vector.shape_cast %17 : vector<36x16x16xf32> to vector<36x256xf32>
    %cst_8 = arith.constant dense<0.000000e+00> : vector<2x256xf32>
    %19 = tpu.matmul %2, %18, %cst_8 {dimension_numbers = #tpu.dot_dimension_numbers<[1], [0], [0], [1], [0, 0, 1, 1], [], []>} : vector<2x36xf32>, vector<36x256xf32>, vector<2x256xf32> -> vector<2x256xf32>
    %20 = vector.broadcast %3 : vector<2x1xf32> to vector<2x256xf32>
    %21 = arith.addf %19, %20 : vector<2x256xf32>
    %22 = vector.shape_cast %21 : vector<2x256xf32> to vector<2x16x16xf32>
    %c0_9 = arith.constant 0 : index
    %c0_10 = arith.constant 0 : index
    %23 = vector.load %arg9[%c0_9, %c0_10] : memref<16x32xf32, #tpu.memory_space<vmem>>, vector<16x32xf32>
    %24 = vector.shape_cast %23 : vector<16x32xf32> to vector<1x16x32xf32>
    %25 = vector.broadcast %24 : vector<1x16x32xf32> to vector<2x16x32xf32>
    %cst_11 = arith.constant dense<0.000000e+00> : vector<2x16x32xf32>
    %26 = tpu.matmul %22, %25, %cst_11 {dimension_numbers = #tpu.dot_dimension_numbers<[2], [1], [1], [2], [0, 0, 0, 1, 1, 2], [0], [0]>} : vector<2x16x16xf32>, vector<2x16x32xf32>, vector<2x16x32xf32> -> vector<2x16x32xf32>
    %c0_12 = arith.constant 0 : index
    %c0_13 = arith.constant 0 : index
    %27 = vector.load %arg8[%c0_12, %c0_13] : memref<32x16xf32, #tpu.memory_space<vmem>>, vector<32x16xf32>
    %28 = vector.shape_cast %27 : vector<32x16xf32> to vector<1x32x16xf32>
    %29 = vector.broadcast %28 : vector<1x32x16xf32> to vector<2x32x16xf32>
    %cst_14 = arith.constant dense<0.000000e+00> : vector<2x32x32xf32>
    %30 = tpu.matmul %29, %26, %cst_14 {dimension_numbers = #tpu.dot_dimension_numbers<[2], [1], [1], [2], [0, 0, 0, 1, 1, 2], [0], [0]>} : vector<2x32x16xf32>, vector<2x16x32xf32>, vector<2x32x32xf32> -> vector<2x32x32xf32>
    %c0_15 = arith.constant 0 : index
    %c0_16 = arith.constant 0 : index
    %31 = vector.load %arg4[%c0_15, %c0_16] : memref<32x18xf32, #tpu.memory_space<vmem>>, vector<32x18xf32>
    %c0_17 = arith.constant 0 : index
    %c0_18 = arith.constant 0 : index
    %32 = vector.load %arg5[%c0_17, %c0_18] : memref<32x1xf32, #tpu.memory_space<vmem>>, vector<32x1xf32>
    %cst_19 = arith.constant 0.000000e+00 : f32
    %33 = vector.broadcast %cst_19 : f32 to vector<2x1x32xf32>
    %34 = tpu.concatenate %33, %30, %33 in 1 : vector<2x1x32xf32>, vector<2x32x32xf32>, vector<2x1x32xf32> -> vector<2x34x32xf32>
    %cst_20 = arith.constant 0.000000e+00 : f32
    %35 = vector.broadcast %cst_20 : f32 to vector<2x34x1xf32>
    %36 = tpu.concatenate %35, %34, %35 in 2 : vector<2x34x1xf32>, vector<2x34x32xf32>, vector<2x34x1xf32> -> vector<2x34x34xf32>
    %37 = vector.extract_strided_slice %36 {offsets = [0, 0, 0], sizes = [2, 32, 32], strides = [1, 1, 1]} : vector<2x34x34xf32> to vector<2x32x32xf32>
    %38 = vector.extract_strided_slice %36 {offsets = [0, 0, 1], sizes = [2, 32, 32], strides = [1, 1, 1]} : vector<2x34x34xf32> to vector<2x32x32xf32>
    %39 = vector.extract_strided_slice %36 {offsets = [0, 0, 2], sizes = [2, 32, 32], strides = [1, 1, 1]} : vector<2x34x34xf32> to vector<2x32x32xf32>
    %40 = vector.extract_strided_slice %36 {offsets = [0, 1, 0], sizes = [2, 32, 32], strides = [1, 1, 1]} : vector<2x34x34xf32> to vector<2x32x32xf32>
    %41 = vector.extract_strided_slice %36 {offsets = [0, 1, 1], sizes = [2, 32, 32], strides = [1, 1, 1]} : vector<2x34x34xf32> to vector<2x32x32xf32>
    %42 = vector.extract_strided_slice %36 {offsets = [0, 1, 2], sizes = [2, 32, 32], strides = [1, 1, 1]} : vector<2x34x34xf32> to vector<2x32x32xf32>
    %43 = vector.extract_strided_slice %36 {offsets = [0, 2, 0], sizes = [2, 32, 32], strides = [1, 1, 1]} : vector<2x34x34xf32> to vector<2x32x32xf32>
    %44 = vector.extract_strided_slice %36 {offsets = [0, 2, 1], sizes = [2, 32, 32], strides = [1, 1, 1]} : vector<2x34x34xf32> to vector<2x32x32xf32>
    %45 = vector.extract_strided_slice %36 {offsets = [0, 2, 2], sizes = [2, 32, 32], strides = [1, 1, 1]} : vector<2x34x34xf32> to vector<2x32x32xf32>
    %46 = tpu.concatenate %37, %38, %39, %40, %41, %42, %43, %44, %45 in 0 : vector<2x32x32xf32>, vector<2x32x32xf32>, vector<2x32x32xf32>, vector<2x32x32xf32>, vector<2x32x32xf32>, vector<2x32x32xf32>, vector<2x32x32xf32>, vector<2x32x32xf32>, vector<2x32x32xf32> -> vector<18x32x32xf32>
    %47 = vector.shape_cast %46 : vector<18x32x32xf32> to vector<18x1024xf32>
    %cst_21 = arith.constant dense<0.000000e+00> : vector<32x1024xf32>
    %48 = tpu.matmul %31, %47, %cst_21 {dimension_numbers = #tpu.dot_dimension_numbers<[1], [0], [0], [1], [0, 0, 1, 1], [], []>} : vector<32x18xf32>, vector<18x1024xf32>, vector<32x1024xf32> -> vector<32x1024xf32>
    %49 = vector.broadcast %32 : vector<32x1xf32> to vector<32x1024xf32>
    %50 = arith.addf %48, %49 : vector<32x1024xf32>
    %cst_22 = arith.constant 0.000000e+00 : f32
    %51 = vector.broadcast %cst_22 : f32 to vector<32x1024xf32>
    %52 = arith.maximumf %50, %51 : vector<32x1024xf32>
    %c0_23 = arith.constant 0 : index
    %c0_24 = arith.constant 0 : index
    %53 = vector.load %arg6[%c0_23, %c0_24] : memref<3x32xf32, #tpu.memory_space<vmem>>, vector<3x32xf32>
    %cst_25 = arith.constant dense<0.000000e+00> : vector<3x1024xf32>
    %54 = tpu.matmul %53, %52, %cst_25 {dimension_numbers = #tpu.dot_dimension_numbers<[1], [0], [0], [1], [0, 0, 1, 1], [], []>} : vector<3x32xf32>, vector<32x1024xf32>, vector<3x1024xf32> -> vector<3x1024xf32>
    %c0_26 = arith.constant 0 : index
    %c0_27 = arith.constant 0 : index
    %55 = vector.load %arg7[%c0_26, %c0_27] : memref<3x1xf32, #tpu.memory_space<vmem>>, vector<3x1xf32>
    %56 = vector.broadcast %55 : vector<3x1xf32> to vector<3x1024xf32>
    %57 = arith.addf %54, %56 : vector<3x1024xf32>
    %cst_28 = arith.constant 0.000000e+00 : f32
    %58 = vector.broadcast %cst_28 : f32 to vector<3x1024xf32>
    %59 = arith.maximumf %57, %58 : vector<3x1024xf32>
    %c0_29 = arith.constant 0 : index
    %c0_30 = arith.constant 0 : index
    %c0_31 = arith.constant 0 : index
    %60 = vector.load %arg10[%c0_29, %c0_30, %c0_31] : memref<1x3x1024xf32, #tpu.memory_space<vmem>>, vector<1x3x1024xf32>
    %61 = vector.shape_cast %60 : vector<1x3x1024xf32> to vector<3x1024xf32>
    %62 = vector.shape_cast %59 : vector<3x1024xf32> to vector<1x3x1024xf32>
    tpu.vector_store %arg10[%c0_29, %c0_30, %c0_31], %62 {strides = array<i32>} : memref<1x3x1024xf32, #tpu.memory_space<vmem>>, vector<1x3x1024xf32>,
    return
  }
  func.func @transform_0(%arg0: i32) -> (i32, i32, i32, i32) {
    %c0_i32 = arith.constant 0 : i32
    %c0_i32_0 = arith.constant 0 : i32
    %c0_i32_1 = arith.constant 0 : i32
    %c0_i32_2 = arith.constant 0 : i32
    return %arg0, %c0_i32, %c0_i32_0, %c0_i32_1 : i32, i32, i32, i32
  }
  func.func @transform_1(%arg0: i32) -> (i32, i32) {
    %c0_i32 = arith.constant 0 : i32
    %c0_i32_0 = arith.constant 0 : i32
    %c0_i32_1 = arith.constant 0 : i32
    return %c0_i32, %c0_i32_0 : i32, i32
  }
  func.func @transform_2(%arg0: i32) -> (i32, i32) {
    %c0_i32 = arith.constant 0 : i32
    %c0_i32_0 = arith.constant 0 : i32
    %c0_i32_1 = arith.constant 0 : i32
    return %c0_i32, %c0_i32_0 : i32, i32
  }
  func.func @transform_3(%arg0: i32) -> (i32, i32) {
    %c0_i32 = arith.constant 0 : i32
    %c0_i32_0 = arith.constant 0 : i32
    %c0_i32_1 = arith.constant 0 : i32
    return %c0_i32, %c0_i32_0 : i32, i32
  }
  func.func @transform_4(%arg0: i32) -> (i32, i32) {
    %c0_i32 = arith.constant 0 : i32
    %c0_i32_0 = arith.constant 0 : i32
    %c0_i32_1 = arith.constant 0 : i32
    return %c0_i32, %c0_i32_0 : i32, i32
  }
  func.func @transform_5(%arg0: i32) -> (i32, i32) {
    %c0_i32 = arith.constant 0 : i32
    %c0_i32_0 = arith.constant 0 : i32
    %c0_i32_1 = arith.constant 0 : i32
    return %c0_i32, %c0_i32_0 : i32, i32
  }
  func.func @transform_6(%arg0: i32) -> (i32, i32) {
    %c0_i32 = arith.constant 0 : i32
    %c0_i32_0 = arith.constant 0 : i32
    %c0_i32_1 = arith.constant 0 : i32
    return %c0_i32, %c0_i32_0 : i32, i32
  }
  func.func @transform_7(%arg0: i32) -> (i32, i32) {
    %c0_i32 = arith.constant 0 : i32
    %c0_i32_0 = arith.constant 0 : i32
    %c0_i32_1 = arith.constant 0 : i32
    return %c0_i32, %c0_i32_0 : i32, i32
  }
  func.func @transform_8(%arg0: i32) -> (i32, i32) {
    %c0_i32 = arith.constant 0 : i32
    %c0_i32_0 = arith.constant 0 : i32
    %c0_i32_1 = arith.constant 0 : i32
    return %c0_i32, %c0_i32_0 : i32, i32
  }
  func.func @transform_9(%arg0: i32) -> (i32, i32, i32) {
    %c0_i32 = arith.constant 0 : i32
    %c0_i32_0 = arith.constant 0 : i32
    %c0_i32_1 = arith.constant 0 : i32
    return %arg0, %c0_i32, %c0_i32_0 : i32, i32, i32
  }
}

</mosaic_0001>

<llo_original>
// kernel: tpu_custom_call.1
$region0: #{tpu_custom_call.1}
  #allocation0 [shape = 'u32[]', space=smem, size = 0x4, offset = 0x4, fixed_abs, tag = 'smem constant byte address 0x4 - core index']
  #allocation1 [shape = 'u32[144,128]{1,0:T(1,128)}', space=vmem, size = 0x12000, scoped, tag = 'internal scratch']
  %s0 = inlined_call_operand.vmem [shape: f32[2,4,16,16], index: 0, kind: input, shape index: {}]
  %s1 = inlined_call_operand.hbm [shape: f32[2,36], index: 1, kind: input, shape index: {}]
  %s2 = inlined_call_operand.vmem [shape: f32[2,1], index: 2, kind: input, shape index: {}]
  %s3 = inlined_call_operand.vmem [shape: f32[32,18], index: 3, kind: input, shape index: {}]
  %s4 = inlined_call_operand.vmem [shape: f32[32,1], index: 4, kind: input, shape index: {}]
  %s5 = inlined_call_operand.vmem [shape: f32[3,32], index: 5, kind: input, shape index: {}]
  %s6 = inlined_call_operand.vmem [shape: f32[3,1], index: 6, kind: input, shape index: {}]
  %s7 = inlined_call_operand.vmem [shape: f32[32,16], index: 7, kind: input, shape index: {}]
  %s8 = inlined_call_operand.vmem [shape: f32[16,32], index: 8, kind: input, shape index: {}]
  %s9 = inlined_call_operand.vmem [shape: f32[2,3,1024], index: 9, kind: output, shape index: {}]
  %s10 = sld [smem:[#allocation0]]
  $region73: #{tpu_custom_call.1} parent=0
    _
  %s12 = ssub.s32 1, %s10
  %s13 = scalar_select 0, %s12, %s10
  $region1: #{tpu_custom_call.1} parent=0
    #allocation2 [shape = 'u8[1024]{0}', space=vmem, size = 0x400, scoped, tag = 'input window, operand 1, single buffered']
    #allocation3 [shape = 's32[2]{0}', space=sflag, size = 0x8, scoped, tag = 'scoped memory for tpu_custom_call.1']
    %14 = vsyncpa [#allocation3], 0
    loop: start=0, step=1, limit=4
    $region2: #{tpu_custom_call.1} parent=1 // loop_pre_header
      _
    $region3: #{tpu_custom_call.1} parent=1 // loop_header
      %s16 = sphi 0, %s20
      %p17 = scmp.ge.s32.totalorder %s16, 4
      %s26 = sphi 0, %s28
      %s29 = sphi 0, %s26
      %s30 = sphi 0, %s29
      %s46 = sphi 0, %s30
      %s50 = sphi 0, %s50
      %s52 = sphi 0, %s50
      %s53 = sphi 0, %s52
      %s67 = sphi 0, %s53
      %s71 = sphi 0, %s71
      %s73 = sphi 0, %s71
      %s74 = sphi 0, %s73
      %s88 = sphi 0, %s74
      %s92 = sphi 0, %s92
      %s94 = sphi 0, %s92
      %s95 = sphi 0, %s94
      %s109 = sphi 0, %s95
      %s113 = sphi 0, %s113
      %s115 = sphi 0, %s113
      %s116 = sphi 0, %s115
      %s130 = sphi 0, %s116
      %s134 = sphi 0, %s134
      %s136 = sphi 0, %s134
      %s137 = sphi 0, %s136
      %s151 = sphi 0, %s137
      %s155 = sphi 0, %s155
      %s157 = sphi 0, %s155
      %s158 = sphi 0, %s157
      %s172 = sphi 0, %s158
      %s176 = sphi 0, %s176
      %s178 = sphi 0, %s176
      %s179 = sphi 0, %s178
      %s193 = sphi 0, %s179
      %s197 = sphi 0, %s197
      %s199 = sphi 0, %s197
      %s200 = sphi 0, %s199
      %s214 = sphi 0, %s200
      %s220 = sphi 0, %s222
      %s223 = sphi 0, %s220
      %s224 = sphi 0, %s223
      %s240 = sphi 0, %s224
    $region4: #{tpu_custom_call.1} parent=1 // loop_header_branch
      %19 = sbr.rel (%p17) target = $region8
    $region5: #{tpu_custom_call.1} parent=1 // loop_body
      %s21 = ssub.s32 %s16, 1
      %s22 = ssub.s32 %s16, 2
      %s23 = sadd.s32 %s16, 1
      %s24 = ssub.s32 %s16, %s23
      %p25 = scmp.eq.s32.totalorder %s24, 0
      %s27 = sadd.s32 %s26, 1
      %s28 = scalar_select %p25, %s26, %s27
      %p31 = pneg %p25
      %p32 = scmp.eq.s32.totalorder %s16, 1
      %p33 = por %p31, %p32
      %p34 = scmp.ne.s32.totalorder %s26, %s29
      %p35 = scmp.eq.s32.totalorder %s16, 0
      %p36 = por %p34, %p35
      %p37 = scmp.ne.s32.totalorder %s26, %s29
      %p38 = scmp.eq.s32.totalorder %s21, 1
      %p39 = por %p37, %p38
      %p40 = scmp.ne.s32.totalorder %s29, %s30
      %p41 = scmp.eq.s32.totalorder %s21, 0
      %p42 = por %p40, %p41
      %p43 = scmp.ne.s32.totalorder %s29, %s30
      %p44 = scmp.eq.s32.totalorder %s22, 1
      %p45 = por %p43, %p44
      %p47 = scmp.ne.s32.totalorder %s30, %s46
      %p48 = scmp.eq.s32.totalorder %s22, 0
      %p49 = por %p47, %p48
      %s51 = sadd.s32 %s50, 1
      %p54 = scmp.eq.s32.totalorder %s16, 1
      %p55 = scmp.ne.s32.totalorder %s50, %s52
      %p56 = scmp.eq.s32.totalorder %s16, 0
      %p57 = por %p55, %p56
      %p58 = scmp.ne.s32.totalorder %s50, %s52
      %p59 = scmp.eq.s32.totalorder %s21, 1
      %p60 = por %p58, %p59
      %p61 = scmp.ne.s32.totalorder %s52, %s53
      %p62 = scmp.eq.s32.totalorder %s21, 0
      %p63 = por %p61, %p62
      %p64 = scmp.ne.s32.totalorder %s52, %s53
      %p65 = scmp.eq.s32.totalorder %s22, 1
      %p66 = por %p64, %p65
      %p68 = scmp.ne.s32.totalorder %s53, %s67
      %p69 = scmp.eq.s32.totalorder %s22, 0
      %p70 = por %p68, %p69
      %s72 = sadd.s32 %s71, 1
      %p75 = scmp.eq.s32.totalorder %s16, 1
      %p76 = scmp.ne.s32.totalorder %s71, %s73
      %p77 = scmp.eq.s32.totalorder %s16, 0
      %p78 = por %p76, %p77
      %p79 = scmp.ne.s32.totalorder %s71, %s73
      %p80 = scmp.eq.s32.totalorder %s21, 1
      %p81 = por %p79, %p80
      %p82 = scmp.ne.s32.totalorder %s73, %s74
      %p83 = scmp.eq.s32.totalorder %s21, 0
      %p84 = por %p82, %p83
      %p85 = scmp.ne.s32.totalorder %s73, %s74
      %p86 = scmp.eq.s32.totalorder %s22, 1
      %p87 = por %p85, %p86
      %p89 = scmp.ne.s32.totalorder %s74, %s88
      %p90 = scmp.eq.s32.totalorder %s22, 0
      %p91 = por %p89, %p90
      %s93 = sadd.s32 %s92, 1
      %p96 = scmp.eq.s32.totalorder %s16, 1
      %p97 = scmp.ne.s32.totalorder %s92, %s94
      %p98 = scmp.eq.s32.totalorder %s16, 0
      %p99 = por %p97, %p98
      %p100 = scmp.ne.s32.totalorder %s92, %s94
      %p101 = scmp.eq.s32.totalorder %s21, 1
      %p102 = por %p100, %p101
      %p103 = scmp.ne.s32.totalorder %s94, %s95
      %p104 = scmp.eq.s32.totalorder %s21, 0
      %p105 = por %p103, %p104
      %p106 = scmp.ne.s32.totalorder %s94, %s95
      %p107 = scmp.eq.s32.totalorder %s22, 1
      %p108 = por %p106, %p107
      %p110 = scmp.ne.s32.totalorder %s95, %s109
      %p111 = scmp.eq.s32.totalorder %s22, 0
      %p112 = por %p110, %p111
      %s114 = sadd.s32 %s113, 1
      %p117 = scmp.eq.s32.totalorder %s16, 1
      %p118 = scmp.ne.s32.totalorder %s113, %s115
      %p119 = scmp.eq.s32.totalorder %s16, 0
      %p120 = por %p118, %p119
      %p121 = scmp.ne.s32.totalorder %s113, %s115
      %p122 = scmp.eq.s32.totalorder %s21, 1
      %p123 = por %p121, %p122
      %p124 = scmp.ne.s32.totalorder %s115, %s116
      %p125 = scmp.eq.s32.totalorder %s21, 0
      %p126 = por %p124, %p125
      %p127 = scmp.ne.s32.totalorder %s115, %s116
      %p128 = scmp.eq.s32.totalorder %s22, 1
      %p129 = por %p127, %p128
      %p131 = scmp.ne.s32.totalorder %s116, %s130
      %p132 = scmp.eq.s32.totalorder %s22, 0
      %p133 = por %p131, %p132
      %s135 = sadd.s32 %s134, 1
      %p138 = scmp.eq.s32.totalorder %s16, 1
      %p139 = scmp.ne.s32.totalorder %s134, %s136
      %p140 = scmp.eq.s32.totalorder %s16, 0
      %p141 = por %p139, %p140
      %p142 = scmp.ne.s32.totalorder %s134, %s136
      %p143 = scmp.eq.s32.totalorder %s21, 1
      %p144 = por %p142, %p143
      %p145 = scmp.ne.s32.totalorder %s136, %s137
      %p146 = scmp.eq.s32.totalorder %s21, 0
      %p147 = por %p145, %p146
      %p148 = scmp.ne.s32.totalorder %s136, %s137
      %p149 = scmp.eq.s32.totalorder %s22, 1
      %p150 = por %p148, %p149
      %p152 = scmp.ne.s32.totalorder %s137, %s151
      %p153 = scmp.eq.s32.totalorder %s22, 0
      %p154 = por %p152, %p153
      %s156 = sadd.s32 %s155, 1
      %p159 = scmp.eq.s32.totalorder %s16, 1
      %p160 = scmp.ne.s32.totalorder %s155, %s157
      %p161 = scmp.eq.s32.totalorder %s16, 0
      %p162 = por %p160, %p161
      %p163 = scmp.ne.s32.totalorder %s155, %s157
      %p164 = scmp.eq.s32.totalorder %s21, 1
      %p165 = por %p163, %p164
      %p166 = scmp.ne.s32.totalorder %s157, %s158
      %p167 = scmp.eq.s32.totalorder %s21, 0
      %p168 = por %p166, %p167
      %p169 = scmp.ne.s32.totalorder %s157, %s158
      %p170 = scmp.eq.s32.totalorder %s22, 1
      %p171 = por %p169, %p170
      %p173 = scmp.ne.s32.totalorder %s158, %s172
      %p174 = scmp.eq.s32.totalorder %s22, 0
      %p175 = por %p173, %p174
      %s177 = sadd.s32 %s176, 1
      %p180 = scmp.eq.s32.totalorder %s16, 1
      %p181 = scmp.ne.s32.totalorder %s176, %s178
      %p182 = scmp.eq.s32.totalorder %s16, 0
      %p183 = por %p181, %p182
      %p184 = scmp.ne.s32.totalorder %s176, %s178
      %p185 = scmp.eq.s32.totalorder %s21, 1
      %p186 = por %p184, %p185
      %p187 = scmp.ne.s32.totalorder %s178, %s179
      %p188 = scmp.eq.s32.totalorder %s21, 0
      %p189 = por %p187, %p188
      %p190 = scmp.ne.s32.totalorder %s178, %s179
      %p191 = scmp.eq.s32.totalorder %s22, 1
      %p192 = por %p190, %p191
      %p194 = scmp.ne.s32.totalorder %s179, %s193
      %p195 = scmp.eq.s32.totalorder %s22, 0
      %p196 = por %p194, %p195
      %s198 = sadd.s32 %s197, 1
      %p201 = scmp.eq.s32.totalorder %s16, 1
      %p202 = scmp.ne.s32.totalorder %s197, %s199
      %p203 = scmp.eq.s32.totalorder %s16, 0
      %p204 = por %p202, %p203
      %p205 = scmp.ne.s32.totalorder %s197, %s199
      %p206 = scmp.eq.s32.totalorder %s21, 1
      %p207 = por %p205, %p206
      %p208 = scmp.ne.s32.totalorder %s199, %s200
      %p209 = scmp.eq.s32.totalorder %s21, 0
      %p210 = por %p208, %p209
      %p211 = scmp.ne.s32.totalorder %s199, %s200
      %p212 = scmp.eq.s32.totalorder %s22, 1
      %p213 = por %p211, %p212
      %p215 = scmp.ne.s32.totalorder %s200, %s214
      %p216 = scmp.eq.s32.totalorder %s22, 0
      %p217 = por %p215, %p216
      %s218 = ssub.s32 %s16, %s23
      %p219 = scmp.eq.s32.totalorder %s218, 0
      %s221 = sadd.s32 %s220, 1
      %s222 = scalar_select %p219, %s220, %s221
      %p225 = pneg %p219
      %p226 = scmp.eq.s32.totalorder %s16, 1
      %p227 = por %p225, %p226
      %p228 = scmp.ne.s32.totalorder %s220, %s223
      %p229 = scmp.eq.s32.totalorder %s16, 0
      %p230 = por %p228, %p229
      %p231 = scmp.ne.s32.totalorder %s220, %s223
      %p232 = scmp.eq.s32.totalorder %s21, 1
      %p233 = por %p231, %p232
      %p234 = scmp.ne.s32.totalorder %s223, %s224
      %p235 = scmp.eq.s32.totalorder %s21, 0
      %p236 = por %p234, %p235
      %p237 = scmp.ne.s32.totalorder %s223, %s224
      %p238 = scmp.eq.s32.totalorder %s22, 1
      %p239 = por %p237, %p238
      %p241 = scmp.ne.s32.totalorder %s224, %s240
      %p242 = scmp.eq.s32.totalorder %s22, 0
      %p243 = por %p241, %p242
      %p244 = scmp.le.s32.totalorder 1, %s16
      %p245 = scmp.lt.s32.totalorder %s16, 3
      %p246 = pnand %p244, %p245
      %p247 = pneg %p246
      // Predicated region
      $region9: #{tpu_custom_call.1} parent=5 // pred_check
        _
      $region10: #{tpu_custom_call.1} parent=5 // pred_check_branch
        %249 = sbr.rel (%p246) target = $region12
      $region11: #{tpu_custom_call.1} parent=5 // pred_region
        %s250 = ssub.s32 %s16, 1
        // Predicated region
        $region13: #{tpu_custom_call.1} parent=11 // pred_check
          %p251 = pneg %p63
        $region14: #{tpu_custom_call.1} parent=11 // pred_check_branch
          %253 = sbr.rel (%p251) target = $region16
        $region15: #{tpu_custom_call.1} parent=11 // pred_region
          %s255 = ssub.s32 32, 32
          %256 = vsyncadd [#allocation3], %s255
          %s258 = sshll.u32 [#allocation2], 4
          %s259 = int_to_ptr.vmem [resolvable:$true] %s258
          %261 = dma.hbm_to_vmem [thread:$0]  %s1, 32, %s259, [#allocation3]
        $region16: #{tpu_custom_call.1} parent=11 // pred_fallthru
          _
        // Predicated region
        $region17: #{tpu_custom_call.1} parent=11 // pred_check
          %p262 = pneg %p84
        $region18: #{tpu_custom_call.1} parent=11 // pred_check_branch
          %264 = sbr.rel (%p262) target = $region20
        $region19: #{tpu_custom_call.1} parent=11 // pred_region
          _
        $region20: #{tpu_custom_call.1} parent=11 // pred_fallthru
          _
        // Predicated region
        $region21: #{tpu_custom_call.1} parent=11 // pred_check
          %p265 = pneg %p105
        $region22: #{tpu_custom_call.1} parent=11 // pred_check_branch
          %267 = sbr.rel (%p265) target = $region24
        $region23: #{tpu_custom_call.1} parent=11 // pred_region
          _
        $region24: #{tpu_custom_call.1} parent=11 // pred_fallthru
          _
        // Predicated region
        $region25: #{tpu_custom_call.1} parent=11 // pred_check
          %p268 = pneg %p126
        $region26: #{tpu_custom_call.1} parent=11 // pred_check_branch
          %270 = sbr.rel (%p268) target = $region28
        $region27: #{tpu_custom_call.1} parent=11 // pred_region
          _
        $region28: #{tpu_custom_call.1} parent=11 // pred_fallthru
          _
        // Predicated region
        $region29: #{tpu_custom_call.1} parent=11 // pred_check
          %p271 = pneg %p147
        $region30: #{tpu_custom_call.1} parent=11 // pred_check_branch
          %273 = sbr.rel (%p271) target = $region32
        $region31: #{tpu_custom_call.1} parent=11 // pred_region
          _
        $region32: #{tpu_custom_call.1} parent=11 // pred_fallthru
          _
        // Predicated region
        $region33: #{tpu_custom_call.1} parent=11 // pred_check
          %p274 = pneg %p168
        $region34: #{tpu_custom_call.1} parent=11 // pred_check_branch
          %276 = sbr.rel (%p274) target = $region36
        $region35: #{tpu_custom_call.1} parent=11 // pred_region
          _
        $region36: #{tpu_custom_call.1} parent=11 // pred_fallthru
          _
        // Predicated region
        $region37: #{tpu_custom_call.1} parent=11 // pred_check
          %p277 = pneg %p189
        $region38: #{tpu_custom_call.1} parent=11 // pred_check_branch
          %279 = sbr.rel (%p277) target = $region40
        $region39: #{tpu_custom_call.1} parent=11 // pred_region
          _
        $region40: #{tpu_custom_call.1} parent=11 // pred_fallthru
          _
        // Predicated region
        $region41: #{tpu_custom_call.1} parent=11 // pred_check
          %p280 = pneg %p210
        $region42: #{tpu_custom_call.1} parent=11 // pred_check_branch
          %282 = sbr.rel (%p280) target = $region44
        $region43: #{tpu_custom_call.1} parent=11 // pred_region
          _
        $region44: #{tpu_custom_call.1} parent=11 // pred_fallthru
          _
      $region12: #{tpu_custom_call.1} parent=5 // pred_fallthru
        _
      %p283 = scmp.lt.s32.totalorder %s16, 2
      // Predicated region
      $region45: #{tpu_custom_call.1} parent=5 // pred_check
        %p284 = pneg %p283
      $region46: #{tpu_custom_call.1} parent=5 // pred_check_branch
        %286 = sbr.rel (%p284) target = $region48
      $region47: #{tpu_custom_call.1} parent=5 // pred_region
        // Predicated region
        $region49: #{tpu_custom_call.1} parent=47 // pred_check
          %p287 = pneg %p36
        $region50: #{tpu_custom_call.1} parent=47 // pred_check_branch
          %289 = sbr.rel (%p287) target = $region52
        $region51: #{tpu_custom_call.1} parent=47 // pred_region
          %p290 = scmp.lt.s32.totalorder %s16, 1
          %s291 = scalar_select %p290, %s16, 1
          %s292 = smul.addr %s291, 8
          %s293 = smul.addr %s292, 8
          %s294 = scalar_lea.vmem %s0, %s293
        $region52: #{tpu_custom_call.1} parent=47 // pred_fallthru
          _
      $region48: #{tpu_custom_call.1} parent=5 // pred_fallthru
        _
      %p295 = scmp.le.s32.totalorder 1, %s16
      %p296 = scmp.lt.s32.totalorder %s16, 3
      %p297 = pnand %p295, %p296
      %p298 = pneg %p297
      // Predicated region
      $region53: #{tpu_custom_call.1} parent=5 // pred_check
        _
      $region54: #{tpu_custom_call.1} parent=5 // pred_check_branch
        %300 = sbr.rel (%p297) target = $region56
      $region55: #{tpu_custom_call.1} parent=5 // pred_region
        %s301 = ssub.s32 %s16, 1
        // Predicated region
        $region57: #{tpu_custom_call.1} parent=55 // pred_check
          %p302 = pneg %p63
        $region58: #{tpu_custom_call.1} parent=55 // pred_check_branch
          %304 = sbr.rel (%p302) target = $region60
        $region59: #{tpu_custom_call.1} parent=55 // pred_region
          %305 = dma.done [#allocation3], 32
        $region60: #{tpu_custom_call.1} parent=55 // pred_fallthru
          _
        %p306 = scmp.lt.s32.totalorder %s21, 1
        %s307 = scalar_select %p306, %s21, 1
        %s308 = smul.addr %s307, 8
        %s309 = smul.addr %s308, 8
        %s310 = scalar_lea.vmem %s0, %s309
        %p311 = pneg %p42
        %p312 = pneg %p39
        %p313 = pneg %p63
        %p314 = pneg %p60
        %p315 = pneg %p84
        %p316 = pneg %p81
        %p317 = pneg %p105
        %p318 = pneg %p102
        %p319 = pneg %p126
        %p320 = pneg %p123
        %p321 = pneg %p147
        %p322 = pneg %p144
        %p323 = pneg %p168
        %p324 = pneg %p165
        %p325 = pneg %p189
        %p326 = pneg %p186
        %p327 = pneg %p210
        %p328 = pneg %p207
        %p329 = pneg %p236
        %p330 = pneg %p233
        %p331 = scmp.lt.s32.totalorder %s21, 1
        %s332 = scalar_select %p331, %s21, 1
        %s333 = smul.addr %s332, 8
        %s334 = smul.addr %s333, 4
        %s335 = scalar_lea.vmem %s9, %s334
        %p336 = scmp.lt.s32.totalorder %s21, 1
        %s337 = scalar_select %p336, %s21, 1
        %s338 = smul.addr %s337, 8
        %s339 = smul.addr %s338, 8
        %s340 = scalar_lea.vmem %s0, %s339
        %p341 = scmp.lt.s32.totalorder %s21, 1
        %s342 = scalar_select %p341, %s21, 1
        %s343 = smul.addr %s342, 8
        %s344 = smul.addr %s343, 4
        %s345 = scalar_lea.vmem %s9, %s344
        %v346 = vld [vmem:[%s340] sm:$0xff]
        %v347 = vld [vmem:[%s340 + $0x8] sm:$0xff]
        %v348 = vld [vmem:[%s340 + $0x10] sm:$0xff]
        %v349 = vld [vmem:[%s340 + $0x18] sm:$0xff]
        %v350 = vld [vmem:[%s340 + $0x20] sm:$0xff]
        %v351 = vld [vmem:[%s340 + $0x28] sm:$0xff]
        %v352 = vld [vmem:[%s340 + $0x30] sm:$0xff]
        %v353 = vld [vmem:[%s340 + $0x38] sm:$0xff]
        %v354 = vld [vmem:[#allocation2] sm:$0x3]
        %v355 = vld [vmem:[%s2] sm:$0x3]
        %vm364 = vcmask 1040384
        %v365 = vrot.slane %v346, 7
        %v366 = vrot.slane %v347, 7
        %v367 = vsel %vm364, %v365, %v366
        %v368 = vrot.slane %v348, 7
        %v369 = vrot.slane %v349, 7
        %v370 = vsel %vm364, %v368, %v369
        %v371 = vrot.slane %v350, 7
        %v372 = vrot.slane %v351, 7
        %v373 = vsel %vm364, %v371, %v372
        %v374 = vrot.slane %v352, 7
        %v375 = vrot.slane %v353, 7
        %v376 = vsel %vm364, %v374, %v375
        %v385 = vsel %vm364, 0.0, %v365
        %v386 = vsel %vm364, 0.0, %v368
        %v387 = vsel %vm364, 0.0, %v371
        %v388 = vsel %vm364, 0.0, %v374
        %v389 = vsel %vm364, %v366, 0.0
        %v390 = vsel %vm364, %v369, 0.0
        %v391 = vsel %vm364, %v372, 0.0
        %v392 = vsel %vm364, %v375, 0.0
        %401 = vrot.lane.b32.xlu0 %v385, 1
        %v402 = vpop.permute.xlu0 %401
        %403 = vrot.lane.b32.xlu0 %v367, 1
        %v404 = vpop.permute.xlu0 %403
        %405 = vrot.lane.b32.xlu0 %v389, 1
        %v406 = vpop.permute.xlu0 %405
        %407 = vrot.lane.b32.xlu0 %v386, 1
        %v408 = vpop.permute.xlu0 %407
        %409 = vrot.lane.b32.xlu0 %v370, 1
        %v410 = vpop.permute.xlu0 %409
        %411 = vrot.lane.b32.xlu0 %v390, 1
        %v412 = vpop.permute.xlu0 %411
        %413 = vrot.lane.b32.xlu0 %v387, 1
        %v414 = vpop.permute.xlu0 %413
        %415 = vrot.lane.b32.xlu0 %v373, 1
        %v416 = vpop.permute.xlu0 %415
        %417 = vrot.lane.b32.xlu0 %v391, 1
        %v418 = vpop.permute.xlu0 %417
        %419 = vrot.lane.b32.xlu0 %v388, 1
        %v420 = vpop.permute.xlu0 %419
        %421 = vrot.lane.b32.xlu0 %v376, 1
        %v422 = vpop.permute.xlu0 %421
        %423 = vrot.lane.b32.xlu0 %v392, 1
        %v424 = vpop.permute.xlu0 %423
        %vm437 = vcmask 7168
        %v438 = vsel %vm437, 0.0, %v402
        %v439 = vsel %vm437, 0.0, %v404
        %v440 = vsel %vm437, 0.0, %v406
        %v441 = vsel %vm437, 0.0, %v408
        %v442 = vsel %vm437, 0.0, %v410
        %v443 = vsel %vm437, 0.0, %v412
        %v444 = vsel %vm437, 0.0, %v414
        %v445 = vsel %vm437, 0.0, %v416
        %v446 = vsel %vm437, 0.0, %v418
        %v447 = vsel %vm437, 0.0, %v420
        %v448 = vsel %vm437, 0.0, %v422
        %v449 = vsel %vm437, 0.0, %v424
        %vm450 = vcmask 138240
        %v451 = vsel %vm450, %v438, 0.0
        %v452 = vsel %vm450, %v439, 0.0
        %v453 = vsel %vm450, %v440, 0.0
        %v454 = vsel %vm450, %v441, 0.0
        %v455 = vsel %vm450, %v442, 0.0
        %v456 = vsel %vm450, %v443, 0.0
        %v457 = vsel %vm450, %v444, 0.0
        %v458 = vsel %vm450, %v445, 0.0
        %v459 = vsel %vm450, %v446, 0.0
        %v460 = vsel %vm450, %v447, 0.0
        %v461 = vsel %vm450, %v448, 0.0
        %v462 = vsel %vm450, %v449, 0.0
        %471 = vrot.lane.b32.xlu0 %v451, 127
        %v472 = vpop.permute.xlu0 %471
        %473 = vrot.lane.b32.xlu0 %v452, 127
        %v474 = vpop.permute.xlu0 %473
        %475 = vrot.lane.b32.xlu0 %v454, 127
        %v476 = vpop.permute.xlu0 %475
        %477 = vrot.lane.b32.xlu0 %v455, 127
        %v478 = vpop.permute.xlu0 %477
        %479 = vrot.lane.b32.xlu0 %v457, 127
        %v480 = vpop.permute.xlu0 %479
        %481 = vrot.lane.b32.xlu0 %v458, 127
        %v482 = vpop.permute.xlu0 %481
        %483 = vrot.lane.b32.xlu0 %v460, 127
        %v484 = vpop.permute.xlu0 %483
        %485 = vrot.lane.b32.xlu0 %v461, 127
        %v486 = vpop.permute.xlu0 %485
        %495 = vrot.lane.b32.xlu0 %v451, 126
        %v496 = vpop.permute.xlu0 %495
        %497 = vrot.lane.b32.xlu0 %v452, 126
        %v498 = vpop.permute.xlu0 %497
        %499 = vrot.lane.b32.xlu0 %v454, 126
        %v500 = vpop.permute.xlu0 %499
        %501 = vrot.lane.b32.xlu0 %v455, 126
        %v502 = vpop.permute.xlu0 %501
        %503 = vrot.lane.b32.xlu0 %v457, 126
        %v504 = vpop.permute.xlu0 %503
        %505 = vrot.lane.b32.xlu0 %v458, 126
        %v506 = vpop.permute.xlu0 %505
        %507 = vrot.lane.b32.xlu0 %v460, 126
        %v508 = vpop.permute.xlu0 %507
        %509 = vrot.lane.b32.xlu0 %v461, 126
        %v510 = vpop.permute.xlu0 %509
        %vm523 = vcmask 1046528
        %v524 = vrot.slane %v451, 1
        %v525 = vrot.slane %v452, 1
        %v526 = vsel %vm523, %v524, %v525
        %v527 = vrot.slane %v453, 1
        %v528 = vsel %vm523, %v525, %v527
        %v529 = vrot.slane %v454, 1
        %v530 = vrot.slane %v455, 1
        %v531 = vsel %vm523, %v529, %v530
        %v532 = vrot.slane %v456, 1
        %v533 = vsel %vm523, %v530, %v532
        %v534 = vrot.slane %v457, 1
        %v535 = vrot.slane %v458, 1
        %v536 = vsel %vm523, %v534, %v535
        %v537 = vrot.slane %v459, 1
        %v538 = vsel %vm523, %v535, %v537
        %v539 = vrot.slane %v460, 1
        %v540 = vrot.slane %v461, 1
        %v541 = vsel %vm523, %v539, %v540
        %v542 = vrot.slane %v462, 1
        %v543 = vsel %vm523, %v540, %v542
        %552 = vrot.lane.b32.xlu0 %v526, 127
        %v553 = vpop.permute.xlu0 %552
        %554 = vrot.lane.b32.xlu0 %v528, 127
        %v555 = vpop.permute.xlu0 %554
        %556 = vrot.lane.b32.xlu0 %v531, 127
        %v557 = vpop.permute.xlu0 %556
        %558 = vrot.lane.b32.xlu0 %v533, 127
        %v559 = vpop.permute.xlu0 %558
        %560 = vrot.lane.b32.xlu0 %v536, 127
        %v561 = vpop.permute.xlu0 %560
        %562 = vrot.lane.b32.xlu0 %v538, 127
        %v563 = vpop.permute.xlu0 %562
        %564 = vrot.lane.b32.xlu0 %v541, 127
        %v565 = vpop.permute.xlu0 %564
        %566 = vrot.lane.b32.xlu0 %v543, 127
        %v567 = vpop.permute.xlu0 %566
        %576 = vrot.lane.b32.xlu0 %v526, 126
        %v577 = vpop.permute.xlu0 %576
        %578 = vrot.lane.b32.xlu0 %v528, 126
        %v579 = vpop.permute.xlu0 %578
        %580 = vrot.lane.b32.xlu0 %v531, 126
        %v581 = vpop.permute.xlu0 %580
        %582 = vrot.lane.b32.xlu0 %v533, 126
        %v583 = vpop.permute.xlu0 %582
        %584 = vrot.lane.b32.xlu0 %v536, 126
        %v585 = vpop.permute.xlu0 %584
        %586 = vrot.lane.b32.xlu0 %v538, 126
        %v587 = vpop.permute.xlu0 %586
        %588 = vrot.lane.b32.xlu0 %v541, 126
        %v589 = vpop.permute.xlu0 %588
        %590 = vrot.lane.b32.xlu0 %v543, 126
        %v591 = vpop.permute.xlu0 %590
        %vm600 = vcmask 1045504
        %v601 = vrot.slane %v451, 2
        %v602 = vrot.slane %v452, 2
        %v603 = vsel %vm600, %v601, %v602
        %v604 = vrot.slane %v453, 2
        %v605 = vsel %vm600, %v602, %v604
        %v606 = vrot.slane %v454, 2
        %v607 = vrot.slane %v455, 2
        %v608 = vsel %vm600, %v606, %v607
        %v609 = vrot.slane %v456, 2
        %v610 = vsel %vm600, %v607, %v609
        %v611 = vrot.slane %v457, 2
        %v612 = vrot.slane %v458, 2
        %v613 = vsel %vm600, %v611, %v612
        %v614 = vrot.slane %v459, 2
        %v615 = vsel %vm600, %v612, %v614
        %v616 = vrot.slane %v460, 2
        %v617 = vrot.slane %v461, 2
        %v618 = vsel %vm600, %v616, %v617
        %v619 = vrot.slane %v462, 2
        %v620 = vsel %vm600, %v617, %v619
        %629 = vrot.lane.b32.xlu0 %v603, 127
        %v630 = vpop.permute.xlu0 %629
        %631 = vrot.lane.b32.xlu0 %v605, 127
        %v632 = vpop.permute.xlu0 %631
        %633 = vrot.lane.b32.xlu0 %v608, 127
        %v634 = vpop.permute.xlu0 %633
        %635 = vrot.lane.b32.xlu0 %v610, 127
        %v636 = vpop.permute.xlu0 %635
        %637 = vrot.lane.b32.xlu0 %v613, 127
        %v638 = vpop.permute.xlu0 %637
        %639 = vrot.lane.b32.xlu0 %v615, 127
        %v640 = vpop.permute.xlu0 %639
        %641 = vrot.lane.b32.xlu0 %v618, 127
        %v642 = vpop.permute.xlu0 %641
        %643 = vrot.lane.b32.xlu0 %v620, 127
        %v644 = vpop.permute.xlu0 %643
        %653 = vrot.lane.b32.xlu0 %v603, 126
        %v654 = vpop.permute.xlu0 %653
        %655 = vrot.lane.b32.xlu0 %v605, 126
        %v656 = vpop.permute.xlu0 %655
        %657 = vrot.lane.b32.xlu0 %v608, 126
        %v658 = vpop.permute.xlu0 %657
        %659 = vrot.lane.b32.xlu0 %v610, 126
        %v660 = vpop.permute.xlu0 %659
        %661 = vrot.lane.b32.xlu0 %v613, 126
        %v662 = vpop.permute.xlu0 %661
        %663 = vrot.lane.b32.xlu0 %v615, 126
        %v664 = vpop.permute.xlu0 %663
        %665 = vrot.lane.b32.xlu0 %v618, 126
        %v666 = vpop.permute.xlu0 %665
        %667 = vrot.lane.b32.xlu0 %v620, 126
        %v668 = vpop.permute.xlu0 %667
        %v677 = vcombine.low %v451, %v457
        %v678 = vcombine.high %v451, %v457
        %v680 = vunpack.c.l.s4 1983009808
        %v681 = vunpack.c.0.s8 %v680
        %v682 = vlaneseq
        %v683 = vshrl.u32 %v682, 7
        %v684 = vsub.s32 %v681, %v683
        %v685 = vrot.slane %v677, %v684
        %v687 = vunpack.c.l.s4 1983009808
        %v688 = vunpack.c.0.s8 %v687
        %v689 = vlaneseq
        %v690 = vshrl.u32 %v689, 7
        %v691 = vsub.s32 %v688, %v690
        %v692 = vrot.slane %v678, %v691
        %v693 = vcombine.low %v454, %v460
        %v694 = vcombine.high %v454, %v460
        %v696 = vunpack.c.l.s4 1983009808
        %v697 = vunpack.c.0.s8 %v696
        %v698 = vlaneseq
        %v699 = vshrl.u32 %v698, 7
        %v700 = vsub.s32 %v697, %v699
        %v701 = vrot.slane %v693, %v700
        %v703 = vunpack.c.l.s4 1983009808
        %v704 = vunpack.c.0.s8 %v703
        %v705 = vlaneseq
        %v706 = vshrl.u32 %v705, 7
        %v707 = vsub.s32 %v704, %v706
        %v708 = vrot.slane %v694, %v707
        %v709 = vcombine.low %v472, %v480
        %v710 = vcombine.high %v472, %v480
        %v712 = vunpack.c.l.s4 1983009808
        %v713 = vunpack.c.0.s8 %v712
        %v714 = vlaneseq
        %v715 = vshrl.u32 %v714, 7
        %v716 = vsub.s32 %v713, %v715
        %v717 = vrot.slane %v709, %v716
        %v719 = vunpack.c.l.s4 1983009808
        %v720 = vunpack.c.0.s8 %v719
        %v721 = vlaneseq
        %v722 = vshrl.u32 %v721, 7
        %v723 = vsub.s32 %v720, %v722
        %v724 = vrot.slane %v710, %v723
        %v725 = vcombine.low %v476, %v484
        %v726 = vcombine.high %v476, %v484
        %v728 = vunpack.c.l.s4 1983009808
        %v729 = vunpack.c.0.s8 %v728
        %v730 = vlaneseq
        %v731 = vshrl.u32 %v730, 7
        %v732 = vsub.s32 %v729, %v731
        %v733 = vrot.slane %v725, %v732
        %v735 = vunpack.c.l.s4 1983009808
        %v736 = vunpack.c.0.s8 %v735
        %v737 = vlaneseq
        %v738 = vshrl.u32 %v737, 7
        %v739 = vsub.s32 %v736, %v738
        %v740 = vrot.slane %v726, %v739
        %v741 = vcombine.low %v685, %v701
        %v742 = vcombine.high %v685, %v701
        %v744 = vunpack.c.l.s4 1934713408
        %v745 = vunpack.c.0.s8 %v744
        %v746 = vlaneseq
        %v747 = vshrl.u32 %v746, 7
        %v748 = vsub.s32 %v745, %v747
        %v749 = vrot.slane %v741, %v748
        %v751 = vunpack.c.l.s4 1934713408
        %v752 = vunpack.c.0.s8 %v751
        %v753 = vlaneseq
        %v754 = vshrl.u32 %v753, 7
        %v755 = vsub.s32 %v752, %v754
        %v756 = vrot.slane %v742, %v755
        %v757 = vcombine.low %v692, %v708
        %v758 = vcombine.high %v692, %v708
        %v760 = vunpack.c.l.s4 1934713408
        %v761 = vunpack.c.0.s8 %v760
        %v762 = vlaneseq
        %v763 = vshrl.u32 %v762, 7
        %v764 = vsub.s32 %v761, %v763
        %v765 = vrot.slane %v757, %v764
        %v767 = vunpack.c.l.s4 1934713408
        %v768 = vunpack.c.0.s8 %v767
        %v769 = vlaneseq
        %v770 = vshrl.u32 %v769, 7
        %v771 = vsub.s32 %v768, %v770
        %v772 = vrot.slane %v758, %v771
        %v773 = vcombine.low %v717, %v733
        %v774 = vcombine.high %v717, %v733
        %v776 = vunpack.c.l.s4 1934713408
        %v777 = vunpack.c.0.s8 %v776
        %v778 = vlaneseq
        %v779 = vshrl.u32 %v778, 7
        %v780 = vsub.s32 %v777, %v779
        %v781 = vrot.slane %v773, %v780
        %v783 = vunpack.c.l.s4 1934713408
        %v784 = vunpack.c.0.s8 %v783
        %v785 = vlaneseq
        %v786 = vshrl.u32 %v785, 7
        %v787 = vsub.s32 %v784, %v786
        %v788 = vrot.slane %v774, %v787
        %v789 = vcombine.low %v724, %v740
        %v790 = vcombine.high %v724, %v740
        %v792 = vunpack.c.l.s4 1934713408
        %v793 = vunpack.c.0.s8 %v792
        %v794 = vlaneseq
        %v795 = vshrl.u32 %v794, 7
        %v796 = vsub.s32 %v793, %v795
        %v797 = vrot.slane %v789, %v796
        %v799 = vunpack.c.l.s4 1934713408
        %v800 = vunpack.c.0.s8 %v799
        %v801 = vlaneseq
        %v802 = vshrl.u32 %v801, 7
        %v803 = vsub.s32 %v800, %v802
        %v804 = vrot.slane %v790, %v803
        %v805 = vcombine.low %v749, %v781
        %v806 = vcombine.high %v749, %v781
        %v807 = vcombine.low %v756, %v788
        %v808 = vcombine.high %v756, %v788
        %v809 = vcombine.low %v765, %v797
        %v810 = vcombine.high %v765, %v797
        %v811 = vcombine.low %v772, %v804
        %v812 = vcombine.high %v772, %v804
        %v813 = vcombine.low %v496, %v504
        %v814 = vcombine.high %v496, %v504
        %v816 = vunpack.c.l.s4 1983009808
        %v817 = vunpack.c.0.s8 %v816
        %v818 = vlaneseq
        %v819 = vshrl.u32 %v818, 7
        %v820 = vsub.s32 %v817, %v819
        %v821 = vrot.slane %v813, %v820
        %v823 = vunpack.c.l.s4 1983009808
        %v824 = vunpack.c.0.s8 %v823
        %v825 = vlaneseq
        %v826 = vshrl.u32 %v825, 7
        %v827 = vsub.s32 %v824, %v826
        %v828 = vrot.slane %v814, %v827
        %v829 = vcombine.low %v500, %v508
        %v830 = vcombine.high %v500, %v508
        %v832 = vunpack.c.l.s4 1983009808
        %v833 = vunpack.c.0.s8 %v832
        %v834 = vlaneseq
        %v835 = vshrl.u32 %v834, 7
        %v836 = vsub.s32 %v833, %v835
        %v837 = vrot.slane %v829, %v836
        %v839 = vunpack.c.l.s4 1983009808
        %v840 = vunpack.c.0.s8 %v839
        %v841 = vlaneseq
        %v842 = vshrl.u32 %v841, 7
        %v843 = vsub.s32 %v840, %v842
        %v844 = vrot.slane %v830, %v843
        %v845 = vcombine.low %v526, %v536
        %v846 = vcombine.high %v526, %v536
        %v848 = vunpack.c.l.s4 1983009808
        %v849 = vunpack.c.0.s8 %v848
        %v850 = vlaneseq
        %v851 = vshrl.u32 %v850, 7
        %v852 = vsub.s32 %v849, %v851
        %v853 = vrot.slane %v845, %v852
        %v855 = vunpack.c.l.s4 1983009808
        %v856 = vunpack.c.0.s8 %v855
        %v857 = vlaneseq
        %v858 = vshrl.u32 %v857, 7
        %v859 = vsub.s32 %v856, %v858
        %v860 = vrot.slane %v846, %v859
        %v861 = vcombine.low %v531, %v541
        %v862 = vcombine.high %v531, %v541
        %v864 = vunpack.c.l.s4 1983009808
        %v865 = vunpack.c.0.s8 %v864
        %v866 = vlaneseq
        %v867 = vshrl.u32 %v866, 7
        %v868 = vsub.s32 %v865, %v867
        %v869 = vrot.slane %v861, %v868
        %v871 = vunpack.c.l.s4 1983009808
        %v872 = vunpack.c.0.s8 %v871
        %v873 = vlaneseq
        %v874 = vshrl.u32 %v873, 7
        %v875 = vsub.s32 %v872, %v874
        %v876 = vrot.slane %v862, %v875
        %v877 = vcombine.low %v821, %v837
        %v878 = vcombine.high %v821, %v837
        %v880 = vunpack.c.l.s4 1934713408
        %v881 = vunpack.c.0.s8 %v880
        %v882 = vlaneseq
        %v883 = vshrl.u32 %v882, 7
        %v884 = vsub.s32 %v881, %v883
        %v885 = vrot.slane %v877, %v884
        %v887 = vunpack.c.l.s4 1934713408
        %v888 = vunpack.c.0.s8 %v887
        %v889 = vlaneseq
        %v890 = vshrl.u32 %v889, 7
        %v891 = vsub.s32 %v888, %v890
        %v892 = vrot.slane %v878, %v891
        %v893 = vcombine.low %v828, %v844
        %v894 = vcombine.high %v828, %v844
        %v896 = vunpack.c.l.s4 1934713408
        %v897 = vunpack.c.0.s8 %v896
        %v898 = vlaneseq
        %v899 = vshrl.u32 %v898, 7
        %v900 = vsub.s32 %v897, %v899
        %v901 = vrot.slane %v893, %v900
        %v903 = vunpack.c.l.s4 1934713408
        %v904 = vunpack.c.0.s8 %v903
        %v905 = vlaneseq
        %v906 = vshrl.u32 %v905, 7
        %v907 = vsub.s32 %v904, %v906
        %v908 = vrot.slane %v894, %v907
        %v909 = vcombine.low %v853, %v869
        %v910 = vcombine.high %v853, %v869
        %v912 = vunpack.c.l.s4 1934713408
        %v913 = vunpack.c.0.s8 %v912
        %v914 = vlaneseq
        %v915 = vshrl.u32 %v914, 7
        %v916 = vsub.s32 %v913, %v915
        %v917 = vrot.slane %v909, %v916
        %v919 = vunpack.c.l.s4 1934713408
        %v920 = vunpack.c.0.s8 %v919
        %v921 = vlaneseq
        %v922 = vshrl.u32 %v921, 7
        %v923 = vsub.s32 %v920, %v922
        %v924 = vrot.slane %v910, %v923
        %v925 = vcombine.low %v860, %v876
        %v926 = vcombine.high %v860, %v876
        %v928 = vunpack.c.l.s4 1934713408
        %v929 = vunpack.c.0.s8 %v928
        %v930 = vlaneseq
        %v931 = vshrl.u32 %v930, 7
        %v932 = vsub.s32 %v929, %v931
        %v933 = vrot.slane %v925, %v932
        %v935 = vunpack.c.l.s4 1934713408
        %v936 = vunpack.c.0.s8 %v935
        %v937 = vlaneseq
        %v938 = vshrl.u32 %v937, 7
        %v939 = vsub.s32 %v936, %v938
        %v940 = vrot.slane %v926, %v939
        %v941 = vcombine.low %v885, %v917
        %v942 = vcombine.high %v885, %v917
        %v943 = vcombine.low %v892, %v924
        %v944 = vcombine.high %v892, %v924
        %v945 = vcombine.low %v901, %v933
        %v946 = vcombine.high %v901, %v933
        %v947 = vcombine.low %v908, %v940
        %v948 = vcombine.high %v908, %v940
        %v949 = vcombine.low %v553, %v561
        %v950 = vcombine.high %v553, %v561
        %v952 = vunpack.c.l.s4 1983009808
        %v953 = vunpack.c.0.s8 %v952
        %v954 = vlaneseq
        %v955 = vshrl.u32 %v954, 7
        %v956 = vsub.s32 %v953, %v955
        %v957 = vrot.slane %v949, %v956
        %v959 = vunpack.c.l.s4 1983009808
        %v960 = vunpack.c.0.s8 %v959
        %v961 = vlaneseq
        %v962 = vshrl.u32 %v961, 7
        %v963 = vsub.s32 %v960, %v962
        %v964 = vrot.slane %v950, %v963
        %v965 = vcombine.low %v557, %v565
        %v966 = vcombine.high %v557, %v565
        %v968 = vunpack.c.l.s4 1983009808
        %v969 = vunpack.c.0.s8 %v968
        %v970 = vlaneseq
        %v971 = vshrl.u32 %v970, 7
        %v972 = vsub.s32 %v969, %v971
        %v973 = vrot.slane %v965, %v972
        %v975 = vunpack.c.l.s4 1983009808
        %v976 = vunpack.c.0.s8 %v975
        %v977 = vlaneseq
        %v978 = vshrl.u32 %v977, 7
        %v979 = vsub.s32 %v976, %v978
        %v980 = vrot.slane %v966, %v979
        %v981 = vcombine.low %v577, %v585
        %v982 = vcombine.high %v577, %v585
        %v984 = vunpack.c.l.s4 1983009808
        %v985 = vunpack.c.0.s8 %v984
        %v986 = vlaneseq
        %v987 = vshrl.u32 %v986, 7
        %v988 = vsub.s32 %v985, %v987
        %v989 = vrot.slane %v981, %v988
        %v991 = vunpack.c.l.s4 1983009808
        %v992 = vunpack.c.0.s8 %v991
        %v993 = vlaneseq
        %v994 = vshrl.u32 %v993, 7
        %v995 = vsub.s32 %v992, %v994
        %v996 = vrot.slane %v982, %v995
        %v997 = vcombine.low %v581, %v589
        %v998 = vcombine.high %v581, %v589
        %v1000 = vunpack.c.l.s4 1983009808
        %v1001 = vunpack.c.0.s8 %v1000
        %v1002 = vlaneseq
        %v1003 = vshrl.u32 %v1002, 7
        %v1004 = vsub.s32 %v1001, %v1003
        %v1005 = vrot.slane %v997, %v1004
        %v1007 = vunpack.c.l.s4 1983009808
        %v1008 = vunpack.c.0.s8 %v1007
        %v1009 = vlaneseq
        %v1010 = vshrl.u32 %v1009, 7
        %v1011 = vsub.s32 %v1008, %v1010
        %v1012 = vrot.slane %v998, %v1011
        %v1013 = vcombine.low %v957, %v973
        %v1014 = vcombine.high %v957, %v973
        %v1016 = vunpack.c.l.s4 1934713408
        %v1017 = vunpack.c.0.s8 %v1016
        %v1018 = vlaneseq
        %v1019 = vshrl.u32 %v1018, 7
        %v1020 = vsub.s32 %v1017, %v1019
        %v1021 = vrot.slane %v1013, %v1020
        %v1023 = vunpack.c.l.s4 1934713408
        %v1024 = vunpack.c.0.s8 %v1023
        %v1025 = vlaneseq
        %v1026 = vshrl.u32 %v1025, 7
        %v1027 = vsub.s32 %v1024, %v1026
        %v1028 = vrot.slane %v1014, %v1027
        %v1029 = vcombine.low %v964, %v980
        %v1030 = vcombine.high %v964, %v980
        %v1032 = vunpack.c.l.s4 1934713408
        %v1033 = vunpack.c.0.s8 %v1032
        %v1034 = vlaneseq
        %v1035 = vshrl.u32 %v1034, 7
        %v1036 = vsub.s32 %v1033, %v1035
        %v1037 = vrot.slane %v1029, %v1036
        %v1039 = vunpack.c.l.s4 1934713408
        %v1040 = vunpack.c.0.s8 %v1039
        %v1041 = vlaneseq
        %v1042 = vshrl.u32 %v1041, 7
        %v1043 = vsub.s32 %v1040, %v1042
        %v1044 = vrot.slane %v1030, %v1043
        %v1045 = vcombine.low %v989, %v1005
        %v1046 = vcombine.high %v989, %v1005
        %v1048 = vunpack.c.l.s4 1934713408
        %v1049 = vunpack.c.0.s8 %v1048
        %v1050 = vlaneseq
        %v1051 = vshrl.u32 %v1050, 7
        %v1052 = vsub.s32 %v1049, %v1051
        %v1053 = vrot.slane %v1045, %v1052
        %v1055 = vunpack.c.l.s4 1934713408
        %v1056 = vunpack.c.0.s8 %v1055
        %v1057 = vlaneseq
        %v1058 = vshrl.u32 %v1057, 7
        %v1059 = vsub.s32 %v1056, %v1058
        %v1060 = vrot.slane %v1046, %v1059
        %v1061 = vcombine.low %v996, %v1012
        %v1062 = vcombine.high %v996, %v1012
        %v1064 = vunpack.c.l.s4 1934713408
        %v1065 = vunpack.c.0.s8 %v1064
        %v1066 = vlaneseq
        %v1067 = vshrl.u32 %v1066, 7
        %v1068 = vsub.s32 %v1065, %v1067
        %v1069 = vrot.slane %v1061, %v1068
        %v1071 = vunpack.c.l.s4 1934713408
        %v1072 = vunpack.c.0.s8 %v1071
        %v1073 = vlaneseq
        %v1074 = vshrl.u32 %v1073, 7
        %v1075 = vsub.s32 %v1072, %v1074
        %v1076 = vrot.slane %v1062, %v1075
        %v1077 = vcombine.low %v1021, %v1053
        %v1078 = vcombine.high %v1021, %v1053
        %v1079 = vcombine.low %v1028, %v1060
        %v1080 = vcombine.high %v1028, %v1060
        %v1081 = vcombine.low %v1037, %v1069
        %v1082 = vcombine.high %v1037, %v1069
        %v1083 = vcombine.low %v1044, %v1076
        %v1084 = vcombine.high %v1044, %v1076
        %v1085 = vcombine.low %v603, %v613
        %v1086 = vcombine.high %v603, %v613
        %v1088 = vunpack.c.l.s4 1983009808
        %v1089 = vunpack.c.0.s8 %v1088
        %v1090 = vlaneseq
        %v1091 = vshrl.u32 %v1090, 7
        %v1092 = vsub.s32 %v1089, %v1091
        %v1093 = vrot.slane %v1085, %v1092
        %v1095 = vunpack.c.l.s4 1983009808
        %v1096 = vunpack.c.0.s8 %v1095
        %v1097 = vlaneseq
        %v1098 = vshrl.u32 %v1097, 7
        %v1099 = vsub.s32 %v1096, %v1098
        %v1100 = vrot.slane %v1086, %v1099
        %v1101 = vcombine.low %v608, %v618
        %v1102 = vcombine.high %v608, %v618
        %v1104 = vunpack.c.l.s4 1983009808
        %v1105 = vunpack.c.0.s8 %v1104
        %v1106 = vlaneseq
        %v1107 = vshrl.u32 %v1106, 7
        %v1108 = vsub.s32 %v1105, %v1107
        %v1109 = vrot.slane %v1101, %v1108
        %v1111 = vunpack.c.l.s4 1983009808
        %v1112 = vunpack.c.0.s8 %v1111
        %v1113 = vlaneseq
        %v1114 = vshrl.u32 %v1113, 7
        %v1115 = vsub.s32 %v1112, %v1114
        %v1116 = vrot.slane %v1102, %v1115
        %v1117 = vcombine.low %v630, %v638
        %v1118 = vcombine.high %v630, %v638
        %v1120 = vunpack.c.l.s4 1983009808
        %v1121 = vunpack.c.0.s8 %v1120
        %v1122 = vlaneseq
        %v1123 = vshrl.u32 %v1122, 7
        %v1124 = vsub.s32 %v1121, %v1123
        %v1125 = vrot.slane %v1117, %v1124
        %v1127 = vunpack.c.l.s4 1983009808
        %v1128 = vunpack.c.0.s8 %v1127
        %v1129 = vlaneseq
        %v1130 = vshrl.u32 %v1129, 7
        %v1131 = vsub.s32 %v1128, %v1130
        %v1132 = vrot.slane %v1118, %v1131
        %v1133 = vcombine.low %v634, %v642
        %v1134 = vcombine.high %v634, %v642
        %v1136 = vunpack.c.l.s4 1983009808
        %v1137 = vunpack.c.0.s8 %v1136
        %v1138 = vlaneseq
        %v1139 = vshrl.u32 %v1138, 7
        %v1140 = vsub.s32 %v1137, %v1139
        %v1141 = vrot.slane %v1133, %v1140
        %v1143 = vunpack.c.l.s4 1983009808
        %v1144 = vunpack.c.0.s8 %v1143
        %v1145 = vlaneseq
        %v1146 = vshrl.u32 %v1145, 7
        %v1147 = vsub.s32 %v1144, %v1146
        %v1148 = vrot.slane %v1134, %v1147
        %v1149 = vcombine.low %v1093, %v1109
        %v1150 = vcombine.high %v1093, %v1109
        %v1152 = vunpack.c.l.s4 1934713408
        %v1153 = vunpack.c.0.s8 %v1152
        %v1154 = vlaneseq
        %v1155 = vshrl.u32 %v1154, 7
        %v1156 = vsub.s32 %v1153, %v1155
        %v1157 = vrot.slane %v1149, %v1156
        %v1159 = vunpack.c.l.s4 1934713408
        %v1160 = vunpack.c.0.s8 %v1159
        %v1161 = vlaneseq
        %v1162 = vshrl.u32 %v1161, 7
        %v1163 = vsub.s32 %v1160, %v1162
        %v1164 = vrot.slane %v1150, %v1163
        %v1165 = vcombine.low %v1100, %v1116
        %v1166 = vcombine.high %v1100, %v1116
        %v1168 = vunpack.c.l.s4 1934713408
        %v1169 = vunpack.c.0.s8 %v1168
        %v1170 = vlaneseq
        %v1171 = vshrl.u32 %v1170, 7
        %v1172 = vsub.s32 %v1169, %v1171
        %v1173 = vrot.slane %v1165, %v1172
        %v1175 = vunpack.c.l.s4 1934713408
        %v1176 = vunpack.c.0.s8 %v1175
        %v1177 = vlaneseq
        %v1178 = vshrl.u32 %v1177, 7
        %v1179 = vsub.s32 %v1176, %v1178
        %v1180 = vrot.slane %v1166, %v1179
        %v1181 = vcombine.low %v1125, %v1141
        %v1182 = vcombine.high %v1125, %v1141
        %v1184 = vunpack.c.l.s4 1934713408
        %v1185 = vunpack.c.0.s8 %v1184
        %v1186 = vlaneseq
        %v1187 = vshrl.u32 %v1186, 7
        %v1188 = vsub.s32 %v1185, %v1187
        %v1189 = vrot.slane %v1181, %v1188
        %v1191 = vunpack.c.l.s4 1934713408
        %v1192 = vunpack.c.0.s8 %v1191
        %v1193 = vlaneseq
        %v1194 = vshrl.u32 %v1193, 7
        %v1195 = vsub.s32 %v1192, %v1194
        %v1196 = vrot.slane %v1182, %v1195
        %v1197 = vcombine.low %v1132, %v1148
        %v1198 = vcombine.high %v1132, %v1148
        %v1200 = vunpack.c.l.s4 1934713408
        %v1201 = vunpack.c.0.s8 %v1200
        %v1202 = vlaneseq
        %v1203 = vshrl.u32 %v1202, 7
        %v1204 = vsub.s32 %v1201, %v1203
        %v1205 = vrot.slane %v1197, %v1204
        %v1207 = vunpack.c.l.s4 1934713408
        %v1208 = vunpack.c.0.s8 %v1207
        %v1209 = vlaneseq
        %v1210 = vshrl.u32 %v1209, 7
        %v1211 = vsub.s32 %v1208, %v1210
        %v1212 = vrot.slane %v1198, %v1211
        %v1213 = vcombine.low %v1157, %v1189
        %v1214 = vcombine.high %v1157, %v1189
        %v1215 = vcombine.low %v1164, %v1196
        %v1216 = vcombine.high %v1164, %v1196
        %v1217 = vcombine.low %v1173, %v1205
        %v1218 = vcombine.high %v1173, %v1205
        %v1219 = vcombine.low %v1180, %v1212
        %v1220 = vcombine.high %v1180, %v1212
        %v1221 = vcombine.low %v654, %v662
        %v1222 = vcombine.high %v654, %v662
        %v1224 = vunpack.c.l.s4 1983009808
        %v1225 = vunpack.c.0.s8 %v1224
        %v1226 = vlaneseq
        %v1227 = vshrl.u32 %v1226, 7
        %v1228 = vsub.s32 %v1225, %v1227
        %v1229 = vrot.slane %v1221, %v1228
        %v1231 = vunpack.c.l.s4 1983009808
        %v1232 = vunpack.c.0.s8 %v1231
        %v1233 = vlaneseq
        %v1234 = vshrl.u32 %v1233, 7
        %v1235 = vsub.s32 %v1232, %v1234
        %v1236 = vrot.slane %v1222, %v1235
        %v1237 = vcombine.low %v658, %v666
        %v1238 = vcombine.high %v658, %v666
        %v1240 = vunpack.c.l.s4 1983009808
        %v1241 = vunpack.c.0.s8 %v1240
        %v1242 = vlaneseq
        %v1243 = vshrl.u32 %v1242, 7
        %v1244 = vsub.s32 %v1241, %v1243
        %v1245 = vrot.slane %v1237, %v1244
        %v1247 = vunpack.c.l.s4 1983009808
        %v1248 = vunpack.c.0.s8 %v1247
        %v1249 = vlaneseq
        %v1250 = vshrl.u32 %v1249, 7
        %v1251 = vsub.s32 %v1248, %v1250
        %v1252 = vrot.slane %v1238, %v1251
        %v1253 = vcombine.low %v1229, %v1245
        %v1254 = vcombine.high %v1229, %v1245
        %v1256 = vunpack.c.l.s4 1934713408
        %v1257 = vunpack.c.0.s8 %v1256
        %v1258 = vlaneseq
        %v1259 = vshrl.u32 %v1258, 7
        %v1260 = vsub.s32 %v1257, %v1259
        %v1261 = vrot.slane %v1253, %v1260
        %v1263 = vunpack.c.l.s4 1934713408
        %v1264 = vunpack.c.0.s8 %v1263
        %v1265 = vlaneseq
        %v1266 = vshrl.u32 %v1265, 7
        %v1267 = vsub.s32 %v1264, %v1266
        %v1268 = vrot.slane %v1254, %v1267
        %v1269 = vcombine.low %v1236, %v1252
        %v1270 = vcombine.high %v1236, %v1252
        %v1272 = vunpack.c.l.s4 1934713408
        %v1273 = vunpack.c.0.s8 %v1272
        %v1274 = vlaneseq
        %v1275 = vshrl.u32 %v1274, 7
        %v1276 = vsub.s32 %v1273, %v1275
        %v1277 = vrot.slane %v1269, %v1276
        %v1279 = vunpack.c.l.s4 1934713408
        %v1280 = vunpack.c.0.s8 %v1279
        %v1281 = vlaneseq
        %v1282 = vshrl.u32 %v1281, 7
        %v1283 = vsub.s32 %v1280, %v1282
        %v1284 = vrot.slane %v1270, %v1283
        %v1285 = vcombine.high %v1261, 0.0
        %v1286 = vcombine.high %v1268, 0.0
        %v1287 = vcombine.high %v1277, 0.0
        %v1288 = vcombine.high %v1284, 0.0
        %v1289 = vcombine.low %v452, %v458
        %v1290 = vcombine.high %v452, %v458
        %v1292 = vunpack.c.l.s4 1983009808
        %v1293 = vunpack.c.0.s8 %v1292
        %v1294 = vlaneseq
        %v1295 = vshrl.u32 %v1294, 7
        %v1296 = vsub.s32 %v1293, %v1295
        %v1297 = vrot.slane %v1289, %v1296
        %v1299 = vunpack.c.l.s4 1983009808
        %v1300 = vunpack.c.0.s8 %v1299
        %v1301 = vlaneseq
        %v1302 = vshrl.u32 %v1301, 7
        %v1303 = vsub.s32 %v1300, %v1302
        %v1304 = vrot.slane %v1290, %v1303
        %v1305 = vcombine.low %v455, %v461
        %v1306 = vcombine.high %v455, %v461
        %v1308 = vunpack.c.l.s4 1983009808
        %v1309 = vunpack.c.0.s8 %v1308
        %v1310 = vlaneseq
        %v1311 = vshrl.u32 %v1310, 7
        %v1312 = vsub.s32 %v1309, %v1311
        %v1313 = vrot.slane %v1305, %v1312
        %v1315 = vunpack.c.l.s4 1983009808
        %v1316 = vunpack.c.0.s8 %v1315
        %v1317 = vlaneseq
        %v1318 = vshrl.u32 %v1317, 7
        %v1319 = vsub.s32 %v1316, %v1318
        %v1320 = vrot.slane %v1306, %v1319
        %v1321 = vcombine.low %v474, %v482
        %v1322 = vcombine.high %v474, %v482
        %v1324 = vunpack.c.l.s4 1983009808
        %v1325 = vunpack.c.0.s8 %v1324
        %v1326 = vlaneseq
        %v1327 = vshrl.u32 %v1326, 7
        %v1328 = vsub.s32 %v1325, %v1327
        %v1329 = vrot.slane %v1321, %v1328
        %v1331 = vunpack.c.l.s4 1983009808
        %v1332 = vunpack.c.0.s8 %v1331
        %v1333 = vlaneseq
        %v1334 = vshrl.u32 %v1333, 7
        %v1335 = vsub.s32 %v1332, %v1334
        %v1336 = vrot.slane %v1322, %v1335
        %v1337 = vcombine.low %v478, %v486
        %v1338 = vcombine.high %v478, %v486
        %v1340 = vunpack.c.l.s4 1983009808
        %v1341 = vunpack.c.0.s8 %v1340
        %v1342 = vlaneseq
        %v1343 = vshrl.u32 %v1342, 7
        %v1344 = vsub.s32 %v1341, %v1343
        %v1345 = vrot.slane %v1337, %v1344
        %v1347 = vunpack.c.l.s4 1983009808
        %v1348 = vunpack.c.0.s8 %v1347
        %v1349 = vlaneseq
        %v1350 = vshrl.u32 %v1349, 7
        %v1351 = vsub.s32 %v1348, %v1350
        %v1352 = vrot.slane %v1338, %v1351
        %v1353 = vcombine.low %v1297, %v1313
        %v1354 = vcombine.high %v1297, %v1313
        %v1356 = vunpack.c.l.s4 1934713408
        %v1357 = vunpack.c.0.s8 %v1356
        %v1358 = vlaneseq
        %v1359 = vshrl.u32 %v1358, 7
        %v1360 = vsub.s32 %v1357, %v1359
        %v1361 = vrot.slane %v1353, %v1360
        %v1363 = vunpack.c.l.s4 1934713408
        %v1364 = vunpack.c.0.s8 %v1363
        %v1365 = vlaneseq
        %v1366 = vshrl.u32 %v1365, 7
        %v1367 = vsub.s32 %v1364, %v1366
        %v1368 = vrot.slane %v1354, %v1367
        %v1369 = vcombine.low %v1304, %v1320
        %v1370 = vcombine.high %v1304, %v1320
        %v1372 = vunpack.c.l.s4 1934713408
        %v1373 = vunpack.c.0.s8 %v1372
        %v1374 = vlaneseq
        %v1375 = vshrl.u32 %v1374, 7
        %v1376 = vsub.s32 %v1373, %v1375
        %v1377 = vrot.slane %v1369, %v1376
        %v1379 = vunpack.c.l.s4 1934713408
        %v1380 = vunpack.c.0.s8 %v1379
        %v1381 = vlaneseq
        %v1382 = vshrl.u32 %v1381, 7
        %v1383 = vsub.s32 %v1380, %v1382
        %v1384 = vrot.slane %v1370, %v1383
        %v1385 = vcombine.low %v1329, %v1345
        %v1386 = vcombine.high %v1329, %v1345
        %v1388 = vunpack.c.l.s4 1934713408
        %v1389 = vunpack.c.0.s8 %v1388
        %v1390 = vlaneseq
        %v1391 = vshrl.u32 %v1390, 7
        %v1392 = vsub.s32 %v1389, %v1391
        %v1393 = vrot.slane %v1385, %v1392
        %v1395 = vunpack.c.l.s4 1934713408
        %v1396 = vunpack.c.0.s8 %v1395
        %v1397 = vlaneseq
        %v1398 = vshrl.u32 %v1397, 7
        %v1399 = vsub.s32 %v1396, %v1398
        %v1400 = vrot.slane %v1386, %v1399
        %v1401 = vcombine.low %v1336, %v1352
        %v1402 = vcombine.high %v1336, %v1352
        %v1404 = vunpack.c.l.s4 1934713408
        %v1405 = vunpack.c.0.s8 %v1404
        %v1406 = vlaneseq
        %v1407 = vshrl.u32 %v1406, 7
        %v1408 = vsub.s32 %v1405, %v1407
        %v1409 = vrot.slane %v1401, %v1408
        %v1411 = vunpack.c.l.s4 1934713408
        %v1412 = vunpack.c.0.s8 %v1411
        %v1413 = vlaneseq
        %v1414 = vshrl.u32 %v1413, 7
        %v1415 = vsub.s32 %v1412, %v1414
        %v1416 = vrot.slane %v1402, %v1415
        %v1417 = vcombine.low %v1361, %v1393
        %v1418 = vcombine.high %v1361, %v1393
        %v1419 = vcombine.low %v1368, %v1400
        %v1420 = vcombine.high %v1368, %v1400
        %v1421 = vcombine.low %v1377, %v1409
        %v1422 = vcombine.high %v1377, %v1409
        %v1423 = vcombine.low %v1384, %v1416
        %v1424 = vcombine.high %v1384, %v1416
        %v1425 = vcombine.low %v498, %v506
        %v1426 = vcombine.high %v498, %v506
        %v1428 = vunpack.c.l.s4 1983009808
        %v1429 = vunpack.c.0.s8 %v1428
        %v1430 = vlaneseq
        %v1431 = vshrl.u32 %v1430, 7
        %v1432 = vsub.s32 %v1429, %v1431
        %v1433 = vrot.slane %v1425, %v1432
        %v1435 = vunpack.c.l.s4 1983009808
        %v1436 = vunpack.c.0.s8 %v1435
        %v1437 = vlaneseq
        %v1438 = vshrl.u32 %v1437, 7
        %v1439 = vsub.s32 %v1436, %v1438
        %v1440 = vrot.slane %v1426, %v1439
        %v1441 = vcombine.low %v502, %v510
        %v1442 = vcombine.high %v502, %v510
        %v1444 = vunpack.c.l.s4 1983009808
        %v1445 = vunpack.c.0.s8 %v1444
        %v1446 = vlaneseq
        %v1447 = vshrl.u32 %v1446, 7
        %v1448 = vsub.s32 %v1445, %v1447
        %v1449 = vrot.slane %v1441, %v1448
        %v1451 = vunpack.c.l.s4 1983009808
        %v1452 = vunpack.c.0.s8 %v1451
        %v1453 = vlaneseq
        %v1454 = vshrl.u32 %v1453, 7
        %v1455 = vsub.s32 %v1452, %v1454
        %v1456 = vrot.slane %v1442, %v1455
        %v1457 = vcombine.low %v528, %v538
        %v1458 = vcombine.high %v528, %v538
        %v1460 = vunpack.c.l.s4 1983009808
        %v1461 = vunpack.c.0.s8 %v1460
        %v1462 = vlaneseq
        %v1463 = vshrl.u32 %v1462, 7
        %v1464 = vsub.s32 %v1461, %v1463
        %v1465 = vrot.slane %v1457, %v1464
        %v1467 = vunpack.c.l.s4 1983009808
        %v1468 = vunpack.c.0.s8 %v1467
        %v1469 = vlaneseq
        %v1470 = vshrl.u32 %v1469, 7
        %v1471 = vsub.s32 %v1468, %v1470
        %v1472 = vrot.slane %v1458, %v1471
        %v1473 = vcombine.low %v533, %v543
        %v1474 = vcombine.high %v533, %v543
        %v1476 = vunpack.c.l.s4 1983009808
        %v1477 = vunpack.c.0.s8 %v1476
        %v1478 = vlaneseq
        %v1479 = vshrl.u32 %v1478, 7
        %v1480 = vsub.s32 %v1477, %v1479
        %v1481 = vrot.slane %v1473, %v1480
        %v1483 = vunpack.c.l.s4 1983009808
        %v1484 = vunpack.c.0.s8 %v1483
        %v1485 = vlaneseq
        %v1486 = vshrl.u32 %v1485, 7
        %v1487 = vsub.s32 %v1484, %v1486
        %v1488 = vrot.slane %v1474, %v1487
        %v1489 = vcombine.low %v1433, %v1449
        %v1490 = vcombine.high %v1433, %v1449
        %v1492 = vunpack.c.l.s4 1934713408
        %v1493 = vunpack.c.0.s8 %v1492
        %v1494 = vlaneseq
        %v1495 = vshrl.u32 %v1494, 7
        %v1496 = vsub.s32 %v1493, %v1495
        %v1497 = vrot.slane %v1489, %v1496
        %v1499 = vunpack.c.l.s4 1934713408
        %v1500 = vunpack.c.0.s8 %v1499
        %v1501 = vlaneseq
        %v1502 = vshrl.u32 %v1501, 7
        %v1503 = vsub.s32 %v1500, %v1502
        %v1504 = vrot.slane %v1490, %v1503
        %v1505 = vcombine.low %v1440, %v1456
        %v1506 = vcombine.high %v1440, %v1456
        %v1508 = vunpack.c.l.s4 1934713408
        %v1509 = vunpack.c.0.s8 %v1508
        %v1510 = vlaneseq
        %v1511 = vshrl.u32 %v1510, 7
        %v1512 = vsub.s32 %v1509, %v1511
        %v1513 = vrot.slane %v1505, %v1512
        %v1515 = vunpack.c.l.s4 1934713408
        %v1516 = vunpack.c.0.s8 %v1515
        %v1517 = vlaneseq
        %v1518 = vshrl.u32 %v1517, 7
        %v1519 = vsub.s32 %v1516, %v1518
        %v1520 = vrot.slane %v1506, %v1519
        %v1521 = vcombine.low %v1465, %v1481
        %v1522 = vcombine.high %v1465, %v1481
        %v1524 = vunpack.c.l.s4 1934713408
        %v1525 = vunpack.c.0.s8 %v1524
        %v1526 = vlaneseq
        %v1527 = vshrl.u32 %v1526, 7
        %v1528 = vsub.s32 %v1525, %v1527
        %v1529 = vrot.slane %v1521, %v1528
        %v1531 = vunpack.c.l.s4 1934713408
        %v1532 = vunpack.c.0.s8 %v1531
        %v1533 = vlaneseq
        %v1534 = vshrl.u32 %v1533, 7
        %v1535 = vsub.s32 %v1532, %v1534
        %v1536 = vrot.slane %v1522, %v1535
        %v1537 = vcombine.low %v1472, %v1488
        %v1538 = vcombine.high %v1472, %v1488
        %v1540 = vunpack.c.l.s4 1934713408
        %v1541 = vunpack.c.0.s8 %v1540
        %v1542 = vlaneseq
        %v1543 = vshrl.u32 %v1542, 7
        %v1544 = vsub.s32 %v1541, %v1543
        %v1545 = vrot.slane %v1537, %v1544
        %v1547 = vunpack.c.l.s4 1934713408
        %v1548 = vunpack.c.0.s8 %v1547
        %v1549 = vlaneseq
        %v1550 = vshrl.u32 %v1549, 7
        %v1551 = vsub.s32 %v1548, %v1550
        %v1552 = vrot.slane %v1538, %v1551
        %v1553 = vcombine.low %v1497, %v1529
        %v1554 = vcombine.high %v1497, %v1529
        %v1555 = vcombine.low %v1504, %v1536
        %v1556 = vcombine.high %v1504, %v1536
        %v1557 = vcombine.low %v1513, %v1545
        %v1558 = vcombine.high %v1513, %v1545
        %v1559 = vcombine.low %v1520, %v1552
        %v1560 = vcombine.high %v1520, %v1552
        %v1561 = vcombine.low %v555, %v563
        %v1562 = vcombine.high %v555, %v563
        %v1564 = vunpack.c.l.s4 1983009808
        %v1565 = vunpack.c.0.s8 %v1564
        %v1566 = vlaneseq
        %v1567 = vshrl.u32 %v1566, 7
        %v1568 = vsub.s32 %v1565, %v1567
        %v1569 = vrot.slane %v1561, %v1568
        %v1571 = vunpack.c.l.s4 1983009808
        %v1572 = vunpack.c.0.s8 %v1571
        %v1573 = vlaneseq
        %v1574 = vshrl.u32 %v1573, 7
        %v1575 = vsub.s32 %v1572, %v1574
        %v1576 = vrot.slane %v1562, %v1575
        %v1577 = vcombine.low %v559, %v567
        %v1578 = vcombine.high %v559, %v567
        %v1580 = vunpack.c.l.s4 1983009808
        %v1581 = vunpack.c.0.s8 %v1580
        %v1582 = vlaneseq
        %v1583 = vshrl.u32 %v1582, 7
        %v1584 = vsub.s32 %v1581, %v1583
        %v1585 = vrot.slane %v1577, %v1584
        %v1587 = vunpack.c.l.s4 1983009808
        %v1588 = vunpack.c.0.s8 %v1587
        %v1589 = vlaneseq
        %v1590 = vshrl.u32 %v1589, 7
        %v1591 = vsub.s32 %v1588, %v1590
        %v1592 = vrot.slane %v1578, %v1591
        %v1593 = vcombine.low %v579, %v587
        %v1594 = vcombine.high %v579, %v587
        %v1596 = vunpack.c.l.s4 1983009808
        %v1597 = vunpack.c.0.s8 %v1596
        %v1598 = vlaneseq
        %v1599 = vshrl.u32 %v1598, 7
        %v1600 = vsub.s32 %v1597, %v1599
        %v1601 = vrot.slane %v1593, %v1600
        %v1603 = vunpack.c.l.s4 1983009808
        %v1604 = vunpack.c.0.s8 %v1603
        %v1605 = vlaneseq
        %v1606 = vshrl.u32 %v1605, 7
        %v1607 = vsub.s32 %v1604, %v1606
        %v1608 = vrot.slane %v1594, %v1607
        %v1609 = vcombine.low %v583, %v591
        %v1610 = vcombine.high %v583, %v591
        %v1612 = vunpack.c.l.s4 1983009808
        %v1613 = vunpack.c.0.s8 %v1612
        %v1614 = vlaneseq
        %v1615 = vshrl.u32 %v1614, 7
        %v1616 = vsub.s32 %v1613, %v1615
        %v1617 = vrot.slane %v1609, %v1616
        %v1619 = vunpack.c.l.s4 1983009808
        %v1620 = vunpack.c.0.s8 %v1619
        %v1621 = vlaneseq
        %v1622 = vshrl.u32 %v1621, 7
        %v1623 = vsub.s32 %v1620, %v1622
        %v1624 = vrot.slane %v1610, %v1623
        %v1625 = vcombine.low %v1569, %v1585
        %v1626 = vcombine.high %v1569, %v1585
        %v1628 = vunpack.c.l.s4 1934713408
        %v1629 = vunpack.c.0.s8 %v1628
        %v1630 = vlaneseq
        %v1631 = vshrl.u32 %v1630, 7
        %v1632 = vsub.s32 %v1629, %v1631
        %v1633 = vrot.slane %v1625, %v1632
        %v1635 = vunpack.c.l.s4 1934713408
        %v1636 = vunpack.c.0.s8 %v1635
        %v1637 = vlaneseq
        %v1638 = vshrl.u32 %v1637, 7
        %v1639 = vsub.s32 %v1636, %v1638
        %v1640 = vrot.slane %v1626, %v1639
        %v1641 = vcombine.low %v1576, %v1592
        %v1642 = vcombine.high %v1576, %v1592
        %v1644 = vunpack.c.l.s4 1934713408
        %v1645 = vunpack.c.0.s8 %v1644
        %v1646 = vlaneseq
        %v1647 = vshrl.u32 %v1646, 7
        %v1648 = vsub.s32 %v1645, %v1647
        %v1649 = vrot.slane %v1641, %v1648
        %v1651 = vunpack.c.l.s4 1934713408
        %v1652 = vunpack.c.0.s8 %v1651
        %v1653 = vlaneseq
        %v1654 = vshrl.u32 %v1653, 7
        %v1655 = vsub.s32 %v1652, %v1654
        %v1656 = vrot.slane %v1642, %v1655
        %v1657 = vcombine.low %v1601, %v1617
        %v1658 = vcombine.high %v1601, %v1617
        %v1660 = vunpack.c.l.s4 1934713408
        %v1661 = vunpack.c.0.s8 %v1660
        %v1662 = vlaneseq
        %v1663 = vshrl.u32 %v1662, 7
        %v1664 = vsub.s32 %v1661, %v1663
        %v1665 = vrot.slane %v1657, %v1664
        %v1667 = vunpack.c.l.s4 1934713408
        %v1668 = vunpack.c.0.s8 %v1667
        %v1669 = vlaneseq
        %v1670 = vshrl.u32 %v1669, 7
        %v1671 = vsub.s32 %v1668, %v1670
        %v1672 = vrot.slane %v1658, %v1671
        %v1673 = vcombine.low %v1608, %v1624
        %v1674 = vcombine.high %v1608, %v1624
        %v1676 = vunpack.c.l.s4 1934713408
        %v1677 = vunpack.c.0.s8 %v1676
        %v1678 = vlaneseq
        %v1679 = vshrl.u32 %v1678, 7
        %v1680 = vsub.s32 %v1677, %v1679
        %v1681 = vrot.slane %v1673, %v1680
        %v1683 = vunpack.c.l.s4 1934713408
        %v1684 = vunpack.c.0.s8 %v1683
        %v1685 = vlaneseq
        %v1686 = vshrl.u32 %v1685, 7
        %v1687 = vsub.s32 %v1684, %v1686
        %v1688 = vrot.slane %v1674, %v1687
        %v1689 = vcombine.low %v1633, %v1665
        %v1690 = vcombine.high %v1633, %v1665
        %v1691 = vcombine.low %v1640, %v1672
        %v1692 = vcombine.high %v1640, %v1672
        %v1693 = vcombine.low %v1649, %v1681
        %v1694 = vcombine.high %v1649, %v1681
        %v1695 = vcombine.low %v1656, %v1688
        %v1696 = vcombine.high %v1656, %v1688
        %v1697 = vcombine.low %v605, %v615
        %v1698 = vcombine.high %v605, %v615
        %v1700 = vunpack.c.l.s4 1983009808
        %v1701 = vunpack.c.0.s8 %v1700
        %v1702 = vlaneseq
        %v1703 = vshrl.u32 %v1702, 7
        %v1704 = vsub.s32 %v1701, %v1703
        %v1705 = vrot.slane %v1697, %v1704
        %v1707 = vunpack.c.l.s4 1983009808
        %v1708 = vunpack.c.0.s8 %v1707
        %v1709 = vlaneseq
        %v1710 = vshrl.u32 %v1709, 7
        %v1711 = vsub.s32 %v1708, %v1710
        %v1712 = vrot.slane %v1698, %v1711
        %v1713 = vcombine.low %v610, %v620
        %v1714 = vcombine.high %v610, %v620
        %v1716 = vunpack.c.l.s4 1983009808
        %v1717 = vunpack.c.0.s8 %v1716
        %v1718 = vlaneseq
        %v1719 = vshrl.u32 %v1718, 7
        %v1720 = vsub.s32 %v1717, %v1719
        %v1721 = vrot.slane %v1713, %v1720
        %v1723 = vunpack.c.l.s4 1983009808
        %v1724 = vunpack.c.0.s8 %v1723
        %v1725 = vlaneseq
        %v1726 = vshrl.u32 %v1725, 7
        %v1727 = vsub.s32 %v1724, %v1726
        %v1728 = vrot.slane %v1714, %v1727
        %v1729 = vcombine.low %v632, %v640
        %v1730 = vcombine.high %v632, %v640
        %v1732 = vunpack.c.l.s4 1983009808
        %v1733 = vunpack.c.0.s8 %v1732
        %v1734 = vlaneseq
        %v1735 = vshrl.u32 %v1734, 7
        %v1736 = vsub.s32 %v1733, %v1735
        %v1737 = vrot.slane %v1729, %v1736
        %v1739 = vunpack.c.l.s4 1983009808
        %v1740 = vunpack.c.0.s8 %v1739
        %v1741 = vlaneseq
        %v1742 = vshrl.u32 %v1741, 7
        %v1743 = vsub.s32 %v1740, %v1742
        %v1744 = vrot.slane %v1730, %v1743
        %v1745 = vcombine.low %v636, %v644
        %v1746 = vcombine.high %v636, %v644
        %v1748 = vunpack.c.l.s4 1983009808
        %v1749 = vunpack.c.0.s8 %v1748
        %v1750 = vlaneseq
        %v1751 = vshrl.u32 %v1750, 7
        %v1752 = vsub.s32 %v1749, %v1751
        %v1753 = vrot.slane %v1745, %v1752
        %v1755 = vunpack.c.l.s4 1983009808
        %v1756 = vunpack.c.0.s8 %v1755
        %v1757 = vlaneseq
        %v1758 = vshrl.u32 %v1757, 7
        %v1759 = vsub.s32 %v1756, %v1758
        %v1760 = vrot.slane %v1746, %v1759
        %v1761 = vcombine.low %v1705, %v1721
        %v1762 = vcombine.high %v1705, %v1721
        %v1764 = vunpack.c.l.s4 1934713408
        %v1765 = vunpack.c.0.s8 %v1764
        %v1766 = vlaneseq
        %v1767 = vshrl.u32 %v1766, 7
        %v1768 = vsub.s32 %v1765, %v1767
        %v1769 = vrot.slane %v1761, %v1768
        %v1771 = vunpack.c.l.s4 1934713408
        %v1772 = vunpack.c.0.s8 %v1771
        %v1773 = vlaneseq
        %v1774 = vshrl.u32 %v1773, 7
        %v1775 = vsub.s32 %v1772, %v1774
        %v1776 = vrot.slane %v1762, %v1775
        %v1777 = vcombine.low %v1712, %v1728
        %v1778 = vcombine.high %v1712, %v1728
        %v1780 = vunpack.c.l.s4 1934713408
        %v1781 = vunpack.c.0.s8 %v1780
        %v1782 = vlaneseq
        %v1783 = vshrl.u32 %v1782, 7
        %v1784 = vsub.s32 %v1781, %v1783
        %v1785 = vrot.slane %v1777, %v1784
        %v1787 = vunpack.c.l.s4 1934713408
        %v1788 = vunpack.c.0.s8 %v1787
        %v1789 = vlaneseq
        %v1790 = vshrl.u32 %v1789, 7
        %v1791 = vsub.s32 %v1788, %v1790
        %v1792 = vrot.slane %v1778, %v1791
        %v1793 = vcombine.low %v1737, %v1753
        %v1794 = vcombine.high %v1737, %v1753
        %v1796 = vunpack.c.l.s4 1934713408
        %v1797 = vunpack.c.0.s8 %v1796
        %v1798 = vlaneseq
        %v1799 = vshrl.u32 %v1798, 7
        %v1800 = vsub.s32 %v1797, %v1799
        %v1801 = vrot.slane %v1793, %v1800
        %v1803 = vunpack.c.l.s4 1934713408
        %v1804 = vunpack.c.0.s8 %v1803
        %v1805 = vlaneseq
        %v1806 = vshrl.u32 %v1805, 7
        %v1807 = vsub.s32 %v1804, %v1806
        %v1808 = vrot.slane %v1794, %v1807
        %v1809 = vcombine.low %v1744, %v1760
        %v1810 = vcombine.high %v1744, %v1760
        %v1812 = vunpack.c.l.s4 1934713408
        %v1813 = vunpack.c.0.s8 %v1812
        %v1814 = vlaneseq
        %v1815 = vshrl.u32 %v1814, 7
        %v1816 = vsub.s32 %v1813, %v1815
        %v1817 = vrot.slane %v1809, %v1816
        %v1819 = vunpack.c.l.s4 1934713408
        %v1820 = vunpack.c.0.s8 %v1819
        %v1821 = vlaneseq
        %v1822 = vshrl.u32 %v1821, 7
        %v1823 = vsub.s32 %v1820, %v1822
        %v1824 = vrot.slane %v1810, %v1823
        %v1825 = vcombine.low %v1769, %v1801
        %v1826 = vcombine.high %v1769, %v1801
        %v1827 = vcombine.low %v1776, %v1808
        %v1828 = vcombine.high %v1776, %v1808
        %v1829 = vcombine.low %v1785, %v1817
        %v1830 = vcombine.high %v1785, %v1817
        %v1831 = vcombine.low %v1792, %v1824
        %v1832 = vcombine.high %v1792, %v1824
        %v1833 = vcombine.low %v656, %v664
        %v1834 = vcombine.high %v656, %v664
        %v1836 = vunpack.c.l.s4 1983009808
        %v1837 = vunpack.c.0.s8 %v1836
        %v1838 = vlaneseq
        %v1839 = vshrl.u32 %v1838, 7
        %v1840 = vsub.s32 %v1837, %v1839
        %v1841 = vrot.slane %v1833, %v1840
        %v1843 = vunpack.c.l.s4 1983009808
        %v1844 = vunpack.c.0.s8 %v1843
        %v1845 = vlaneseq
        %v1846 = vshrl.u32 %v1845, 7
        %v1847 = vsub.s32 %v1844, %v1846
        %v1848 = vrot.slane %v1834, %v1847
        %v1849 = vcombine.low %v660, %v668
        %v1850 = vcombine.high %v660, %v668
        %v1852 = vunpack.c.l.s4 1983009808
        %v1853 = vunpack.c.0.s8 %v1852
        %v1854 = vlaneseq
        %v1855 = vshrl.u32 %v1854, 7
        %v1856 = vsub.s32 %v1853, %v1855
        %v1857 = vrot.slane %v1849, %v1856
        %v1859 = vunpack.c.l.s4 1983009808
        %v1860 = vunpack.c.0.s8 %v1859
        %v1861 = vlaneseq
        %v1862 = vshrl.u32 %v1861, 7
        %v1863 = vsub.s32 %v1860, %v1862
        %v1864 = vrot.slane %v1850, %v1863
        %v1865 = vcombine.low %v1841, %v1857
        %v1866 = vcombine.high %v1841, %v1857
        %v1868 = vunpack.c.l.s4 1934713408
        %v1869 = vunpack.c.0.s8 %v1868
        %v1870 = vlaneseq
        %v1871 = vshrl.u32 %v1870, 7
        %v1872 = vsub.s32 %v1869, %v1871
        %v1873 = vrot.slane %v1865, %v1872
        %v1875 = vunpack.c.l.s4 1934713408
        %v1876 = vunpack.c.0.s8 %v1875
        %v1877 = vlaneseq
        %v1878 = vshrl.u32 %v1877, 7
        %v1879 = vsub.s32 %v1876, %v1878
        %v1880 = vrot.slane %v1866, %v1879
        %v1881 = vcombine.low %v1848, %v1864
        %v1882 = vcombine.high %v1848, %v1864
        %v1884 = vunpack.c.l.s4 1934713408
        %v1885 = vunpack.c.0.s8 %v1884
        %v1886 = vlaneseq
        %v1887 = vshrl.u32 %v1886, 7
        %v1888 = vsub.s32 %v1885, %v1887
        %v1889 = vrot.slane %v1881, %v1888
        %v1891 = vunpack.c.l.s4 1934713408
        %v1892 = vunpack.c.0.s8 %v1891
        %v1893 = vlaneseq
        %v1894 = vshrl.u32 %v1893, 7
        %v1895 = vsub.s32 %v1892, %v1894
        %v1896 = vrot.slane %v1882, %v1895
        %v1897 = vcombine.high %v1873, 0.0
        %v1898 = vcombine.high %v1880, 0.0
        %v1899 = vcombine.high %v1889, 0.0
        %v1900 = vcombine.high %v1896, 0.0
        %1906 = vrot.lane.b32.xlu0 %v806, 16
        %v1907 = vpop.permute.xlu0 %1906
        %1908 = vrot.lane.b32.xlu0 %v942, 16
        %v1909 = vpop.permute.xlu0 %1908
        %1910 = vrot.lane.b32.xlu0 %v1078, 16
        %v1911 = vpop.permute.xlu0 %1910
        %1912 = vrot.lane.b32.xlu0 %v1214, 16
        %v1913 = vpop.permute.xlu0 %1912
        %1914 = vrot.lane.b32.xlu0 %v1285, 16
        %v1915 = vpop.permute.xlu0 %1914
        %1926 = vrot.lane.b32.xlu0 %v807, 32
        %v1927 = vpop.permute.xlu0 %1926
        %1928 = vrot.lane.b32.xlu0 %v943, 32
        %v1929 = vpop.permute.xlu0 %1928
        %1930 = vrot.lane.b32.xlu0 %v1079, 32
        %v1931 = vpop.permute.xlu0 %1930
        %1932 = vrot.lane.b32.xlu0 %v1215, 32
        %v1933 = vpop.permute.xlu0 %1932
        %1934 = vrot.lane.b32.xlu0 %v1268, 32
        %v1935 = vpop.permute.xlu0 %1934
        %1946 = vrot.lane.b32.xlu0 %v808, 48
        %v1947 = vpop.permute.xlu0 %1946
        %1948 = vrot.lane.b32.xlu0 %v944, 48
        %v1949 = vpop.permute.xlu0 %1948
        %1950 = vrot.lane.b32.xlu0 %v1080, 48
        %v1951 = vpop.permute.xlu0 %1950
        %1952 = vrot.lane.b32.xlu0 %v1216, 48
        %v1953 = vpop.permute.xlu0 %1952
        %1954 = vrot.lane.b32.xlu0 %v1286, 48
        %v1955 = vpop.permute.xlu0 %1954
        %1966 = vrot.lane.b32.xlu0 %v809, 64
        %v1967 = vpop.permute.xlu0 %1966
        %1968 = vrot.lane.b32.xlu0 %v945, 64
        %v1969 = vpop.permute.xlu0 %1968
        %1970 = vrot.lane.b32.xlu0 %v1081, 64
        %v1971 = vpop.permute.xlu0 %1970
        %1972 = vrot.lane.b32.xlu0 %v1217, 64
        %v1973 = vpop.permute.xlu0 %1972
        %1974 = vrot.lane.b32.xlu0 %v1277, 64
        %v1975 = vpop.permute.xlu0 %1974
        %1986 = vrot.lane.b32.xlu0 %v810, 80
        %v1987 = vpop.permute.xlu0 %1986
        %1988 = vrot.lane.b32.xlu0 %v946, 80
        %v1989 = vpop.permute.xlu0 %1988
        %1990 = vrot.lane.b32.xlu0 %v1082, 80
        %v1991 = vpop.permute.xlu0 %1990
        %1992 = vrot.lane.b32.xlu0 %v1218, 80
        %v1993 = vpop.permute.xlu0 %1992
        %1994 = vrot.lane.b32.xlu0 %v1287, 80
        %v1995 = vpop.permute.xlu0 %1994
        %2006 = vrot.lane.b32.xlu0 %v811, 96
        %v2007 = vpop.permute.xlu0 %2006
        %2008 = vrot.lane.b32.xlu0 %v947, 96
        %v2009 = vpop.permute.xlu0 %2008
        %2010 = vrot.lane.b32.xlu0 %v1083, 96
        %v2011 = vpop.permute.xlu0 %2010
        %2012 = vrot.lane.b32.xlu0 %v1219, 96
        %v2013 = vpop.permute.xlu0 %2012
        %2014 = vrot.lane.b32.xlu0 %v1284, 96
        %v2015 = vpop.permute.xlu0 %2014
        %2026 = vrot.lane.b32.xlu0 %v812, 112
        %v2027 = vpop.permute.xlu0 %2026
        %2028 = vrot.lane.b32.xlu0 %v948, 112
        %v2029 = vpop.permute.xlu0 %2028
        %2030 = vrot.lane.b32.xlu0 %v1084, 112
        %v2031 = vpop.permute.xlu0 %2030
        %2032 = vrot.lane.b32.xlu0 %v1220, 112
        %v2033 = vpop.permute.xlu0 %2032
        %2034 = vrot.lane.b32.xlu0 %v1288, 112
        %v2035 = vpop.permute.xlu0 %2034
        %2046 = vrot.lane.b32.xlu0 %v1418, 16
        %v2047 = vpop.permute.xlu0 %2046
        %2048 = vrot.lane.b32.xlu0 %v1554, 16
        %v2049 = vpop.permute.xlu0 %2048
        %2050 = vrot.lane.b32.xlu0 %v1690, 16
        %v2051 = vpop.permute.xlu0 %2050
        %2052 = vrot.lane.b32.xlu0 %v1826, 16
        %v2053 = vpop.permute.xlu0 %2052
        %2054 = vrot.lane.b32.xlu0 %v1897, 16
        %v2055 = vpop.permute.xlu0 %2054
        %2066 = vrot.lane.b32.xlu0 %v1419, 32
        %v2067 = vpop.permute.xlu0 %2066
        %2068 = vrot.lane.b32.xlu0 %v1555, 32
        %v2069 = vpop.permute.xlu0 %2068
        %2070 = vrot.lane.b32.xlu0 %v1691, 32
        %v2071 = vpop.permute.xlu0 %2070
        %2072 = vrot.lane.b32.xlu0 %v1827, 32
        %v2073 = vpop.permute.xlu0 %2072
        %2074 = vrot.lane.b32.xlu0 %v1880, 32
        %v2075 = vpop.permute.xlu0 %2074
        %2086 = vrot.lane.b32.xlu0 %v1420, 48
        %v2087 = vpop.permute.xlu0 %2086
        %2088 = vrot.lane.b32.xlu0 %v1556, 48
        %v2089 = vpop.permute.xlu0 %2088
        %2090 = vrot.lane.b32.xlu0 %v1692, 48
        %v2091 = vpop.permute.xlu0 %2090
        %2092 = vrot.lane.b32.xlu0 %v1828, 48
        %v2093 = vpop.permute.xlu0 %2092
        %2094 = vrot.lane.b32.xlu0 %v1898, 48
        %v2095 = vpop.permute.xlu0 %2094
        %2106 = vrot.lane.b32.xlu0 %v1421, 64
        %v2107 = vpop.permute.xlu0 %2106
        %2108 = vrot.lane.b32.xlu0 %v1557, 64
        %v2109 = vpop.permute.xlu0 %2108
        %2110 = vrot.lane.b32.xlu0 %v1693, 64
        %v2111 = vpop.permute.xlu0 %2110
        %2112 = vrot.lane.b32.xlu0 %v1829, 64
        %v2113 = vpop.permute.xlu0 %2112
        %2114 = vrot.lane.b32.xlu0 %v1889, 64
        %v2115 = vpop.permute.xlu0 %2114
        %2126 = vrot.lane.b32.xlu0 %v1422, 80
        %v2127 = vpop.permute.xlu0 %2126
        %2128 = vrot.lane.b32.xlu0 %v1558, 80
        %v2129 = vpop.permute.xlu0 %2128
        %2130 = vrot.lane.b32.xlu0 %v1694, 80
        %v2131 = vpop.permute.xlu0 %2130
        %2132 = vrot.lane.b32.xlu0 %v1830, 80
        %v2133 = vpop.permute.xlu0 %2132
        %2134 = vrot.lane.b32.xlu0 %v1899, 80
        %v2135 = vpop.permute.xlu0 %2134
        %2146 = vrot.lane.b32.xlu0 %v1423, 96
        %v2147 = vpop.permute.xlu0 %2146
        %2148 = vrot.lane.b32.xlu0 %v1559, 96
        %v2149 = vpop.permute.xlu0 %2148
        %2150 = vrot.lane.b32.xlu0 %v1695, 96
        %v2151 = vpop.permute.xlu0 %2150
        %2152 = vrot.lane.b32.xlu0 %v1831, 96
        %v2153 = vpop.permute.xlu0 %2152
        %2154 = vrot.lane.b32.xlu0 %v1896, 96
        %v2155 = vpop.permute.xlu0 %2154
        %2166 = vrot.lane.b32.xlu0 %v1424, 112
        %v2167 = vpop.permute.xlu0 %2166
        %2168 = vrot.lane.b32.xlu0 %v1560, 112
        %v2169 = vpop.permute.xlu0 %2168
        %2170 = vrot.lane.b32.xlu0 %v1696, 112
        %v2171 = vpop.permute.xlu0 %2170
        %2172 = vrot.lane.b32.xlu0 %v1832, 112
        %v2173 = vpop.permute.xlu0 %2172
        %2174 = vrot.lane.b32.xlu0 %v1900, 112
        %v2175 = vpop.permute.xlu0 %2174
        %vm2181 = vcmask 130048
        %v2182 = vsel %vm2181, %v805, %v1907
        %v2183 = vsel %vm2181, %v941, %v1909
        %v2184 = vsel %vm2181, %v1077, %v1911
        %v2185 = vsel %vm2181, %v1213, %v1913
        %v2186 = vsel %vm2181, %v1261, %v1915
        %vm2187 = vcmask 261120
        %v2188 = vsel %vm2187, %v2182, %v1927
        %v2189 = vsel %vm2187, %v2183, %v1929
        %v2190 = vsel %vm2187, %v2184, %v1931
        %v2191 = vsel %vm2187, %v2185, %v1933
        %v2192 = vsel %vm2187, %v2186, %v1935
        %vm2193 = vcmask 392192
        %v2194 = vsel %vm2193, %v2188, %v1947
        %v2195 = vsel %vm2193, %v2189, %v1949
        %v2196 = vsel %vm2193, %v2190, %v1951
        %v2197 = vsel %vm2193, %v2191, %v1953
        %v2198 = vsel %vm2193, %v2192, %v1955
        %vm2199 = vcmask 523264
        %v2200 = vsel %vm2199, %v2194, %v1967
        %v2201 = vsel %vm2199, %v2195, %v1969
        %v2202 = vsel %vm2199, %v2196, %v1971
        %v2203 = vsel %vm2199, %v2197, %v1973
        %v2204 = vsel %vm2199, %v2198, %v1975
        %vm2205 = vcmask 654336
        %v2206 = vsel %vm2205, %v2200, %v1987
        %v2207 = vsel %vm2205, %v2201, %v1989
        %v2208 = vsel %vm2205, %v2202, %v1991
        %v2209 = vsel %vm2205, %v2203, %v1993
        %v2210 = vsel %vm2205, %v2204, %v1995
        %vm2211 = vcmask 785408
        %v2212 = vsel %vm2211, %v2206, %v2007
        %v2213 = vsel %vm2211, %v2207, %v2009
        %v2214 = vsel %vm2211, %v2208, %v2011
        %v2215 = vsel %vm2211, %v2209, %v2013
        %v2216 = vsel %vm2211, %v2210, %v2015
        %vm2217 = vcmask 916480
        %v2218 = vsel %vm2217, %v2212, %v2027
        %v2219 = vsel %vm2217, %v2213, %v2029
        %v2220 = vsel %vm2217, %v2214, %v2031
        %v2221 = vsel %vm2217, %v2215, %v2033
        %v2222 = vsel %vm2217, %v2216, %v2035
        %v2223 = vsel %vm2181, %v1417, %v2047
        %v2224 = vsel %vm2181, %v1553, %v2049
        %v2225 = vsel %vm2181, %v1689, %v2051
        %v2226 = vsel %vm2181, %v1825, %v2053
        %v2227 = vsel %vm2181, %v1873, %v2055
        %v2228 = vsel %vm2187, %v2223, %v2067
        %v2229 = vsel %vm2187, %v2224, %v2069
        %v2230 = vsel %vm2187, %v2225, %v2071
        %v2231 = vsel %vm2187, %v2226, %v2073
        %v2232 = vsel %vm2187, %v2227, %v2075
        %v2233 = vsel %vm2193, %v2228, %v2087
        %v2234 = vsel %vm2193, %v2229, %v2089
        %v2235 = vsel %vm2193, %v2230, %v2091
        %v2236 = vsel %vm2193, %v2231, %v2093
        %v2237 = vsel %vm2193, %v2232, %v2095
        %v2238 = vsel %vm2199, %v2233, %v2107
        %v2239 = vsel %vm2199, %v2234, %v2109
        %v2240 = vsel %vm2199, %v2235, %v2111
        %v2241 = vsel %vm2199, %v2236, %v2113
        %v2242 = vsel %vm2199, %v2237, %v2115
        %v2243 = vsel %vm2205, %v2238, %v2127
        %v2244 = vsel %vm2205, %v2239, %v2129
        %v2245 = vsel %vm2205, %v2240, %v2131
        %v2246 = vsel %vm2205, %v2241, %v2133
        %v2247 = vsel %vm2205, %v2242, %v2135
        %v2248 = vsel %vm2211, %v2243, %v2147
        %v2249 = vsel %vm2211, %v2244, %v2149
        %v2250 = vsel %vm2211, %v2245, %v2151
        %v2251 = vsel %vm2211, %v2246, %v2153
        %v2252 = vsel %vm2211, %v2247, %v2155
        %v2253 = vsel %vm2217, %v2248, %v2167
        %v2254 = vsel %vm2217, %v2249, %v2169
        %v2255 = vsel %vm2217, %v2250, %v2171
        %v2256 = vsel %vm2217, %v2251, %v2173
        %v2257 = vsel %vm2217, %v2252, %v2175
        %2259 = vset.pattern.permute.xlu0 0
        %2260 = vperm.xlu0 %2259, %v355
        %v2261 = vpop.permute.xlu0 %2260
        %vm2263 = vcmask 293888
        %v2265 = vsel %vm2263, %v354, 0
        %vm2267 = vcmask 1043456
        %v2269 = vsel %vm2267, %v2222, 0
        %v2272 = vsel %vm2267, %v2257, 0
        %2274 = vmatprep.subr.mxu0 %v2253
        %2275 = vmatpush1.msra.mxu0 %v2218
        %2276 = vmatprep.subr.mxu0 %v2254
        %2277 = vmatpush1.msra.mxu0 %v2219
        %2278 = vmatprep.subr.mxu0 %v2255
        %2279 = vmatpush1.msra.mxu0 %v2220
        %2280 = vmatprep.subr.mxu0 %v2256
        %2281 = vmatpush1.msra.mxu0 %v2221
        %2282 = vmatprep.subr.mxu0 %v2272
        %2283 = vmatpush1.msra.mxu0 %v2269
        %2284 = vmatprep.subr.mxu0 0.0
        %2285 = vmatpush1.msra.mxu0 0.0
        %2286 = vmatprep.subr.mxu0 0.0
        %2287 = vmatpush1.msra.mxu0 0.0
        %2288 = vmatprep.subr.mxu0 0.0
        %2289 = vmatpush1.msra.mxu0 0.0
        %2290 = vmatprep.subr.mxu0 0.0
        %2291 = vmatpush1.msra.mxu0 0.0
        %2292 = vmatprep.subr.mxu0 0.0
        %2293 = vmatpush1.msra.mxu0 0.0
        %2294 = vmatprep.subr.mxu0 0.0
        %2295 = vmatpush1.msra.mxu0 0.0
        %2296 = vmatprep.subr.mxu0 0.0
        %2297 = vmatpush1.msra.mxu0 0.0
        %2298 = vmatprep.subr.mxu0 0.0
        %2299 = vmatpush1.msra.mxu0 0.0
        %2300 = vmatprep.subr.mxu0 0.0
        %2301 = vmatpush1.msra.mxu0 0.0
        %2302 = vmatprep.subr.mxu0 0.0
        %2303 = vmatpush1.msra.mxu0 0.0
        %2304 = vmatprep.subr.mxu0 0.0
        %2305 = vmatpush1.msra.mxu0 0.0
        %2306 = vmatprep.subr.mxu0 0.0
        %2307 = vmatpush1.msra.mxu0 0.0
        %2308 = vmatprep.subr.mxu0 0.0
        %2309 = vmatpush1.msra.mxu0 0.0
        %2310 = vmatprep.subr.mxu0 0.0
        %2311 = vmatpush1.msra.mxu0 0.0
        %2312 = vmatprep.subr.mxu0 0.0
        %2313 = vmatpush1.msra.mxu0 0.0
        %2314 = vmatprep.subr.mxu0 0.0
        %2315 = vmatpush1.msra.mxu0 0.0
        %2316 = vmatprep.subr.mxu0 0.0
        %2317 = vmatpush1.msra.mxu0 0.0
        %2318 = vmatprep.subr.mxu0 0.0
        %2319 = vmatpush1.msra.mxu0 0.0
        %2320 = vmatprep.subr.mxu0 0.0
        %2321 = vmatpush1.msra.mxu0 0.0
        %2322 = vmatprep.subr.mxu0 0.0
        %2323 = vmatpush1.msra.mxu0 0.0
        %2324 = vmatprep.subr.mxu0 0.0
        %2325 = vmatpush1.msra.mxu0 0.0
        %2326 = vmatprep.subr.mxu0 0.0
        %2327 = vmatpush1.msra.mxu0 0.0
        %2328 = vmatprep.subr.mxu0 0.0
        %2329 = vmatpush1.msra.mxu0 0.0
        %2330 = vmatprep.subr.mxu0 0.0
        %2331 = vmatpush1.msra.mxu0 0.0
        %2332 = vmatprep.subr.mxu0 0.0
        %2333 = vmatpush1.msra.mxu0 0.0
        %2334 = vmatprep.subr.mxu0 0.0
        %2335 = vmatpush1.msra.mxu0 0.0
        %2336 = vmatprep.subr.mxu0 0.0
        %2337 = vmatpush1.msra.mxu0 0.0
        %2338 = vmatprep.mubr.f32.mxu0 0.0
        %2339 = vmatmul.mubr.f32.gmra.mrb[0].mxu0 %v2265
        %v2340 = vpop.f32.mrb[0].mxu0
        %v2341 = vadd.f32 %v2261, %v2340
        %v2342 = vpop.f32.mrb[0].mxu0
        %v2343 = vadd.f32 %v2261, %v2342
        %2344 = vdwg.mxu0
        %2346 = vrot.lane.b32.xlu0 %v2341, 112
        %v2347 = vpop.permute.xlu0 %2346
        %2349 = vrot.lane.b32.xlu0 %v2341, 96
        %v2350 = vpop.permute.xlu0 %2349
        %2352 = vrot.lane.b32.xlu0 %v2341, 80
        %v2353 = vpop.permute.xlu0 %2352
        %2355 = vrot.lane.b32.xlu0 %v2341, 64
        %v2356 = vpop.permute.xlu0 %2355
        %2358 = vrot.lane.b32.xlu0 %v2341, 48
        %v2359 = vpop.permute.xlu0 %2358
        %2361 = vrot.lane.b32.xlu0 %v2341, 32
        %v2362 = vpop.permute.xlu0 %2361
        %2364 = vrot.lane.b32.xlu0 %v2341, 16
        %v2365 = vpop.permute.xlu0 %2364
        %2368 = vrot.lane.b32.xlu0 %v2343, 112
        %v2369 = vpop.permute.xlu0 %2368
        %2371 = vrot.lane.b32.xlu0 %v2343, 96
        %v2372 = vpop.permute.xlu0 %2371
        %2374 = vrot.lane.b32.xlu0 %v2343, 80
        %v2375 = vpop.permute.xlu0 %2374
        %2377 = vrot.lane.b32.xlu0 %v2343, 64
        %v2378 = vpop.permute.xlu0 %2377
        %2380 = vrot.lane.b32.xlu0 %v2343, 48
        %v2381 = vpop.permute.xlu0 %2380
        %2383 = vrot.lane.b32.xlu0 %v2343, 32
        %v2384 = vpop.permute.xlu0 %2383
        %2386 = vrot.lane.b32.xlu0 %v2343, 16
        %v2387 = vpop.permute.xlu0 %2386
        %v2389 = vcombine.low %v2341, %v2350
        %v2391 = vunpack.c.l.s4 1983009808
        %v2392 = vunpack.c.0.s8 %v2391
        %v2393 = vlaneseq
        %v2394 = vshrl.u32 %v2393, 7
        %v2395 = vsub.s32 %v2392, %v2394
        %v2396 = vrot.slane %v2389, %v2395
        %v2397 = vcombine.low %v2347, %v2353
        %v2399 = vunpack.c.l.s4 1983009808
        %v2400 = vunpack.c.0.s8 %v2399
        %v2401 = vlaneseq
        %v2402 = vshrl.u32 %v2401, 7
        %v2403 = vsub.s32 %v2400, %v2402
        %v2404 = vrot.slane %v2397, %v2403
        %v2405 = vcombine.low %v2356, %v2362
        %v2407 = vunpack.c.l.s4 1983009808
        %v2408 = vunpack.c.0.s8 %v2407
        %v2409 = vlaneseq
        %v2410 = vshrl.u32 %v2409, 7
        %v2411 = vsub.s32 %v2408, %v2410
        %v2412 = vrot.slane %v2405, %v2411
        %v2413 = vcombine.low %v2359, %v2365
        %v2415 = vunpack.c.l.s4 1983009808
        %v2416 = vunpack.c.0.s8 %v2415
        %v2417 = vlaneseq
        %v2418 = vshrl.u32 %v2417, 7
        %v2419 = vsub.s32 %v2416, %v2418
        %v2420 = vrot.slane %v2413, %v2419
        %v2421 = vcombine.low %v2396, %v2404
        %v2423 = vunpack.c.l.s4 1934713408
        %v2424 = vunpack.c.0.s8 %v2423
        %v2425 = vlaneseq
        %v2426 = vshrl.u32 %v2425, 7
        %v2427 = vsub.s32 %v2424, %v2426
        %v2428 = vrot.slane %v2421, %v2427
        %v2429 = vcombine.low %v2412, %v2420
        %v2431 = vunpack.c.l.s4 1934713408
        %v2432 = vunpack.c.0.s8 %v2431
        %v2433 = vlaneseq
        %v2434 = vshrl.u32 %v2433, 7
        %v2435 = vsub.s32 %v2432, %v2434
        %v2436 = vrot.slane %v2429, %v2435
        %v2437 = vcombine.low %v2428, %v2436
        %v2438 = vcombine.high %v2428, %v2436
        %v2439 = vcombine.low %v2343, %v2372
        %v2441 = vunpack.c.l.s4 1983009808
        %v2442 = vunpack.c.0.s8 %v2441
        %v2443 = vlaneseq
        %v2444 = vshrl.u32 %v2443, 7
        %v2445 = vsub.s32 %v2442, %v2444
        %v2446 = vrot.slane %v2439, %v2445
        %v2447 = vcombine.low %v2369, %v2375
        %v2449 = vunpack.c.l.s4 1983009808
        %v2450 = vunpack.c.0.s8 %v2449
        %v2451 = vlaneseq
        %v2452 = vshrl.u32 %v2451, 7
        %v2453 = vsub.s32 %v2450, %v2452
        %v2454 = vrot.slane %v2447, %v2453
        %v2455 = vcombine.low %v2378, %v2384
        %v2457 = vunpack.c.l.s4 1983009808
        %v2458 = vunpack.c.0.s8 %v2457
        %v2459 = vlaneseq
        %v2460 = vshrl.u32 %v2459, 7
        %v2461 = vsub.s32 %v2458, %v2460
        %v2462 = vrot.slane %v2455, %v2461
        %v2463 = vcombine.low %v2381, %v2387
        %v2465 = vunpack.c.l.s4 1983009808
        %v2466 = vunpack.c.0.s8 %v2465
        %v2467 = vlaneseq
        %v2468 = vshrl.u32 %v2467, 7
        %v2469 = vsub.s32 %v2466, %v2468
        %v2470 = vrot.slane %v2463, %v2469
        %v2471 = vcombine.low %v2446, %v2454
        %v2473 = vunpack.c.l.s4 1934713408
        %v2474 = vunpack.c.0.s8 %v2473
        %v2475 = vlaneseq
        %v2476 = vshrl.u32 %v2475, 7
        %v2477 = vsub.s32 %v2474, %v2476
        %v2478 = vrot.slane %v2471, %v2477
        %v2479 = vcombine.low %v2462, %v2470
        %v2481 = vunpack.c.l.s4 1934713408
        %v2482 = vunpack.c.0.s8 %v2481
        %v2483 = vlaneseq
        %v2484 = vshrl.u32 %v2483, 7
        %v2485 = vsub.s32 %v2482, %v2484
        %v2486 = vrot.slane %v2479, %v2485
        %v2487 = vcombine.low %v2478, %v2486
        %v2488 = vcombine.high %v2478, %v2486
        %v2489 = vld [vmem:[%s8] sm:$0xff]
        %v2490 = vld [vmem:[%s8 + $0x8] sm:$0xff]
        %v2492 = vsel %vm2181, %v2437, 0
        %v2495 = vsel %vm2181, %v2487, 0
        %2497 = vmatprep.subr.mxu0 0.0
        %2498 = vmatpush1.msra.mxu0 %v2489
        %2499 = vmatprep.subr.mxu0 0.0
        %2500 = vmatpush1.msra.mxu0 %v2490
        %2501 = vmatprep.subr.mxu0 0.0
        %2502 = vmatpush1.msra.mxu0 0.0
        %2503 = vmatprep.subr.mxu0 0.0
        %2504 = vmatpush1.msra.mxu0 0.0
        %2505 = vmatprep.subr.mxu0 0.0
        %2506 = vmatpush1.msra.mxu0 0.0
        %2507 = vmatprep.subr.mxu0 0.0
        %2508 = vmatpush1.msra.mxu0 0.0
        %2509 = vmatprep.subr.mxu0 0.0
        %2510 = vmatpush1.msra.mxu0 0.0
        %2511 = vmatprep.subr.mxu0 0.0
        %2512 = vmatpush1.msra.mxu0 0.0
        %2513 = vmatprep.subr.mxu0 0.0
        %2514 = vmatpush1.msra.mxu0 0.0
        %2515 = vmatprep.subr.mxu0 0.0
        %2516 = vmatpush1.msra.mxu0 0.0
        %2517 = vmatprep.subr.mxu0 0.0
        %2518 = vmatpush1.msra.mxu0 0.0
        %2519 = vmatprep.subr.mxu0 0.0
        %2520 = vmatpush1.msra.mxu0 0.0
        %2521 = vmatprep.subr.mxu0 0.0
        %2522 = vmatpush1.msra.mxu0 0.0
        %2523 = vmatprep.subr.mxu0 0.0
        %2524 = vmatpush1.msra.mxu0 0.0
        %2525 = vmatprep.subr.mxu0 0.0
        %2526 = vmatpush1.msra.mxu0 0.0
        %2527 = vmatprep.subr.mxu0 0.0
        %2528 = vmatpush1.msra.mxu0 0.0
        %2529 = vmatprep.subr.mxu0 0.0
        %2530 = vmatpush1.msra.mxu0 0.0
        %2531 = vmatprep.subr.mxu0 0.0
        %2532 = vmatpush1.msra.mxu0 0.0
        %2533 = vmatprep.subr.mxu0 0.0
        %2534 = vmatpush1.msra.mxu0 0.0
        %2535 = vmatprep.subr.mxu0 0.0
        %2536 = vmatpush1.msra.mxu0 0.0
        %2537 = vmatprep.subr.mxu0 0.0
        %2538 = vmatpush1.msra.mxu0 0.0
        %2539 = vmatprep.subr.mxu0 0.0
        %2540 = vmatpush1.msra.mxu0 0.0
        %2541 = vmatprep.subr.mxu0 0.0
        %2542 = vmatpush1.msra.mxu0 0.0
        %2543 = vmatprep.subr.mxu0 0.0
        %2544 = vmatpush1.msra.mxu0 0.0
        %2545 = vmatprep.subr.mxu0 0.0
        %2546 = vmatpush1.msra.mxu0 0.0
        %2547 = vmatprep.subr.mxu0 0.0
        %2548 = vmatpush1.msra.mxu0 0.0
        %2549 = vmatprep.subr.mxu0 0.0
        %2550 = vmatpush1.msra.mxu0 0.0
        %2551 = vmatprep.subr.mxu0 0.0
        %2552 = vmatpush1.msra.mxu0 0.0
        %2553 = vmatprep.subr.mxu0 0.0
        %2554 = vmatpush1.msra.mxu0 0.0
        %2555 = vmatprep.subr.mxu0 0.0
        %2556 = vmatpush1.msra.mxu0 0.0
        %2557 = vmatprep.subr.mxu0 0.0
        %2558 = vmatpush1.msra.mxu0 0.0
        %2559 = vmatprep.subr.mxu0 0.0
        %2560 = vmatpush1.msra.mxu0 0.0
        %2561 = vmatprep.mubr.f32.mxu0 0.0
        %2562 = vmatmul.mubr.f32.gmra.mrb[0].mxu0 %v2492
        %v2563 = vpop.f32.mrb[0].mxu0
        %v2564 = vadd.f32 0.0, %v2563
        %v2565 = vpop.f32.mrb[0].mxu0
        %2566 = vmatprep.mubr.f32.mxu0 0.0
        %2567 = vmatmul.mubr.f32.gmra.mrb[0].mxu0 %v2495
        %v2568 = vpop.f32.mrb[0].mxu0
        %v2569 = vadd.f32 0.0, %v2568
        %v2570 = vpop.f32.mrb[0].mxu0
        %2571 = vdwg.mxu0
        %v2573 = vsel %vm2181, %v2438, 0
        %v2576 = vsel %vm2181, %v2488, 0
        %2578 = vmatprep.subr.mxu0 0.0
        %2579 = vmatpush1.msra.mxu0 %v2489
        %2580 = vmatprep.subr.mxu0 0.0
        %2581 = vmatpush1.msra.mxu0 %v2490
        %2582 = vmatprep.subr.mxu0 0.0
        %2583 = vmatpush1.msra.mxu0 0.0
        %2584 = vmatprep.subr.mxu0 0.0
        %2585 = vmatpush1.msra.mxu0 0.0
        %2586 = vmatprep.subr.mxu0 0.0
        %2587 = vmatpush1.msra.mxu0 0.0
        %2588 = vmatprep.subr.mxu0 0.0
        %2589 = vmatpush1.msra.mxu0 0.0
        %2590 = vmatprep.subr.mxu0 0.0
        %2591 = vmatpush1.msra.mxu0 0.0
        %2592 = vmatprep.subr.mxu0 0.0
        %2593 = vmatpush1.msra.mxu0 0.0
        %2594 = vmatprep.subr.mxu0 0.0
        %2595 = vmatpush1.msra.mxu0 0.0
        %2596 = vmatprep.subr.mxu0 0.0
        %2597 = vmatpush1.msra.mxu0 0.0
        %2598 = vmatprep.subr.mxu0 0.0
        %2599 = vmatpush1.msra.mxu0 0.0
        %2600 = vmatprep.subr.mxu0 0.0
        %2601 = vmatpush1.msra.mxu0 0.0
        %2602 = vmatprep.subr.mxu0 0.0
        %2603 = vmatpush1.msra.mxu0 0.0
        %2604 = vmatprep.subr.mxu0 0.0
        %2605 = vmatpush1.msra.mxu0 0.0
        %2606 = vmatprep.subr.mxu0 0.0
        %2607 = vmatpush1.msra.mxu0 0.0
        %2608 = vmatprep.subr.mxu0 0.0
        %2609 = vmatpush1.msra.mxu0 0.0
        %2610 = vmatprep.subr.mxu0 0.0
        %2611 = vmatpush1.msra.mxu0 0.0
        %2612 = vmatprep.subr.mxu0 0.0
        %2613 = vmatpush1.msra.mxu0 0.0
        %2614 = vmatprep.subr.mxu0 0.0
        %2615 = vmatpush1.msra.mxu0 0.0
        %2616 = vmatprep.subr.mxu0 0.0
        %2617 = vmatpush1.msra.mxu0 0.0
        %2618 = vmatprep.subr.mxu0 0.0
        %2619 = vmatpush1.msra.mxu0 0.0
        %2620 = vmatprep.subr.mxu0 0.0
        %2621 = vmatpush1.msra.mxu0 0.0
        %2622 = vmatprep.subr.mxu0 0.0
        %2623 = vmatpush1.msra.mxu0 0.0
        %2624 = vmatprep.subr.mxu0 0.0
        %2625 = vmatpush1.msra.mxu0 0.0
        %2626 = vmatprep.subr.mxu0 0.0
        %2627 = vmatpush1.msra.mxu0 0.0
        %2628 = vmatprep.subr.mxu0 0.0
        %2629 = vmatpush1.msra.mxu0 0.0
        %2630 = vmatprep.subr.mxu0 0.0
        %2631 = vmatpush1.msra.mxu0 0.0
        %2632 = vmatprep.subr.mxu0 0.0
        %2633 = vmatpush1.msra.mxu0 0.0
        %2634 = vmatprep.subr.mxu0 0.0
        %2635 = vmatpush1.msra.mxu0 0.0
        %2636 = vmatprep.subr.mxu0 0.0
        %2637 = vmatpush1.msra.mxu0 0.0
        %2638 = vmatprep.subr.mxu0 0.0
        %2639 = vmatpush1.msra.mxu0 0.0
        %2640 = vmatprep.subr.mxu0 0.0
        %2641 = vmatpush1.msra.mxu0 0.0
        %2642 = vmatprep.mubr.f32.mxu0 0.0
        %2643 = vmatmul.mubr.f32.gmra.mrb[0].mxu0 %v2573
        %v2644 = vpop.f32.mrb[0].mxu0
        %v2645 = vadd.f32 0.0, %v2644
        %v2646 = vpop.f32.mrb[0].mxu0
        %2647 = vmatprep.mubr.f32.mxu0 0.0
        %2648 = vmatmul.mubr.f32.gmra.mrb[0].mxu0 %v2576
        %v2649 = vpop.f32.mrb[0].mxu0
        %v2650 = vadd.f32 0.0, %v2649
        %v2651 = vpop.f32.mrb[0].mxu0
        %2652 = vdwg.mxu0
        %v2653 = vld [vmem:[%s7] sm:$0xff]
        %v2654 = vld [vmem:[%s7 + $0x8] sm:$0xff]
        %v2655 = vld [vmem:[%s7 + $0x10] sm:$0xff]
        %v2656 = vld [vmem:[%s7 + $0x18] sm:$0xff]
        %v2658 = vsel %vm2181, %v2653, 0
        %v2661 = vsel %vm2181, %v2654, 0
        %v2664 = vsel %vm2181, %v2655, 0
        %v2667 = vsel %vm2181, %v2656, 0
        %2669 = vmatprep.subr.mxu0 0.0
        %2670 = vmatpush1.msra.mxu0 %v2564
        %2671 = vmatprep.subr.mxu0 0.0
        %2672 = vmatpush1.msra.mxu0 %v2569
        %2673 = vmatprep.subr.mxu0 0.0
        %2674 = vmatpush1.msra.mxu0 0.0
        %2675 = vmatprep.subr.mxu0 0.0
        %2676 = vmatpush1.msra.mxu0 0.0
        %2677 = vmatprep.subr.mxu0 0.0
        %2678 = vmatpush1.msra.mxu0 0.0
        %2679 = vmatprep.subr.mxu0 0.0
        %2680 = vmatpush1.msra.mxu0 0.0
        %2681 = vmatprep.subr.mxu0 0.0
        %2682 = vmatpush1.msra.mxu0 0.0
        %2683 = vmatprep.subr.mxu0 0.0
        %2684 = vmatpush1.msra.mxu0 0.0
        %2685 = vmatprep.subr.mxu0 0.0
        %2686 = vmatpush1.msra.mxu0 0.0
        %2687 = vmatprep.subr.mxu0 0.0
        %2688 = vmatpush1.msra.mxu0 0.0
        %2689 = vmatprep.subr.mxu0 0.0
        %2690 = vmatpush1.msra.mxu0 0.0
        %2691 = vmatprep.subr.mxu0 0.0
        %2692 = vmatpush1.msra.mxu0 0.0
        %2693 = vmatprep.subr.mxu0 0.0
        %2694 = vmatpush1.msra.mxu0 0.0
        %2695 = vmatprep.subr.mxu0 0.0
        %2696 = vmatpush1.msra.mxu0 0.0
        %2697 = vmatprep.subr.mxu0 0.0
        %2698 = vmatpush1.msra.mxu0 0.0
        %2699 = vmatprep.subr.mxu0 0.0
        %2700 = vmatpush1.msra.mxu0 0.0
        %2701 = vmatprep.subr.mxu0 0.0
        %2702 = vmatpush1.msra.mxu0 0.0
        %2703 = vmatprep.subr.mxu0 0.0
        %2704 = vmatpush1.msra.mxu0 0.0
        %2705 = vmatprep.subr.mxu0 0.0
        %2706 = vmatpush1.msra.mxu0 0.0
        %2707 = vmatprep.subr.mxu0 0.0
        %2708 = vmatpush1.msra.mxu0 0.0
        %2709 = vmatprep.subr.mxu0 0.0
        %2710 = vmatpush1.msra.mxu0 0.0
        %2711 = vmatprep.subr.mxu0 0.0
        %2712 = vmatpush1.msra.mxu0 0.0
        %2713 = vmatprep.subr.mxu0 0.0
        %2714 = vmatpush1.msra.mxu0 0.0
        %2715 = vmatprep.subr.mxu0 0.0
        %2716 = vmatpush1.msra.mxu0 0.0
        %2717 = vmatprep.subr.mxu0 0.0
        %2718 = vmatpush1.msra.mxu0 0.0
        %2719 = vmatprep.subr.mxu0 0.0
        %2720 = vmatpush1.msra.mxu0 0.0
        %2721 = vmatprep.subr.mxu0 0.0
        %2722 = vmatpush1.msra.mxu0 0.0
        %2723 = vmatprep.subr.mxu0 0.0
        %2724 = vmatpush1.msra.mxu0 0.0
        %2725 = vmatprep.subr.mxu0 0.0
        %2726 = vmatpush1.msra.mxu0 0.0
        %2727 = vmatprep.subr.mxu0 0.0
        %2728 = vmatpush1.msra.mxu0 0.0
        %2729 = vmatprep.subr.mxu0 0.0
        %2730 = vmatpush1.msra.mxu0 0.0
        %2731 = vmatprep.subr.mxu0 0.0
        %2732 = vmatpush1.msra.mxu0 0.0
        %2733 = vmatprep.mubr.f32.mxu0 0.0
        %2734 = vmatmul.mubr.f32.gmra.mrb[0].mxu0 %v2658
        %v2735 = vpop.f32.mrb[0].mxu0
        %v2736 = vadd.f32 0.0, %v2735
        %v2737 = vpop.f32.mrb[0].mxu0
        %2738 = vmatprep.mubr.f32.mxu0 0.0
        %2739 = vmatmul.mubr.f32.gmra.mrb[0].mxu0 %v2661
        %v2740 = vpop.f32.mrb[0].mxu0
        %v2741 = vadd.f32 0.0, %v2740
        %v2742 = vpop.f32.mrb[0].mxu0
        %2743 = vmatprep.mubr.f32.mxu0 0.0
        %2744 = vmatmul.mubr.f32.gmra.mrb[0].mxu0 %v2664
        %v2745 = vpop.f32.mrb[0].mxu0
        %v2746 = vadd.f32 0.0, %v2745
        %v2747 = vpop.f32.mrb[0].mxu0
        %2748 = vmatprep.mubr.f32.mxu0 0.0
        %2749 = vmatmul.mubr.f32.gmra.mrb[0].mxu0 %v2667
        %v2750 = vpop.f32.mrb[0].mxu0
        %v2751 = vadd.f32 0.0, %v2750
        %v2752 = vpop.f32.mrb[0].mxu0
        %2753 = vdwg.mxu0
        %2754 = vmatprep.subr.mxu0 0.0
        %2755 = vmatpush1.msra.mxu0 %v2645
        %2756 = vmatprep.subr.mxu0 0.0
        %2757 = vmatpush1.msra.mxu0 %v2650
        %2758 = vmatprep.subr.mxu0 0.0
        %2759 = vmatpush1.msra.mxu0 0.0
        %2760 = vmatprep.subr.mxu0 0.0
        %2761 = vmatpush1.msra.mxu0 0.0
        %2762 = vmatprep.subr.mxu0 0.0
        %2763 = vmatpush1.msra.mxu0 0.0
        %2764 = vmatprep.subr.mxu0 0.0
        %2765 = vmatpush1.msra.mxu0 0.0
        %2766 = vmatprep.subr.mxu0 0.0
        %2767 = vmatpush1.msra.mxu0 0.0
        %2768 = vmatprep.subr.mxu0 0.0
        %2769 = vmatpush1.msra.mxu0 0.0
        %2770 = vmatprep.subr.mxu0 0.0
        %2771 = vmatpush1.msra.mxu0 0.0
        %2772 = vmatprep.subr.mxu0 0.0
        %2773 = vmatpush1.msra.mxu0 0.0
        %2774 = vmatprep.subr.mxu0 0.0
        %2775 = vmatpush1.msra.mxu0 0.0
        %2776 = vmatprep.subr.mxu0 0.0
        %2777 = vmatpush1.msra.mxu0 0.0
        %2778 = vmatprep.subr.mxu0 0.0
        %2779 = vmatpush1.msra.mxu0 0.0
        %2780 = vmatprep.subr.mxu0 0.0
        %2781 = vmatpush1.msra.mxu0 0.0
        %2782 = vmatprep.subr.mxu0 0.0
        %2783 = vmatpush1.msra.mxu0 0.0
        %2784 = vmatprep.subr.mxu0 0.0
        %2785 = vmatpush1.msra.mxu0 0.0
        %2786 = vmatprep.subr.mxu0 0.0
        %2787 = vmatpush1.msra.mxu0 0.0
        %2788 = vmatprep.subr.mxu0 0.0
        %2789 = vmatpush1.msra.mxu0 0.0
        %2790 = vmatprep.subr.mxu0 0.0
        %2791 = vmatpush1.msra.mxu0 0.0
        %2792 = vmatprep.subr.mxu0 0.0
        %2793 = vmatpush1.msra.mxu0 0.0
        %2794 = vmatprep.subr.mxu0 0.0
        %2795 = vmatpush1.msra.mxu0 0.0
        %2796 = vmatprep.subr.mxu0 0.0
        %2797 = vmatpush1.msra.mxu0 0.0
        %2798 = vmatprep.subr.mxu0 0.0
        %2799 = vmatpush1.msra.mxu0 0.0
        %2800 = vmatprep.subr.mxu0 0.0
        %2801 = vmatpush1.msra.mxu0 0.0
        %2802 = vmatprep.subr.mxu0 0.0
        %2803 = vmatpush1.msra.mxu0 0.0
        %2804 = vmatprep.subr.mxu0 0.0
        %2805 = vmatpush1.msra.mxu0 0.0
        %2806 = vmatprep.subr.mxu0 0.0
        %2807 = vmatpush1.msra.mxu0 0.0
        %2808 = vmatprep.subr.mxu0 0.0
        %2809 = vmatpush1.msra.mxu0 0.0
        %2810 = vmatprep.subr.mxu0 0.0
        %2811 = vmatpush1.msra.mxu0 0.0
        %2812 = vmatprep.subr.mxu0 0.0
        %2813 = vmatpush1.msra.mxu0 0.0
        %2814 = vmatprep.subr.mxu0 0.0
        %2815 = vmatpush1.msra.mxu0 0.0
        %2816 = vmatprep.subr.mxu0 0.0
        %2817 = vmatpush1.msra.mxu0 0.0
        %2818 = vmatprep.mubr.f32.mxu0 0.0
        %2819 = vmatmul.mubr.f32.gmra.mrb[0].mxu0 %v2658
        %v2820 = vpop.f32.mrb[0].mxu0
        %v2821 = vadd.f32 0.0, %v2820
        %v2822 = vpop.f32.mrb[0].mxu0
        %2823 = vmatprep.mubr.f32.mxu0 0.0
        %2824 = vmatmul.mubr.f32.gmra.mrb[0].mxu0 %v2661
        %v2825 = vpop.f32.mrb[0].mxu0
        %v2826 = vadd.f32 0.0, %v2825
        %v2827 = vpop.f32.mrb[0].mxu0
        %2828 = vmatprep.mubr.f32.mxu0 0.0
        %2829 = vmatmul.mubr.f32.gmra.mrb[0].mxu0 %v2664
        %v2830 = vpop.f32.mrb[0].mxu0
        %v2831 = vadd.f32 0.0, %v2830
        %v2832 = vpop.f32.mrb[0].mxu0
        %2833 = vmatprep.mubr.f32.mxu0 0.0
        %2834 = vmatmul.mubr.f32.gmra.mrb[0].mxu0 %v2667
        %v2835 = vpop.f32.mrb[0].mxu0
        %v2836 = vadd.f32 0.0, %v2835
        %v2837 = vpop.f32.mrb[0].mxu0
        %2838 = vdwg.mxu0
        %v2839 = vld [vmem:[%s3] sm:$0xff]
        %v2840 = vld [vmem:[%s3 + $0x8] sm:$0xff]
        %v2841 = vld [vmem:[%s3 + $0x10] sm:$0xff]
        %v2842 = vld [vmem:[%s3 + $0x18] sm:$0xff]
        %v2843 = vld [vmem:[%s4] sm:$0xff]
        %v2844 = vld [vmem:[%s4 + $0x8] sm:$0xff]
        %v2845 = vld [vmem:[%s4 + $0x10] sm:$0xff]
        %v2846 = vld [vmem:[%s4 + $0x18] sm:$0xff]
        %v2855 = vrot.slane %v2736, 7
        %v2856 = vrot.slane %v2741, 7
        %v2857 = vsel %vm364, %v2855, %v2856
        %v2858 = vrot.slane %v2746, 7
        %v2859 = vsel %vm364, %v2856, %v2858
        %v2860 = vrot.slane %v2751, 7
        %v2861 = vsel %vm364, %v2858, %v2860
        %v2862 = vrot.slane %v2821, 7
        %v2863 = vrot.slane %v2826, 7
        %v2864 = vsel %vm364, %v2862, %v2863
        %v2865 = vrot.slane %v2831, 7
        %v2866 = vsel %vm364, %v2863, %v2865
        %v2867 = vrot.slane %v2836, 7
        %v2868 = vsel %vm364, %v2865, %v2867
        %v2873 = vsel %vm364, 0.0, %v2855
        %v2874 = vsel %vm364, 0.0, %v2862
        %v2875 = vsel %vm364, %v2860, 0.0
        %v2876 = vsel %vm364, %v2867, 0.0
        %2881 = vrot.lane.b32.xlu0 %v2873, 1
        %v2882 = vpop.permute.xlu0 %2881
        %2883 = vrot.lane.b32.xlu0 %v2857, 1
        %v2884 = vpop.permute.xlu0 %2883
        %2885 = vrot.lane.b32.xlu0 %v2859, 1
        %v2886 = vpop.permute.xlu0 %2885
        %2887 = vrot.lane.b32.xlu0 %v2861, 1
        %v2888 = vpop.permute.xlu0 %2887
        %2889 = vrot.lane.b32.xlu0 %v2875, 1
        %v2890 = vpop.permute.xlu0 %2889
        %2891 = vrot.lane.b32.xlu0 %v2874, 1
        %v2892 = vpop.permute.xlu0 %2891
        %2893 = vrot.lane.b32.xlu0 %v2864, 1
        %v2894 = vpop.permute.xlu0 %2893
        %2895 = vrot.lane.b32.xlu0 %v2866, 1
        %v2896 = vpop.permute.xlu0 %2895
        %2897 = vrot.lane.b32.xlu0 %v2868, 1
        %v2898 = vpop.permute.xlu0 %2897
        %2899 = vrot.lane.b32.xlu0 %v2876, 1
        %v2900 = vpop.permute.xlu0 %2899
        %v2911 = vsel %vm437, 0.0, %v2882
        %v2912 = vsel %vm437, 0.0, %v2884
        %v2913 = vsel %vm437, 0.0, %v2886
        %v2914 = vsel %vm437, 0.0, %v2888
        %v2915 = vsel %vm437, 0.0, %v2890
        %v2916 = vsel %vm437, 0.0, %v2892
        %v2917 = vsel %vm437, 0.0, %v2894
        %v2918 = vsel %vm437, 0.0, %v2896
        %v2919 = vsel %vm437, 0.0, %v2898
        %v2920 = vsel %vm437, 0.0, %v2900
        %vm2921 = vcmask 269312
        %v2922 = vsel %vm2921, %v2911, 0.0
        %v2923 = vsel %vm2921, %v2912, 0.0
        %v2924 = vsel %vm2921, %v2913, 0.0
        %v2925 = vsel %vm2921, %v2914, 0.0
        %v2926 = vsel %vm2921, %v2915, 0.0
        %v2927 = vsel %vm2921, %v2916, 0.0
        %v2928 = vsel %vm2921, %v2917, 0.0
        %v2929 = vsel %vm2921, %v2918, 0.0
        %v2930 = vsel %vm2921, %v2919, 0.0
        %v2931 = vsel %vm2921, %v2920, 0.0
        %2940 = vrot.lane.b32.xlu0 %v2922, 127
        %v2941 = vpop.permute.xlu0 %2940
        %2942 = vrot.lane.b32.xlu0 %v2923, 127
        %v2943 = vpop.permute.xlu0 %2942
        %2944 = vrot.lane.b32.xlu0 %v2924, 127
        %v2945 = vpop.permute.xlu0 %2944
        %2946 = vrot.lane.b32.xlu0 %v2925, 127
        %v2947 = vpop.permute.xlu0 %2946
        %2948 = vrot.lane.b32.xlu0 %v2927, 127
        %v2949 = vpop.permute.xlu0 %2948
        %2950 = vrot.lane.b32.xlu0 %v2928, 127
        %v2951 = vpop.permute.xlu0 %2950
        %2952 = vrot.lane.b32.xlu0 %v2929, 127
        %v2953 = vpop.permute.xlu0 %2952
        %2954 = vrot.lane.b32.xlu0 %v2930, 127
        %v2955 = vpop.permute.xlu0 %2954
        %2964 = vrot.lane.b32.xlu0 %v2922, 126
        %v2965 = vpop.permute.xlu0 %2964
        %2966 = vrot.lane.b32.xlu0 %v2923, 126
        %v2967 = vpop.permute.xlu0 %2966
        %2968 = vrot.lane.b32.xlu0 %v2924, 126
        %v2969 = vpop.permute.xlu0 %2968
        %2970 = vrot.lane.b32.xlu0 %v2925, 126
        %v2971 = vpop.permute.xlu0 %2970
        %2972 = vrot.lane.b32.xlu0 %v2927, 126
        %v2973 = vpop.permute.xlu0 %2972
        %2974 = vrot.lane.b32.xlu0 %v2928, 126
        %v2975 = vpop.permute.xlu0 %2974
        %2976 = vrot.lane.b32.xlu0 %v2929, 126
        %v2977 = vpop.permute.xlu0 %2976
        %2978 = vrot.lane.b32.xlu0 %v2930, 126
        %v2979 = vpop.permute.xlu0 %2978
        %v2990 = vrot.slane %v2922, 1
        %v2991 = vrot.slane %v2923, 1
        %v2992 = vsel %vm523, %v2990, %v2991
        %v2993 = vrot.slane %v2924, 1
        %v2994 = vsel %vm523, %v2991, %v2993
        %v2995 = vrot.slane %v2925, 1
        %v2996 = vsel %vm523, %v2993, %v2995
        %v2997 = vrot.slane %v2926, 1
        %v2998 = vsel %vm523, %v2995, %v2997
        %v2999 = vrot.slane %v2927, 1
        %v3000 = vrot.slane %v2928, 1
        %v3001 = vsel %vm523, %v2999, %v3000
        %v3002 = vrot.slane %v2929, 1
        %v3003 = vsel %vm523, %v3000, %v3002
        %v3004 = vrot.slane %v2930, 1
        %v3005 = vsel %vm523, %v3002, %v3004
        %v3006 = vrot.slane %v2931, 1
        %v3007 = vsel %vm523, %v3004, %v3006
        %3016 = vrot.lane.b32.xlu0 %v2992, 127
        %v3017 = vpop.permute.xlu0 %3016
        %3018 = vrot.lane.b32.xlu0 %v2994, 127
        %v3019 = vpop.permute.xlu0 %3018
        %3020 = vrot.lane.b32.xlu0 %v2996, 127
        %v3021 = vpop.permute.xlu0 %3020
        %3022 = vrot.lane.b32.xlu0 %v2998, 127
        %v3023 = vpop.permute.xlu0 %3022
        %3024 = vrot.lane.b32.xlu0 %v3001, 127
        %v3025 = vpop.permute.xlu0 %3024
        %3026 = vrot.lane.b32.xlu0 %v3003, 127
        %v3027 = vpop.permute.xlu0 %3026
        %3028 = vrot.lane.b32.xlu0 %v3005, 127
        %v3029 = vpop.permute.xlu0 %3028
        %3030 = vrot.lane.b32.xlu0 %v3007, 127
        %v3031 = vpop.permute.xlu0 %3030
        %3040 = vrot.lane.b32.xlu0 %v2992, 126
        %v3041 = vpop.permute.xlu0 %3040
        %3042 = vrot.lane.b32.xlu0 %v2994, 126
        %v3043 = vpop.permute.xlu0 %3042
        %3044 = vrot.lane.b32.xlu0 %v2996, 126
        %v3045 = vpop.permute.xlu0 %3044
        %3046 = vrot.lane.b32.xlu0 %v2998, 126
        %v3047 = vpop.permute.xlu0 %3046
        %3048 = vrot.lane.b32.xlu0 %v3001, 126
        %v3049 = vpop.permute.xlu0 %3048
        %3050 = vrot.lane.b32.xlu0 %v3003, 126
        %v3051 = vpop.permute.xlu0 %3050
        %3052 = vrot.lane.b32.xlu0 %v3005, 126
        %v3053 = vpop.permute.xlu0 %3052
        %3054 = vrot.lane.b32.xlu0 %v3007, 126
        %v3055 = vpop.permute.xlu0 %3054
        %v3064 = vrot.slane %v2922, 2
        %v3065 = vrot.slane %v2923, 2
        %v3066 = vsel %vm600, %v3064, %v3065
        %v3067 = vrot.slane %v2924, 2
        %v3068 = vsel %vm600, %v3065, %v3067
        %v3069 = vrot.slane %v2925, 2
        %v3070 = vsel %vm600, %v3067, %v3069
        %v3071 = vrot.slane %v2926, 2
        %v3072 = vsel %vm600, %v3069, %v3071
        %v3073 = vrot.slane %v2927, 2
        %v3074 = vrot.slane %v2928, 2
        %v3075 = vsel %vm600, %v3073, %v3074
        %v3076 = vrot.slane %v2929, 2
        %v3077 = vsel %vm600, %v3074, %v3076
        %v3078 = vrot.slane %v2930, 2
        %v3079 = vsel %vm600, %v3076, %v3078
        %v3080 = vrot.slane %v2931, 2
        %v3081 = vsel %vm600, %v3078, %v3080
        %3090 = vrot.lane.b32.xlu0 %v3066, 127
        %v3091 = vpop.permute.xlu0 %3090
        %3092 = vrot.lane.b32.xlu0 %v3068, 127
        %v3093 = vpop.permute.xlu0 %3092
        %3094 = vrot.lane.b32.xlu0 %v3070, 127
        %v3095 = vpop.permute.xlu0 %3094
        %3096 = vrot.lane.b32.xlu0 %v3072, 127
        %v3097 = vpop.permute.xlu0 %3096
        %3098 = vrot.lane.b32.xlu0 %v3075, 127
        %v3099 = vpop.permute.xlu0 %3098
        %3100 = vrot.lane.b32.xlu0 %v3077, 127
        %v3101 = vpop.permute.xlu0 %3100
        %3102 = vrot.lane.b32.xlu0 %v3079, 127
        %v3103 = vpop.permute.xlu0 %3102
        %3104 = vrot.lane.b32.xlu0 %v3081, 127
        %v3105 = vpop.permute.xlu0 %3104
        %3114 = vrot.lane.b32.xlu0 %v3066, 126
        %v3115 = vpop.permute.xlu0 %3114
        %3116 = vrot.lane.b32.xlu0 %v3068, 126
        %v3117 = vpop.permute.xlu0 %3116
        %3118 = vrot.lane.b32.xlu0 %v3070, 126
        %v3119 = vpop.permute.xlu0 %3118
        %3120 = vrot.lane.b32.xlu0 %v3072, 126
        %v3121 = vpop.permute.xlu0 %3120
        %3122 = vrot.lane.b32.xlu0 %v3075, 126
        %v3123 = vpop.permute.xlu0 %3122
        %3124 = vrot.lane.b32.xlu0 %v3077, 126
        %v3125 = vpop.permute.xlu0 %3124
        %3126 = vrot.lane.b32.xlu0 %v3079, 126
        %v3127 = vpop.permute.xlu0 %3126
        %3128 = vrot.lane.b32.xlu0 %v3081, 126
        %v3129 = vpop.permute.xlu0 %3128
        %v3138 = vcombine.low %v2922, %v2941
        %v3139 = vcombine.high %v2922, %v2941
        %v3141 = vunpack.c.l.s4 1983009808
        %v3142 = vunpack.c.0.s8 %v3141
        %v3143 = vlaneseq
        %v3144 = vshrl.u32 %v3143, 7
        %v3145 = vsub.s32 %v3142, %v3144
        %v3146 = vrot.slane %v3138, %v3145
        %v3148 = vunpack.c.l.s4 1983009808
        %v3149 = vunpack.c.0.s8 %v3148
        %v3150 = vlaneseq
        %v3151 = vshrl.u32 %v3150, 7
        %v3152 = vsub.s32 %v3149, %v3151
        %v3153 = vrot.slane %v3139, %v3152
        %v3154 = vcombine.low %v2927, %v2949
        %v3155 = vcombine.high %v2927, %v2949
        %v3157 = vunpack.c.l.s4 1983009808
        %v3158 = vunpack.c.0.s8 %v3157
        %v3159 = vlaneseq
        %v3160 = vshrl.u32 %v3159, 7
        %v3161 = vsub.s32 %v3158, %v3160
        %v3162 = vrot.slane %v3154, %v3161
        %v3164 = vunpack.c.l.s4 1983009808
        %v3165 = vunpack.c.0.s8 %v3164
        %v3166 = vlaneseq
        %v3167 = vshrl.u32 %v3166, 7
        %v3168 = vsub.s32 %v3165, %v3167
        %v3169 = vrot.slane %v3155, %v3168
        %v3170 = vcombine.low %v2965, %v2992
        %v3171 = vcombine.high %v2965, %v2992
        %v3173 = vunpack.c.l.s4 1983009808
        %v3174 = vunpack.c.0.s8 %v3173
        %v3175 = vlaneseq
        %v3176 = vshrl.u32 %v3175, 7
        %v3177 = vsub.s32 %v3174, %v3176
        %v3178 = vrot.slane %v3170, %v3177
        %v3180 = vunpack.c.l.s4 1983009808
        %v3181 = vunpack.c.0.s8 %v3180
        %v3182 = vlaneseq
        %v3183 = vshrl.u32 %v3182, 7
        %v3184 = vsub.s32 %v3181, %v3183
        %v3185 = vrot.slane %v3171, %v3184
        %v3186 = vcombine.low %v2973, %v3001
        %v3187 = vcombine.high %v2973, %v3001
        %v3189 = vunpack.c.l.s4 1983009808
        %v3190 = vunpack.c.0.s8 %v3189
        %v3191 = vlaneseq
        %v3192 = vshrl.u32 %v3191, 7
        %v3193 = vsub.s32 %v3190, %v3192
        %v3194 = vrot.slane %v3186, %v3193
        %v3196 = vunpack.c.l.s4 1983009808
        %v3197 = vunpack.c.0.s8 %v3196
        %v3198 = vlaneseq
        %v3199 = vshrl.u32 %v3198, 7
        %v3200 = vsub.s32 %v3197, %v3199
        %v3201 = vrot.slane %v3187, %v3200
        %v3202 = vcombine.low %v3146, %v3162
        %v3203 = vcombine.high %v3146, %v3162
        %v3205 = vunpack.c.l.s4 1934713408
        %v3206 = vunpack.c.0.s8 %v3205
        %v3207 = vlaneseq
        %v3208 = vshrl.u32 %v3207, 7
        %v3209 = vsub.s32 %v3206, %v3208
        %v3210 = vrot.slane %v3202, %v3209
        %v3212 = vunpack.c.l.s4 1934713408
        %v3213 = vunpack.c.0.s8 %v3212
        %v3214 = vlaneseq
        %v3215 = vshrl.u32 %v3214, 7
        %v3216 = vsub.s32 %v3213, %v3215
        %v3217 = vrot.slane %v3203, %v3216
        %v3218 = vcombine.low %v3153, %v3169
        %v3219 = vcombine.high %v3153, %v3169
        %v3221 = vunpack.c.l.s4 1934713408
        %v3222 = vunpack.c.0.s8 %v3221
        %v3223 = vlaneseq
        %v3224 = vshrl.u32 %v3223, 7
        %v3225 = vsub.s32 %v3222, %v3224
        %v3226 = vrot.slane %v3218, %v3225
        %v3228 = vunpack.c.l.s4 1934713408
        %v3229 = vunpack.c.0.s8 %v3228
        %v3230 = vlaneseq
        %v3231 = vshrl.u32 %v3230, 7
        %v3232 = vsub.s32 %v3229, %v3231
        %v3233 = vrot.slane %v3219, %v3232
        %v3234 = vcombine.low %v3178, %v3194
        %v3235 = vcombine.high %v3178, %v3194
        %v3237 = vunpack.c.l.s4 1934713408
        %v3238 = vunpack.c.0.s8 %v3237
        %v3239 = vlaneseq
        %v3240 = vshrl.u32 %v3239, 7
        %v3241 = vsub.s32 %v3238, %v3240
        %v3242 = vrot.slane %v3234, %v3241
        %v3244 = vunpack.c.l.s4 1934713408
        %v3245 = vunpack.c.0.s8 %v3244
        %v3246 = vlaneseq
        %v3247 = vshrl.u32 %v3246, 7
        %v3248 = vsub.s32 %v3245, %v3247
        %v3249 = vrot.slane %v3235, %v3248
        %v3250 = vcombine.low %v3185, %v3201
        %v3251 = vcombine.high %v3185, %v3201
        %v3253 = vunpack.c.l.s4 1934713408
        %v3254 = vunpack.c.0.s8 %v3253
        %v3255 = vlaneseq
        %v3256 = vshrl.u32 %v3255, 7
        %v3257 = vsub.s32 %v3254, %v3256
        %v3258 = vrot.slane %v3250, %v3257
        %v3260 = vunpack.c.l.s4 1934713408
        %v3261 = vunpack.c.0.s8 %v3260
        %v3262 = vlaneseq
        %v3263 = vshrl.u32 %v3262, 7
        %v3264 = vsub.s32 %v3261, %v3263
        %v3265 = vrot.slane %v3251, %v3264
        %v3266 = vcombine.low %v3210, %v3242
        %v3267 = vcombine.high %v3210, %v3242
        %v3268 = vcombine.low %v3217, %v3249
        %v3269 = vcombine.high %v3217, %v3249
        %v3270 = vcombine.low %v3226, %v3258
        %v3271 = vcombine.high %v3226, %v3258
        %v3272 = vcombine.low %v3233, %v3265
        %v3273 = vcombine.high %v3233, %v3265
        %v3274 = vcombine.low %v3017, %v3041
        %v3275 = vcombine.high %v3017, %v3041
        %v3277 = vunpack.c.l.s4 1983009808
        %v3278 = vunpack.c.0.s8 %v3277
        %v3279 = vlaneseq
        %v3280 = vshrl.u32 %v3279, 7
        %v3281 = vsub.s32 %v3278, %v3280
        %v3282 = vrot.slane %v3274, %v3281
        %v3284 = vunpack.c.l.s4 1983009808
        %v3285 = vunpack.c.0.s8 %v3284
        %v3286 = vlaneseq
        %v3287 = vshrl.u32 %v3286, 7
        %v3288 = vsub.s32 %v3285, %v3287
        %v3289 = vrot.slane %v3275, %v3288
        %v3290 = vcombine.low %v3025, %v3049
        %v3291 = vcombine.high %v3025, %v3049
        %v3293 = vunpack.c.l.s4 1983009808
        %v3294 = vunpack.c.0.s8 %v3293
        %v3295 = vlaneseq
        %v3296 = vshrl.u32 %v3295, 7
        %v3297 = vsub.s32 %v3294, %v3296
        %v3298 = vrot.slane %v3290, %v3297
        %v3300 = vunpack.c.l.s4 1983009808
        %v3301 = vunpack.c.0.s8 %v3300
        %v3302 = vlaneseq
        %v3303 = vshrl.u32 %v3302, 7
        %v3304 = vsub.s32 %v3301, %v3303
        %v3305 = vrot.slane %v3291, %v3304
        %v3306 = vcombine.low %v3066, %v3091
        %v3307 = vcombine.high %v3066, %v3091
        %v3309 = vunpack.c.l.s4 1983009808
        %v3310 = vunpack.c.0.s8 %v3309
        %v3311 = vlaneseq
        %v3312 = vshrl.u32 %v3311, 7
        %v3313 = vsub.s32 %v3310, %v3312
        %v3314 = vrot.slane %v3306, %v3313
        %v3316 = vunpack.c.l.s4 1983009808
        %v3317 = vunpack.c.0.s8 %v3316
        %v3318 = vlaneseq
        %v3319 = vshrl.u32 %v3318, 7
        %v3320 = vsub.s32 %v3317, %v3319
        %v3321 = vrot.slane %v3307, %v3320
        %v3322 = vcombine.low %v3075, %v3099
        %v3323 = vcombine.high %v3075, %v3099
        %v3325 = vunpack.c.l.s4 1983009808
        %v3326 = vunpack.c.0.s8 %v3325
        %v3327 = vlaneseq
        %v3328 = vshrl.u32 %v3327, 7
        %v3329 = vsub.s32 %v3326, %v3328
        %v3330 = vrot.slane %v3322, %v3329
        %v3332 = vunpack.c.l.s4 1983009808
        %v3333 = vunpack.c.0.s8 %v3332
        %v3334 = vlaneseq
        %v3335 = vshrl.u32 %v3334, 7
        %v3336 = vsub.s32 %v3333, %v3335
        %v3337 = vrot.slane %v3323, %v3336
        %v3338 = vcombine.low %v3282, %v3298
        %v3339 = vcombine.high %v3282, %v3298
        %v3341 = vunpack.c.l.s4 1934713408
        %v3342 = vunpack.c.0.s8 %v3341
        %v3343 = vlaneseq
        %v3344 = vshrl.u32 %v3343, 7
        %v3345 = vsub.s32 %v3342, %v3344
        %v3346 = vrot.slane %v3338, %v3345
        %v3348 = vunpack.c.l.s4 1934713408
        %v3349 = vunpack.c.0.s8 %v3348
        %v3350 = vlaneseq
        %v3351 = vshrl.u32 %v3350, 7
        %v3352 = vsub.s32 %v3349, %v3351
        %v3353 = vrot.slane %v3339, %v3352
        %v3354 = vcombine.low %v3289, %v3305
        %v3355 = vcombine.high %v3289, %v3305
        %v3357 = vunpack.c.l.s4 1934713408
        %v3358 = vunpack.c.0.s8 %v3357
        %v3359 = vlaneseq
        %v3360 = vshrl.u32 %v3359, 7
        %v3361 = vsub.s32 %v3358, %v3360
        %v3362 = vrot.slane %v3354, %v3361
        %v3364 = vunpack.c.l.s4 1934713408
        %v3365 = vunpack.c.0.s8 %v3364
        %v3366 = vlaneseq
        %v3367 = vshrl.u32 %v3366, 7
        %v3368 = vsub.s32 %v3365, %v3367
        %v3369 = vrot.slane %v3355, %v3368
        %v3370 = vcombine.low %v3314, %v3330
        %v3371 = vcombine.high %v3314, %v3330
        %v3373 = vunpack.c.l.s4 1934713408
        %v3374 = vunpack.c.0.s8 %v3373
        %v3375 = vlaneseq
        %v3376 = vshrl.u32 %v3375, 7
        %v3377 = vsub.s32 %v3374, %v3376
        %v3378 = vrot.slane %v3370, %v3377
        %v3380 = vunpack.c.l.s4 1934713408
        %v3381 = vunpack.c.0.s8 %v3380
        %v3382 = vlaneseq
        %v3383 = vshrl.u32 %v3382, 7
        %v3384 = vsub.s32 %v3381, %v3383
        %v3385 = vrot.slane %v3371, %v3384
        %v3386 = vcombine.low %v3321, %v3337
        %v3387 = vcombine.high %v3321, %v3337
        %v3389 = vunpack.c.l.s4 1934713408
        %v3390 = vunpack.c.0.s8 %v3389
        %v3391 = vlaneseq
        %v3392 = vshrl.u32 %v3391, 7
        %v3393 = vsub.s32 %v3390, %v3392
        %v3394 = vrot.slane %v3386, %v3393
        %v3396 = vunpack.c.l.s4 1934713408
        %v3397 = vunpack.c.0.s8 %v3396
        %v3398 = vlaneseq
        %v3399 = vshrl.u32 %v3398, 7
        %v3400 = vsub.s32 %v3397, %v3399
        %v3401 = vrot.slane %v3387, %v3400
        %v3402 = vcombine.low %v3346, %v3378
        %v3403 = vcombine.high %v3346, %v3378
        %v3404 = vcombine.low %v3353, %v3385
        %v3405 = vcombine.high %v3353, %v3385
        %v3406 = vcombine.low %v3362, %v3394
        %v3407 = vcombine.high %v3362, %v3394
        %v3408 = vcombine.low %v3369, %v3401
        %v3409 = vcombine.high %v3369, %v3401
        %v3410 = vcombine.high %v3115, 0.0
        %v3412 = vunpack.c.l.s4 1983009808
        %v3413 = vunpack.c.0.s8 %v3412
        %v3414 = vlaneseq
        %v3415 = vshrl.u32 %v3414, 7
        %v3416 = vsub.s32 %v3413, %v3415
        %v3417 = vrot.slane %v3115, %v3416
        %v3419 = vunpack.c.l.s4 1983009808
        %v3420 = vunpack.c.0.s8 %v3419
        %v3421 = vlaneseq
        %v3422 = vshrl.u32 %v3421, 7
        %v3423 = vsub.s32 %v3420, %v3422
        %v3424 = vrot.slane %v3410, %v3423
        %v3425 = vcombine.high %v3123, 0.0
        %v3427 = vunpack.c.l.s4 1983009808
        %v3428 = vunpack.c.0.s8 %v3427
        %v3429 = vlaneseq
        %v3430 = vshrl.u32 %v3429, 7
        %v3431 = vsub.s32 %v3428, %v3430
        %v3432 = vrot.slane %v3123, %v3431
        %v3434 = vunpack.c.l.s4 1983009808
        %v3435 = vunpack.c.0.s8 %v3434
        %v3436 = vlaneseq
        %v3437 = vshrl.u32 %v3436, 7
        %v3438 = vsub.s32 %v3435, %v3437
        %v3439 = vrot.slane %v3425, %v3438
        %v3440 = vcombine.low %v3417, %v3432
        %v3441 = vcombine.high %v3417, %v3432
        %v3443 = vunpack.c.l.s4 1934713408
        %v3444 = vunpack.c.0.s8 %v3443
        %v3445 = vlaneseq
        %v3446 = vshrl.u32 %v3445, 7
        %v3447 = vsub.s32 %v3444, %v3446
        %v3448 = vrot.slane %v3440, %v3447
        %v3450 = vunpack.c.l.s4 1934713408
        %v3451 = vunpack.c.0.s8 %v3450
        %v3452 = vlaneseq
        %v3453 = vshrl.u32 %v3452, 7
        %v3454 = vsub.s32 %v3451, %v3453
        %v3455 = vrot.slane %v3441, %v3454
        %v3456 = vcombine.low %v3424, %v3439
        %v3457 = vcombine.high %v3424, %v3439
        %v3459 = vunpack.c.l.s4 1934713408
        %v3460 = vunpack.c.0.s8 %v3459
        %v3461 = vlaneseq
        %v3462 = vshrl.u32 %v3461, 7
        %v3463 = vsub.s32 %v3460, %v3462
        %v3464 = vrot.slane %v3456, %v3463
        %v3466 = vunpack.c.l.s4 1934713408
        %v3467 = vunpack.c.0.s8 %v3466
        %v3468 = vlaneseq
        %v3469 = vshrl.u32 %v3468, 7
        %v3470 = vsub.s32 %v3467, %v3469
        %v3471 = vrot.slane %v3457, %v3470
        %v3472 = vcombine.high %v3448, 0.0
        %v3473 = vcombine.high %v3455, 0.0
        %v3474 = vcombine.high %v3464, 0.0
        %v3475 = vcombine.high %v3471, 0.0
        %v3476 = vcombine.low %v2923, %v2943
        %v3477 = vcombine.high %v2923, %v2943
        %v3479 = vunpack.c.l.s4 1983009808
        %v3480 = vunpack.c.0.s8 %v3479
        %v3481 = vlaneseq
        %v3482 = vshrl.u32 %v3481, 7
        %v3483 = vsub.s32 %v3480, %v3482
        %v3484 = vrot.slane %v3476, %v3483
        %v3486 = vunpack.c.l.s4 1983009808
        %v3487 = vunpack.c.0.s8 %v3486
        %v3488 = vlaneseq
        %v3489 = vshrl.u32 %v3488, 7
        %v3490 = vsub.s32 %v3487, %v3489
        %v3491 = vrot.slane %v3477, %v3490
        %v3492 = vcombine.low %v2928, %v2951
        %v3493 = vcombine.high %v2928, %v2951
        %v3495 = vunpack.c.l.s4 1983009808
        %v3496 = vunpack.c.0.s8 %v3495
        %v3497 = vlaneseq
        %v3498 = vshrl.u32 %v3497, 7
        %v3499 = vsub.s32 %v3496, %v3498
        %v3500 = vrot.slane %v3492, %v3499
        %v3502 = vunpack.c.l.s4 1983009808
        %v3503 = vunpack.c.0.s8 %v3502
        %v3504 = vlaneseq
        %v3505 = vshrl.u32 %v3504, 7
        %v3506 = vsub.s32 %v3503, %v3505
        %v3507 = vrot.slane %v3493, %v3506
        %v3508 = vcombine.low %v2967, %v2994
        %v3509 = vcombine.high %v2967, %v2994
        %v3511 = vunpack.c.l.s4 1983009808
        %v3512 = vunpack.c.0.s8 %v3511
        %v3513 = vlaneseq
        %v3514 = vshrl.u32 %v3513, 7
        %v3515 = vsub.s32 %v3512, %v3514
        %v3516 = vrot.slane %v3508, %v3515
        %v3518 = vunpack.c.l.s4 1983009808
        %v3519 = vunpack.c.0.s8 %v3518
        %v3520 = vlaneseq
        %v3521 = vshrl.u32 %v3520, 7
        %v3522 = vsub.s32 %v3519, %v3521
        %v3523 = vrot.slane %v3509, %v3522
        %v3524 = vcombine.low %v2975, %v3003
        %v3525 = vcombine.high %v2975, %v3003
        %v3527 = vunpack.c.l.s4 1983009808
        %v3528 = vunpack.c.0.s8 %v3527
        %v3529 = vlaneseq
        %v3530 = vshrl.u32 %v3529, 7
        %v3531 = vsub.s32 %v3528, %v3530
        %v3532 = vrot.slane %v3524, %v3531
        %v3534 = vunpack.c.l.s4 1983009808
        %v3535 = vunpack.c.0.s8 %v3534
        %v3536 = vlaneseq
        %v3537 = vshrl.u32 %v3536, 7
        %v3538 = vsub.s32 %v3535, %v3537
        %v3539 = vrot.slane %v3525, %v3538
        %v3540 = vcombine.low %v3484, %v3500
        %v3541 = vcombine.high %v3484, %v3500
        %v3543 = vunpack.c.l.s4 1934713408
        %v3544 = vunpack.c.0.s8 %v3543
        %v3545 = vlaneseq
        %v3546 = vshrl.u32 %v3545, 7
        %v3547 = vsub.s32 %v3544, %v3546
        %v3548 = vrot.slane %v3540, %v3547
        %v3550 = vunpack.c.l.s4 1934713408
        %v3551 = vunpack.c.0.s8 %v3550
        %v3552 = vlaneseq
        %v3553 = vshrl.u32 %v3552, 7
        %v3554 = vsub.s32 %v3551, %v3553
        %v3555 = vrot.slane %v3541, %v3554
        %v3556 = vcombine.low %v3491, %v3507
        %v3557 = vcombine.high %v3491, %v3507
        %v3559 = vunpack.c.l.s4 1934713408
        %v3560 = vunpack.c.0.s8 %v3559
        %v3561 = vlaneseq
        %v3562 = vshrl.u32 %v3561, 7
        %v3563 = vsub.s32 %v3560, %v3562
        %v3564 = vrot.slane %v3556, %v3563
        %v3566 = vunpack.c.l.s4 1934713408
        %v3567 = vunpack.c.0.s8 %v3566
        %v3568 = vlaneseq
        %v3569 = vshrl.u32 %v3568, 7
        %v3570 = vsub.s32 %v3567, %v3569
        %v3571 = vrot.slane %v3557, %v3570
        %v3572 = vcombine.low %v3516, %v3532
        %v3573 = vcombine.high %v3516, %v3532
        %v3575 = vunpack.c.l.s4 1934713408
        %v3576 = vunpack.c.0.s8 %v3575
        %v3577 = vlaneseq
        %v3578 = vshrl.u32 %v3577, 7
        %v3579 = vsub.s32 %v3576, %v3578
        %v3580 = vrot.slane %v3572, %v3579
        %v3582 = vunpack.c.l.s4 1934713408
        %v3583 = vunpack.c.0.s8 %v3582
        %v3584 = vlaneseq
        %v3585 = vshrl.u32 %v3584, 7
        %v3586 = vsub.s32 %v3583, %v3585
        %v3587 = vrot.slane %v3573, %v3586
        %v3588 = vcombine.low %v3523, %v3539
        %v3589 = vcombine.high %v3523, %v3539
        %v3591 = vunpack.c.l.s4 1934713408
        %v3592 = vunpack.c.0.s8 %v3591
        %v3593 = vlaneseq
        %v3594 = vshrl.u32 %v3593, 7
        %v3595 = vsub.s32 %v3592, %v3594
        %v3596 = vrot.slane %v3588, %v3595
        %v3598 = vunpack.c.l.s4 1934713408
        %v3599 = vunpack.c.0.s8 %v3598
        %v3600 = vlaneseq
        %v3601 = vshrl.u32 %v3600, 7
        %v3602 = vsub.s32 %v3599, %v3601
        %v3603 = vrot.slane %v3589, %v3602
        %v3604 = vcombine.low %v3548, %v3580
        %v3605 = vcombine.high %v3548, %v3580
        %v3606 = vcombine.low %v3555, %v3587
        %v3607 = vcombine.high %v3555, %v3587
        %v3608 = vcombine.low %v3564, %v3596
        %v3609 = vcombine.high %v3564, %v3596
        %v3610 = vcombine.low %v3571, %v3603
        %v3611 = vcombine.high %v3571, %v3603
        %v3612 = vcombine.low %v3019, %v3043
        %v3613 = vcombine.high %v3019, %v3043
        %v3615 = vunpack.c.l.s4 1983009808
        %v3616 = vunpack.c.0.s8 %v3615
        %v3617 = vlaneseq
        %v3618 = vshrl.u32 %v3617, 7
        %v3619 = vsub.s32 %v3616, %v3618
        %v3620 = vrot.slane %v3612, %v3619
        %v3622 = vunpack.c.l.s4 1983009808
        %v3623 = vunpack.c.0.s8 %v3622
        %v3624 = vlaneseq
        %v3625 = vshrl.u32 %v3624, 7
        %v3626 = vsub.s32 %v3623, %v3625
        %v3627 = vrot.slane %v3613, %v3626
        %v3628 = vcombine.low %v3027, %v3051
        %v3629 = vcombine.high %v3027, %v3051
        %v3631 = vunpack.c.l.s4 1983009808
        %v3632 = vunpack.c.0.s8 %v3631
        %v3633 = vlaneseq
        %v3634 = vshrl.u32 %v3633, 7
        %v3635 = vsub.s32 %v3632, %v3634
        %v3636 = vrot.slane %v3628, %v3635
        %v3638 = vunpack.c.l.s4 1983009808
        %v3639 = vunpack.c.0.s8 %v3638
        %v3640 = vlaneseq
        %v3641 = vshrl.u32 %v3640, 7
        %v3642 = vsub.s32 %v3639, %v3641
        %v3643 = vrot.slane %v3629, %v3642
        %v3644 = vcombine.low %v3068, %v3093
        %v3645 = vcombine.high %v3068, %v3093
        %v3647 = vunpack.c.l.s4 1983009808
        %v3648 = vunpack.c.0.s8 %v3647
        %v3649 = vlaneseq
        %v3650 = vshrl.u32 %v3649, 7
        %v3651 = vsub.s32 %v3648, %v3650
        %v3652 = vrot.slane %v3644, %v3651
        %v3654 = vunpack.c.l.s4 1983009808
        %v3655 = vunpack.c.0.s8 %v3654
        %v3656 = vlaneseq
        %v3657 = vshrl.u32 %v3656, 7
        %v3658 = vsub.s32 %v3655, %v3657
        %v3659 = vrot.slane %v3645, %v3658
        %v3660 = vcombine.low %v3077, %v3101
        %v3661 = vcombine.high %v3077, %v3101
        %v3663 = vunpack.c.l.s4 1983009808
        %v3664 = vunpack.c.0.s8 %v3663
        %v3665 = vlaneseq
        %v3666 = vshrl.u32 %v3665, 7
        %v3667 = vsub.s32 %v3664, %v3666
        %v3668 = vrot.slane %v3660, %v3667
        %v3670 = vunpack.c.l.s4 1983009808
        %v3671 = vunpack.c.0.s8 %v3670
        %v3672 = vlaneseq
        %v3673 = vshrl.u32 %v3672, 7
        %v3674 = vsub.s32 %v3671, %v3673
        %v3675 = vrot.slane %v3661, %v3674
        %v3676 = vcombine.low %v3620, %v3636
        %v3677 = vcombine.high %v3620, %v3636
        %v3679 = vunpack.c.l.s4 1934713408
        %v3680 = vunpack.c.0.s8 %v3679
        %v3681 = vlaneseq
        %v3682 = vshrl.u32 %v3681, 7
        %v3683 = vsub.s32 %v3680, %v3682
        %v3684 = vrot.slane %v3676, %v3683
        %v3686 = vunpack.c.l.s4 1934713408
        %v3687 = vunpack.c.0.s8 %v3686
        %v3688 = vlaneseq
        %v3689 = vshrl.u32 %v3688, 7
        %v3690 = vsub.s32 %v3687, %v3689
        %v3691 = vrot.slane %v3677, %v3690
        %v3692 = vcombine.low %v3627, %v3643
        %v3693 = vcombine.high %v3627, %v3643
        %v3695 = vunpack.c.l.s4 1934713408
        %v3696 = vunpack.c.0.s8 %v3695
        %v3697 = vlaneseq
        %v3698 = vshrl.u32 %v3697, 7
        %v3699 = vsub.s32 %v3696, %v3698
        %v3700 = vrot.slane %v3692, %v3699
        %v3702 = vunpack.c.l.s4 1934713408
        %v3703 = vunpack.c.0.s8 %v3702
        %v3704 = vlaneseq
        %v3705 = vshrl.u32 %v3704, 7
        %v3706 = vsub.s32 %v3703, %v3705
        %v3707 = vrot.slane %v3693, %v3706
        %v3708 = vcombine.low %v3652, %v3668
        %v3709 = vcombine.high %v3652, %v3668
        %v3711 = vunpack.c.l.s4 1934713408
        %v3712 = vunpack.c.0.s8 %v3711
        %v3713 = vlaneseq
        %v3714 = vshrl.u32 %v3713, 7
        %v3715 = vsub.s32 %v3712, %v3714
        %v3716 = vrot.slane %v3708, %v3715
        %v3718 = vunpack.c.l.s4 1934713408
        %v3719 = vunpack.c.0.s8 %v3718
        %v3720 = vlaneseq
        %v3721 = vshrl.u32 %v3720, 7
        %v3722 = vsub.s32 %v3719, %v3721
        %v3723 = vrot.slane %v3709, %v3722
        %v3724 = vcombine.low %v3659, %v3675
        %v3725 = vcombine.high %v3659, %v3675
        %v3727 = vunpack.c.l.s4 1934713408
        %v3728 = vunpack.c.0.s8 %v3727
        %v3729 = vlaneseq
        %v3730 = vshrl.u32 %v3729, 7
        %v3731 = vsub.s32 %v3728, %v3730
        %v3732 = vrot.slane %v3724, %v3731
        %v3734 = vunpack.c.l.s4 1934713408
        %v3735 = vunpack.c.0.s8 %v3734
        %v3736 = vlaneseq
        %v3737 = vshrl.u32 %v3736, 7
        %v3738 = vsub.s32 %v3735, %v3737
        %v3739 = vrot.slane %v3725, %v3738
        %v3740 = vcombine.low %v3684, %v3716
        %v3741 = vcombine.high %v3684, %v3716
        %v3742 = vcombine.low %v3691, %v3723
        %v3743 = vcombine.high %v3691, %v3723
        %v3744 = vcombine.low %v3700, %v3732
        %v3745 = vcombine.high %v3700, %v3732
        %v3746 = vcombine.low %v3707, %v3739
        %v3747 = vcombine.high %v3707, %v3739
        %v3748 = vcombine.high %v3117, 0.0
        %v3750 = vunpack.c.l.s4 1983009808
        %v3751 = vunpack.c.0.s8 %v3750
        %v3752 = vlaneseq
        %v3753 = vshrl.u32 %v3752, 7
        %v3754 = vsub.s32 %v3751, %v3753
        %v3755 = vrot.slane %v3117, %v3754
        %v3757 = vunpack.c.l.s4 1983009808
        %v3758 = vunpack.c.0.s8 %v3757
        %v3759 = vlaneseq
        %v3760 = vshrl.u32 %v3759, 7
        %v3761 = vsub.s32 %v3758, %v3760
        %v3762 = vrot.slane %v3748, %v3761
        %v3763 = vcombine.high %v3125, 0.0
        %v3765 = vunpack.c.l.s4 1983009808
        %v3766 = vunpack.c.0.s8 %v3765
        %v3767 = vlaneseq
        %v3768 = vshrl.u32 %v3767, 7
        %v3769 = vsub.s32 %v3766, %v3768
        %v3770 = vrot.slane %v3125, %v3769
        %v3772 = vunpack.c.l.s4 1983009808
        %v3773 = vunpack.c.0.s8 %v3772
        %v3774 = vlaneseq
        %v3775 = vshrl.u32 %v3774, 7
        %v3776 = vsub.s32 %v3773, %v3775
        %v3777 = vrot.slane %v3763, %v3776
        %v3778 = vcombine.low %v3755, %v3770
        %v3779 = vcombine.high %v3755, %v3770
        %v3781 = vunpack.c.l.s4 1934713408
        %v3782 = vunpack.c.0.s8 %v3781
        %v3783 = vlaneseq
        %v3784 = vshrl.u32 %v3783, 7
        %v3785 = vsub.s32 %v3782, %v3784
        %v3786 = vrot.slane %v3778, %v3785
        %v3788 = vunpack.c.l.s4 1934713408
        %v3789 = vunpack.c.0.s8 %v3788
        %v3790 = vlaneseq
        %v3791 = vshrl.u32 %v3790, 7
        %v3792 = vsub.s32 %v3789, %v3791
        %v3793 = vrot.slane %v3779, %v3792
        %v3794 = vcombine.low %v3762, %v3777
        %v3795 = vcombine.high %v3762, %v3777
        %v3797 = vunpack.c.l.s4 1934713408
        %v3798 = vunpack.c.0.s8 %v3797
        %v3799 = vlaneseq
        %v3800 = vshrl.u32 %v3799, 7
        %v3801 = vsub.s32 %v3798, %v3800
        %v3802 = vrot.slane %v3794, %v3801
        %v3804 = vunpack.c.l.s4 1934713408
        %v3805 = vunpack.c.0.s8 %v3804
        %v3806 = vlaneseq
        %v3807 = vshrl.u32 %v3806, 7
        %v3808 = vsub.s32 %v3805, %v3807
        %v3809 = vrot.slane %v3795, %v3808
        %v3810 = vcombine.high %v3786, 0.0
        %v3811 = vcombine.high %v3793, 0.0
        %v3812 = vcombine.high %v3802, 0.0
        %v3813 = vcombine.high %v3809, 0.0
        %v3814 = vcombine.low %v2924, %v2945
        %v3815 = vcombine.high %v2924, %v2945
        %v3817 = vunpack.c.l.s4 1983009808
        %v3818 = vunpack.c.0.s8 %v3817
        %v3819 = vlaneseq
        %v3820 = vshrl.u32 %v3819, 7
        %v3821 = vsub.s32 %v3818, %v3820
        %v3822 = vrot.slane %v3814, %v3821
        %v3824 = vunpack.c.l.s4 1983009808
        %v3825 = vunpack.c.0.s8 %v3824
        %v3826 = vlaneseq
        %v3827 = vshrl.u32 %v3826, 7
        %v3828 = vsub.s32 %v3825, %v3827
        %v3829 = vrot.slane %v3815, %v3828
        %v3830 = vcombine.low %v2929, %v2953
        %v3831 = vcombine.high %v2929, %v2953
        %v3833 = vunpack.c.l.s4 1983009808
        %v3834 = vunpack.c.0.s8 %v3833
        %v3835 = vlaneseq
        %v3836 = vshrl.u32 %v3835, 7
        %v3837 = vsub.s32 %v3834, %v3836
        %v3838 = vrot.slane %v3830, %v3837
        %v3840 = vunpack.c.l.s4 1983009808
        %v3841 = vunpack.c.0.s8 %v3840
        %v3842 = vlaneseq
        %v3843 = vshrl.u32 %v3842, 7
        %v3844 = vsub.s32 %v3841, %v3843
        %v3845 = vrot.slane %v3831, %v3844
        %v3846 = vcombine.low %v2969, %v2996
        %v3847 = vcombine.high %v2969, %v2996
        %v3849 = vunpack.c.l.s4 1983009808
        %v3850 = vunpack.c.0.s8 %v3849
        %v3851 = vlaneseq
        %v3852 = vshrl.u32 %v3851, 7
        %v3853 = vsub.s32 %v3850, %v3852
        %v3854 = vrot.slane %v3846, %v3853
        %v3856 = vunpack.c.l.s4 1983009808
        %v3857 = vunpack.c.0.s8 %v3856
        %v3858 = vlaneseq
        %v3859 = vshrl.u32 %v3858, 7
        %v3860 = vsub.s32 %v3857, %v3859
        %v3861 = vrot.slane %v3847, %v3860
        %v3862 = vcombine.low %v2977, %v3005
        %v3863 = vcombine.high %v2977, %v3005
        %v3865 = vunpack.c.l.s4 1983009808
        %v3866 = vunpack.c.0.s8 %v3865
        %v3867 = vlaneseq
        %v3868 = vshrl.u32 %v3867, 7
        %v3869 = vsub.s32 %v3866, %v3868
        %v3870 = vrot.slane %v3862, %v3869
        %v3872 = vunpack.c.l.s4 1983009808
        %v3873 = vunpack.c.0.s8 %v3872
        %v3874 = vlaneseq
        %v3875 = vshrl.u32 %v3874, 7
        %v3876 = vsub.s32 %v3873, %v3875
        %v3877 = vrot.slane %v3863, %v3876
        %v3878 = vcombine.low %v3822, %v3838
        %v3879 = vcombine.high %v3822, %v3838
        %v3881 = vunpack.c.l.s4 1934713408
        %v3882 = vunpack.c.0.s8 %v3881
        %v3883 = vlaneseq
        %v3884 = vshrl.u32 %v3883, 7
        %v3885 = vsub.s32 %v3882, %v3884
        %v3886 = vrot.slane %v3878, %v3885
        %v3888 = vunpack.c.l.s4 1934713408
        %v3889 = vunpack.c.0.s8 %v3888
        %v3890 = vlaneseq
        %v3891 = vshrl.u32 %v3890, 7
        %v3892 = vsub.s32 %v3889, %v3891
        %v3893 = vrot.slane %v3879, %v3892
        %v3894 = vcombine.low %v3829, %v3845
        %v3895 = vcombine.high %v3829, %v3845
        %v3897 = vunpack.c.l.s4 1934713408
        %v3898 = vunpack.c.0.s8 %v3897
        %v3899 = vlaneseq
        %v3900 = vshrl.u32 %v3899, 7
        %v3901 = vsub.s32 %v3898, %v3900
        %v3902 = vrot.slane %v3894, %v3901
        %v3904 = vunpack.c.l.s4 1934713408
        %v3905 = vunpack.c.0.s8 %v3904
        %v3906 = vlaneseq
        %v3907 = vshrl.u32 %v3906, 7
        %v3908 = vsub.s32 %v3905, %v3907
        %v3909 = vrot.slane %v3895, %v3908
        %v3910 = vcombine.low %v3854, %v3870
        %v3911 = vcombine.high %v3854, %v3870
        %v3913 = vunpack.c.l.s4 1934713408
        %v3914 = vunpack.c.0.s8 %v3913
        %v3915 = vlaneseq
        %v3916 = vshrl.u32 %v3915, 7
        %v3917 = vsub.s32 %v3914, %v3916
        %v3918 = vrot.slane %v3910, %v3917
        %v3920 = vunpack.c.l.s4 1934713408
        %v3921 = vunpack.c.0.s8 %v3920
        %v3922 = vlaneseq
        %v3923 = vshrl.u32 %v3922, 7
        %v3924 = vsub.s32 %v3921, %v3923
        %v3925 = vrot.slane %v3911, %v3924
        %v3926 = vcombine.low %v3861, %v3877
        %v3927 = vcombine.high %v3861, %v3877
        %v3929 = vunpack.c.l.s4 1934713408
        %v3930 = vunpack.c.0.s8 %v3929
        %v3931 = vlaneseq
        %v3932 = vshrl.u32 %v3931, 7
        %v3933 = vsub.s32 %v3930, %v3932
        %v3934 = vrot.slane %v3926, %v3933
        %v3936 = vunpack.c.l.s4 1934713408
        %v3937 = vunpack.c.0.s8 %v3936
        %v3938 = vlaneseq
        %v3939 = vshrl.u32 %v3938, 7
        %v3940 = vsub.s32 %v3937, %v3939
        %v3941 = vrot.slane %v3927, %v3940
        %v3942 = vcombine.low %v3886, %v3918
        %v3943 = vcombine.high %v3886, %v3918
        %v3944 = vcombine.low %v3893, %v3925
        %v3945 = vcombine.high %v3893, %v3925
        %v3946 = vcombine.low %v3902, %v3934
        %v3947 = vcombine.high %v3902, %v3934
        %v3948 = vcombine.low %v3909, %v3941
        %v3949 = vcombine.high %v3909, %v3941
        %v3950 = vcombine.low %v3021, %v3045
        %v3951 = vcombine.high %v3021, %v3045
        %v3953 = vunpack.c.l.s4 1983009808
        %v3954 = vunpack.c.0.s8 %v3953
        %v3955 = vlaneseq
        %v3956 = vshrl.u32 %v3955, 7
        %v3957 = vsub.s32 %v3954, %v3956
        %v3958 = vrot.slane %v3950, %v3957
        %v3960 = vunpack.c.l.s4 1983009808
        %v3961 = vunpack.c.0.s8 %v3960
        %v3962 = vlaneseq
        %v3963 = vshrl.u32 %v3962, 7
        %v3964 = vsub.s32 %v3961, %v3963
        %v3965 = vrot.slane %v3951, %v3964
        %v3966 = vcombine.low %v3029, %v3053
        %v3967 = vcombine.high %v3029, %v3053
        %v3969 = vunpack.c.l.s4 1983009808
        %v3970 = vunpack.c.0.s8 %v3969
        %v3971 = vlaneseq
        %v3972 = vshrl.u32 %v3971, 7
        %v3973 = vsub.s32 %v3970, %v3972
        %v3974 = vrot.slane %v3966, %v3973
        %v3976 = vunpack.c.l.s4 1983009808
        %v3977 = vunpack.c.0.s8 %v3976
        %v3978 = vlaneseq
        %v3979 = vshrl.u32 %v3978, 7
        %v3980 = vsub.s32 %v3977, %v3979
        %v3981 = vrot.slane %v3967, %v3980
        %v3982 = vcombine.low %v3070, %v3095
        %v3983 = vcombine.high %v3070, %v3095
        %v3985 = vunpack.c.l.s4 1983009808
        %v3986 = vunpack.c.0.s8 %v3985
        %v3987 = vlaneseq
        %v3988 = vshrl.u32 %v3987, 7
        %v3989 = vsub.s32 %v3986, %v3988
        %v3990 = vrot.slane %v3982, %v3989
        %v3992 = vunpack.c.l.s4 1983009808
        %v3993 = vunpack.c.0.s8 %v3992
        %v3994 = vlaneseq
        %v3995 = vshrl.u32 %v3994, 7
        %v3996 = vsub.s32 %v3993, %v3995
        %v3997 = vrot.slane %v3983, %v3996
        %v3998 = vcombine.low %v3079, %v3103
        %v3999 = vcombine.high %v3079, %v3103
        %v4001 = vunpack.c.l.s4 1983009808
        %v4002 = vunpack.c.0.s8 %v4001
        %v4003 = vlaneseq
        %v4004 = vshrl.u32 %v4003, 7
        %v4005 = vsub.s32 %v4002, %v4004
        %v4006 = vrot.slane %v3998, %v4005
        %v4008 = vunpack.c.l.s4 1983009808
        %v4009 = vunpack.c.0.s8 %v4008
        %v4010 = vlaneseq
        %v4011 = vshrl.u32 %v4010, 7
        %v4012 = vsub.s32 %v4009, %v4011
        %v4013 = vrot.slane %v3999, %v4012
        %v4014 = vcombine.low %v3958, %v3974
        %v4015 = vcombine.high %v3958, %v3974
        %v4017 = vunpack.c.l.s4 1934713408
        %v4018 = vunpack.c.0.s8 %v4017
        %v4019 = vlaneseq
        %v4020 = vshrl.u32 %v4019, 7
        %v4021 = vsub.s32 %v4018, %v4020
        %v4022 = vrot.slane %v4014, %v4021
        %v4024 = vunpack.c.l.s4 1934713408
        %v4025 = vunpack.c.0.s8 %v4024
        %v4026 = vlaneseq
        %v4027 = vshrl.u32 %v4026, 7
        %v4028 = vsub.s32 %v4025, %v4027
        %v4029 = vrot.slane %v4015, %v4028
        %v4030 = vcombine.low %v3965, %v3981
        %v4031 = vcombine.high %v3965, %v3981
        %v4033 = vunpack.c.l.s4 1934713408
        %v4034 = vunpack.c.0.s8 %v4033
        %v4035 = vlaneseq
        %v4036 = vshrl.u32 %v4035, 7
        %v4037 = vsub.s32 %v4034, %v4036
        %v4038 = vrot.slane %v4030, %v4037
        %v4040 = vunpack.c.l.s4 1934713408
        %v4041 = vunpack.c.0.s8 %v4040
        %v4042 = vlaneseq
        %v4043 = vshrl.u32 %v4042, 7
        %v4044 = vsub.s32 %v4041, %v4043
        %v4045 = vrot.slane %v4031, %v4044
        %v4046 = vcombine.low %v3990, %v4006
        %v4047 = vcombine.high %v3990, %v4006
        %v4049 = vunpack.c.l.s4 1934713408
        %v4050 = vunpack.c.0.s8 %v4049
        %v4051 = vlaneseq
        %v4052 = vshrl.u32 %v4051, 7
        %v4053 = vsub.s32 %v4050, %v4052
        %v4054 = vrot.slane %v4046, %v4053
        %v4056 = vunpack.c.l.s4 1934713408
        %v4057 = vunpack.c.0.s8 %v4056
        %v4058 = vlaneseq
        %v4059 = vshrl.u32 %v4058, 7
        %v4060 = vsub.s32 %v4057, %v4059
        %v4061 = vrot.slane %v4047, %v4060
        %v4062 = vcombine.low %v3997, %v4013
        %v4063 = vcombine.high %v3997, %v4013
        %v4065 = vunpack.c.l.s4 1934713408
        %v4066 = vunpack.c.0.s8 %v4065
        %v4067 = vlaneseq
        %v4068 = vshrl.u32 %v4067, 7
        %v4069 = vsub.s32 %v4066, %v4068
        %v4070 = vrot.slane %v4062, %v4069
        %v4072 = vunpack.c.l.s4 1934713408
        %v4073 = vunpack.c.0.s8 %v4072
        %v4074 = vlaneseq
        %v4075 = vshrl.u32 %v4074, 7
        %v4076 = vsub.s32 %v4073, %v4075
        %v4077 = vrot.slane %v4063, %v4076
        %v4078 = vcombine.low %v4022, %v4054
        %v4079 = vcombine.high %v4022, %v4054
        %v4080 = vcombine.low %v4029, %v4061
        %v4081 = vcombine.high %v4029, %v4061
        %v4082 = vcombine.low %v4038, %v4070
        %v4083 = vcombine.high %v4038, %v4070
        %v4084 = vcombine.low %v4045, %v4077
        %v4085 = vcombine.high %v4045, %v4077
        %v4086 = vcombine.high %v3119, 0.0
        %v4088 = vunpack.c.l.s4 1983009808
        %v4089 = vunpack.c.0.s8 %v4088
        %v4090 = vlaneseq
        %v4091 = vshrl.u32 %v4090, 7
        %v4092 = vsub.s32 %v4089, %v4091
        %v4093 = vrot.slane %v3119, %v4092
        %v4095 = vunpack.c.l.s4 1983009808
        %v4096 = vunpack.c.0.s8 %v4095
        %v4097 = vlaneseq
        %v4098 = vshrl.u32 %v4097, 7
        %v4099 = vsub.s32 %v4096, %v4098
        %v4100 = vrot.slane %v4086, %v4099
        %v4101 = vcombine.high %v3127, 0.0
        %v4103 = vunpack.c.l.s4 1983009808
        %v4104 = vunpack.c.0.s8 %v4103
        %v4105 = vlaneseq
        %v4106 = vshrl.u32 %v4105, 7
        %v4107 = vsub.s32 %v4104, %v4106
        %v4108 = vrot.slane %v3127, %v4107
        %v4110 = vunpack.c.l.s4 1983009808
        %v4111 = vunpack.c.0.s8 %v4110
        %v4112 = vlaneseq
        %v4113 = vshrl.u32 %v4112, 7
        %v4114 = vsub.s32 %v4111, %v4113
        %v4115 = vrot.slane %v4101, %v4114
        %v4116 = vcombine.low %v4093, %v4108
        %v4117 = vcombine.high %v4093, %v4108
        %v4119 = vunpack.c.l.s4 1934713408
        %v4120 = vunpack.c.0.s8 %v4119
        %v4121 = vlaneseq
        %v4122 = vshrl.u32 %v4121, 7
        %v4123 = vsub.s32 %v4120, %v4122
        %v4124 = vrot.slane %v4116, %v4123
        %v4126 = vunpack.c.l.s4 1934713408
        %v4127 = vunpack.c.0.s8 %v4126
        %v4128 = vlaneseq
        %v4129 = vshrl.u32 %v4128, 7
        %v4130 = vsub.s32 %v4127, %v4129
        %v4131 = vrot.slane %v4117, %v4130
        %v4132 = vcombine.low %v4100, %v4115
        %v4133 = vcombine.high %v4100, %v4115
        %v4135 = vunpack.c.l.s4 1934713408
        %v4136 = vunpack.c.0.s8 %v4135
        %v4137 = vlaneseq
        %v4138 = vshrl.u32 %v4137, 7
        %v4139 = vsub.s32 %v4136, %v4138
        %v4140 = vrot.slane %v4132, %v4139
        %v4142 = vunpack.c.l.s4 1934713408
        %v4143 = vunpack.c.0.s8 %v4142
        %v4144 = vlaneseq
        %v4145 = vshrl.u32 %v4144, 7
        %v4146 = vsub.s32 %v4143, %v4145
        %v4147 = vrot.slane %v4133, %v4146
        %v4148 = vcombine.high %v4124, 0.0
        %v4149 = vcombine.high %v4131, 0.0
        %v4150 = vcombine.high %v4140, 0.0
        %v4151 = vcombine.high %v4147, 0.0
        %v4152 = vcombine.low %v2925, %v2947
        %v4153 = vcombine.high %v2925, %v2947
        %v4155 = vunpack.c.l.s4 1983009808
        %v4156 = vunpack.c.0.s8 %v4155
        %v4157 = vlaneseq
        %v4158 = vshrl.u32 %v4157, 7
        %v4159 = vsub.s32 %v4156, %v4158
        %v4160 = vrot.slane %v4152, %v4159
        %v4162 = vunpack.c.l.s4 1983009808
        %v4163 = vunpack.c.0.s8 %v4162
        %v4164 = vlaneseq
        %v4165 = vshrl.u32 %v4164, 7
        %v4166 = vsub.s32 %v4163, %v4165
        %v4167 = vrot.slane %v4153, %v4166
        %v4168 = vcombine.low %v2930, %v2955
        %v4169 = vcombine.high %v2930, %v2955
        %v4171 = vunpack.c.l.s4 1983009808
        %v4172 = vunpack.c.0.s8 %v4171
        %v4173 = vlaneseq
        %v4174 = vshrl.u32 %v4173, 7
        %v4175 = vsub.s32 %v4172, %v4174
        %v4176 = vrot.slane %v4168, %v4175
        %v4178 = vunpack.c.l.s4 1983009808
        %v4179 = vunpack.c.0.s8 %v4178
        %v4180 = vlaneseq
        %v4181 = vshrl.u32 %v4180, 7
        %v4182 = vsub.s32 %v4179, %v4181
        %v4183 = vrot.slane %v4169, %v4182
        %v4184 = vcombine.low %v2971, %v2998
        %v4185 = vcombine.high %v2971, %v2998
        %v4187 = vunpack.c.l.s4 1983009808
        %v4188 = vunpack.c.0.s8 %v4187
        %v4189 = vlaneseq
        %v4190 = vshrl.u32 %v4189, 7
        %v4191 = vsub.s32 %v4188, %v4190
        %v4192 = vrot.slane %v4184, %v4191
        %v4194 = vunpack.c.l.s4 1983009808
        %v4195 = vunpack.c.0.s8 %v4194
        %v4196 = vlaneseq
        %v4197 = vshrl.u32 %v4196, 7
        %v4198 = vsub.s32 %v4195, %v4197
        %v4199 = vrot.slane %v4185, %v4198
        %v4200 = vcombine.low %v2979, %v3007
        %v4201 = vcombine.high %v2979, %v3007
        %v4203 = vunpack.c.l.s4 1983009808
        %v4204 = vunpack.c.0.s8 %v4203
        %v4205 = vlaneseq
        %v4206 = vshrl.u32 %v4205, 7
        %v4207 = vsub.s32 %v4204, %v4206
        %v4208 = vrot.slane %v4200, %v4207
        %v4210 = vunpack.c.l.s4 1983009808
        %v4211 = vunpack.c.0.s8 %v4210
        %v4212 = vlaneseq
        %v4213 = vshrl.u32 %v4212, 7
        %v4214 = vsub.s32 %v4211, %v4213
        %v4215 = vrot.slane %v4201, %v4214
        %v4216 = vcombine.low %v4160, %v4176
        %v4217 = vcombine.high %v4160, %v4176
        %v4219 = vunpack.c.l.s4 1934713408
        %v4220 = vunpack.c.0.s8 %v4219
        %v4221 = vlaneseq
        %v4222 = vshrl.u32 %v4221, 7
        %v4223 = vsub.s32 %v4220, %v4222
        %v4224 = vrot.slane %v4216, %v4223
        %v4226 = vunpack.c.l.s4 1934713408
        %v4227 = vunpack.c.0.s8 %v4226
        %v4228 = vlaneseq
        %v4229 = vshrl.u32 %v4228, 7
        %v4230 = vsub.s32 %v4227, %v4229
        %v4231 = vrot.slane %v4217, %v4230
        %v4232 = vcombine.low %v4167, %v4183
        %v4233 = vcombine.high %v4167, %v4183
        %v4235 = vunpack.c.l.s4 1934713408
        %v4236 = vunpack.c.0.s8 %v4235
        %v4237 = vlaneseq
        %v4238 = vshrl.u32 %v4237, 7
        %v4239 = vsub.s32 %v4236, %v4238
        %v4240 = vrot.slane %v4232, %v4239
        %v4242 = vunpack.c.l.s4 1934713408
        %v4243 = vunpack.c.0.s8 %v4242
        %v4244 = vlaneseq
        %v4245 = vshrl.u32 %v4244, 7
        %v4246 = vsub.s32 %v4243, %v4245
        %v4247 = vrot.slane %v4233, %v4246
        %v4248 = vcombine.low %v4192, %v4208
        %v4249 = vcombine.high %v4192, %v4208
        %v4251 = vunpack.c.l.s4 1934713408
        %v4252 = vunpack.c.0.s8 %v4251
        %v4253 = vlaneseq
        %v4254 = vshrl.u32 %v4253, 7
        %v4255 = vsub.s32 %v4252, %v4254
        %v4256 = vrot.slane %v4248, %v4255
        %v4258 = vunpack.c.l.s4 1934713408
        %v4259 = vunpack.c.0.s8 %v4258
        %v4260 = vlaneseq
        %v4261 = vshrl.u32 %v4260, 7
        %v4262 = vsub.s32 %v4259, %v4261
        %v4263 = vrot.slane %v4249, %v4262
        %v4264 = vcombine.low %v4199, %v4215
        %v4265 = vcombine.high %v4199, %v4215
        %v4267 = vunpack.c.l.s4 1934713408
        %v4268 = vunpack.c.0.s8 %v4267
        %v4269 = vlaneseq
        %v4270 = vshrl.u32 %v4269, 7
        %v4271 = vsub.s32 %v4268, %v4270
        %v4272 = vrot.slane %v4264, %v4271
        %v4274 = vunpack.c.l.s4 1934713408
        %v4275 = vunpack.c.0.s8 %v4274
        %v4276 = vlaneseq
        %v4277 = vshrl.u32 %v4276, 7
        %v4278 = vsub.s32 %v4275, %v4277
        %v4279 = vrot.slane %v4265, %v4278
        %v4280 = vcombine.low %v4224, %v4256
        %v4281 = vcombine.high %v4224, %v4256
        %v4282 = vcombine.low %v4231, %v4263
        %v4283 = vcombine.high %v4231, %v4263
        %v4284 = vcombine.low %v4240, %v4272
        %v4285 = vcombine.high %v4240, %v4272
        %v4286 = vcombine.low %v4247, %v4279
        %v4287 = vcombine.high %v4247, %v4279
        %v4288 = vcombine.low %v3023, %v3047
        %v4289 = vcombine.high %v3023, %v3047
        %v4291 = vunpack.c.l.s4 1983009808
        %v4292 = vunpack.c.0.s8 %v4291
        %v4293 = vlaneseq
        %v4294 = vshrl.u32 %v4293, 7
        %v4295 = vsub.s32 %v4292, %v4294
        %v4296 = vrot.slane %v4288, %v4295
        %v4298 = vunpack.c.l.s4 1983009808
        %v4299 = vunpack.c.0.s8 %v4298
        %v4300 = vlaneseq
        %v4301 = vshrl.u32 %v4300, 7
        %v4302 = vsub.s32 %v4299, %v4301
        %v4303 = vrot.slane %v4289, %v4302
        %v4304 = vcombine.low %v3031, %v3055
        %v4305 = vcombine.high %v3031, %v3055
        %v4307 = vunpack.c.l.s4 1983009808
        %v4308 = vunpack.c.0.s8 %v4307
        %v4309 = vlaneseq
        %v4310 = vshrl.u32 %v4309, 7
        %v4311 = vsub.s32 %v4308, %v4310
        %v4312 = vrot.slane %v4304, %v4311
        %v4314 = vunpack.c.l.s4 1983009808
        %v4315 = vunpack.c.0.s8 %v4314
        %v4316 = vlaneseq
        %v4317 = vshrl.u32 %v4316, 7
        %v4318 = vsub.s32 %v4315, %v4317
        %v4319 = vrot.slane %v4305, %v4318
        %v4320 = vcombine.low %v3072, %v3097
        %v4321 = vcombine.high %v3072, %v3097
        %v4323 = vunpack.c.l.s4 1983009808
        %v4324 = vunpack.c.0.s8 %v4323
        %v4325 = vlaneseq
        %v4326 = vshrl.u32 %v4325, 7
        %v4327 = vsub.s32 %v4324, %v4326
        %v4328 = vrot.slane %v4320, %v4327
        %v4330 = vunpack.c.l.s4 1983009808
        %v4331 = vunpack.c.0.s8 %v4330
        %v4332 = vlaneseq
        %v4333 = vshrl.u32 %v4332, 7
        %v4334 = vsub.s32 %v4331, %v4333
        %v4335 = vrot.slane %v4321, %v4334
        %v4336 = vcombine.low %v3081, %v3105
        %v4337 = vcombine.high %v3081, %v3105
        %v4339 = vunpack.c.l.s4 1983009808
        %v4340 = vunpack.c.0.s8 %v4339
        %v4341 = vlaneseq
        %v4342 = vshrl.u32 %v4341, 7
        %v4343 = vsub.s32 %v4340, %v4342
        %v4344 = vrot.slane %v4336, %v4343
        %v4346 = vunpack.c.l.s4 1983009808
        %v4347 = vunpack.c.0.s8 %v4346
        %v4348 = vlaneseq
        %v4349 = vshrl.u32 %v4348, 7
        %v4350 = vsub.s32 %v4347, %v4349
        %v4351 = vrot.slane %v4337, %v4350
        %v4352 = vcombine.low %v4296, %v4312
        %v4353 = vcombine.high %v4296, %v4312
        %v4355 = vunpack.c.l.s4 1934713408
        %v4356 = vunpack.c.0.s8 %v4355
        %v4357 = vlaneseq
        %v4358 = vshrl.u32 %v4357, 7
        %v4359 = vsub.s32 %v4356, %v4358
        %v4360 = vrot.slane %v4352, %v4359
        %v4362 = vunpack.c.l.s4 1934713408
        %v4363 = vunpack.c.0.s8 %v4362
        %v4364 = vlaneseq
        %v4365 = vshrl.u32 %v4364, 7
        %v4366 = vsub.s32 %v4363, %v4365
        %v4367 = vrot.slane %v4353, %v4366
        %v4368 = vcombine.low %v4303, %v4319
        %v4369 = vcombine.high %v4303, %v4319
        %v4371 = vunpack.c.l.s4 1934713408
        %v4372 = vunpack.c.0.s8 %v4371
        %v4373 = vlaneseq
        %v4374 = vshrl.u32 %v4373, 7
        %v4375 = vsub.s32 %v4372, %v4374
        %v4376 = vrot.slane %v4368, %v4375
        %v4378 = vunpack.c.l.s4 1934713408
        %v4379 = vunpack.c.0.s8 %v4378
        %v4380 = vlaneseq
        %v4381 = vshrl.u32 %v4380, 7
        %v4382 = vsub.s32 %v4379, %v4381
        %v4383 = vrot.slane %v4369, %v4382
        %v4384 = vcombine.low %v4328, %v4344
        %v4385 = vcombine.high %v4328, %v4344
        %v4387 = vunpack.c.l.s4 1934713408
        %v4388 = vunpack.c.0.s8 %v4387
        %v4389 = vlaneseq
        %v4390 = vshrl.u32 %v4389, 7
        %v4391 = vsub.s32 %v4388, %v4390
        %v4392 = vrot.slane %v4384, %v4391
        %v4394 = vunpack.c.l.s4 1934713408
        %v4395 = vunpack.c.0.s8 %v4394
        %v4396 = vlaneseq
        %v4397 = vshrl.u32 %v4396, 7
        %v4398 = vsub.s32 %v4395, %v4397
        %v4399 = vrot.slane %v4385, %v4398
        %v4400 = vcombine.low %v4335, %v4351
        %v4401 = vcombine.high %v4335, %v4351
        %v4403 = vunpack.c.l.s4 1934713408
        %v4404 = vunpack.c.0.s8 %v4403
        %v4405 = vlaneseq
        %v4406 = vshrl.u32 %v4405, 7
        %v4407 = vsub.s32 %v4404, %v4406
        %v4408 = vrot.slane %v4400, %v4407
        %v4410 = vunpack.c.l.s4 1934713408
        %v4411 = vunpack.c.0.s8 %v4410
        %v4412 = vlaneseq
        %v4413 = vshrl.u32 %v4412, 7
        %v4414 = vsub.s32 %v4411, %v4413
        %v4415 = vrot.slane %v4401, %v4414
        %v4416 = vcombine.low %v4360, %v4392
        %v4417 = vcombine.high %v4360, %v4392
        %v4418 = vcombine.low %v4367, %v4399
        %v4419 = vcombine.high %v4367, %v4399
        %v4420 = vcombine.low %v4376, %v4408
        %v4421 = vcombine.high %v4376, %v4408
        %v4422 = vcombine.low %v4383, %v4415
        %v4423 = vcombine.high %v4383, %v4415
        %v4424 = vcombine.high %v3121, 0.0
        %v4426 = vunpack.c.l.s4 1983009808
        %v4427 = vunpack.c.0.s8 %v4426
        %v4428 = vlaneseq
        %v4429 = vshrl.u32 %v4428, 7
        %v4430 = vsub.s32 %v4427, %v4429
        %v4431 = vrot.slane %v3121, %v4430
        %v4433 = vunpack.c.l.s4 1983009808
        %v4434 = vunpack.c.0.s8 %v4433
        %v4435 = vlaneseq
        %v4436 = vshrl.u32 %v4435, 7
        %v4437 = vsub.s32 %v4434, %v4436
        %v4438 = vrot.slane %v4424, %v4437
        %v4439 = vcombine.high %v3129, 0.0
        %v4441 = vunpack.c.l.s4 1983009808
        %v4442 = vunpack.c.0.s8 %v4441
        %v4443 = vlaneseq
        %v4444 = vshrl.u32 %v4443, 7
        %v4445 = vsub.s32 %v4442, %v4444
        %v4446 = vrot.slane %v3129, %v4445
        %v4448 = vunpack.c.l.s4 1983009808
        %v4449 = vunpack.c.0.s8 %v4448
        %v4450 = vlaneseq
        %v4451 = vshrl.u32 %v4450, 7
        %v4452 = vsub.s32 %v4449, %v4451
        %v4453 = vrot.slane %v4439, %v4452
        %v4454 = vcombine.low %v4431, %v4446
        %v4455 = vcombine.high %v4431, %v4446
        %v4457 = vunpack.c.l.s4 1934713408
        %v4458 = vunpack.c.0.s8 %v4457
        %v4459 = vlaneseq
        %v4460 = vshrl.u32 %v4459, 7
        %v4461 = vsub.s32 %v4458, %v4460
        %v4462 = vrot.slane %v4454, %v4461
        %v4464 = vunpack.c.l.s4 1934713408
        %v4465 = vunpack.c.0.s8 %v4464
        %v4466 = vlaneseq
        %v4467 = vshrl.u32 %v4466, 7
        %v4468 = vsub.s32 %v4465, %v4467
        %v4469 = vrot.slane %v4455, %v4468
        %v4470 = vcombine.low %v4438, %v4453
        %v4471 = vcombine.high %v4438, %v4453
        %v4473 = vunpack.c.l.s4 1934713408
        %v4474 = vunpack.c.0.s8 %v4473
        %v4475 = vlaneseq
        %v4476 = vshrl.u32 %v4475, 7
        %v4477 = vsub.s32 %v4474, %v4476
        %v4478 = vrot.slane %v4470, %v4477
        %v4480 = vunpack.c.l.s4 1934713408
        %v4481 = vunpack.c.0.s8 %v4480
        %v4482 = vlaneseq
        %v4483 = vshrl.u32 %v4482, 7
        %v4484 = vsub.s32 %v4481, %v4483
        %v4485 = vrot.slane %v4471, %v4484
        %v4486 = vcombine.high %v4462, 0.0
        %v4487 = vcombine.high %v4469, 0.0
        %v4488 = vcombine.high %v4478, 0.0
        %v4489 = vcombine.high %v4485, 0.0
        %4493 = vrot.lane.b32.xlu0 %v3267, 32
        %v4494 = vpop.permute.xlu0 %4493
        %4495 = vrot.lane.b32.xlu0 %v3403, 32
        %v4496 = vpop.permute.xlu0 %4495
        %4497 = vrot.lane.b32.xlu0 %v3472, 32
        %v4498 = vpop.permute.xlu0 %4497
        %4505 = vrot.lane.b32.xlu0 %v3268, 64
        %v4506 = vpop.permute.xlu0 %4505
        %4507 = vrot.lane.b32.xlu0 %v3404, 64
        %v4508 = vpop.permute.xlu0 %4507
        %4509 = vrot.lane.b32.xlu0 %v3455, 64
        %v4510 = vpop.permute.xlu0 %4509
        %4517 = vrot.lane.b32.xlu0 %v3269, 96
        %v4518 = vpop.permute.xlu0 %4517
        %4519 = vrot.lane.b32.xlu0 %v3405, 96
        %v4520 = vpop.permute.xlu0 %4519
        %4521 = vrot.lane.b32.xlu0 %v3473, 96
        %v4522 = vpop.permute.xlu0 %4521
        %4529 = vrot.lane.b32.xlu0 %v3271, 32
        %v4530 = vpop.permute.xlu0 %4529
        %4531 = vrot.lane.b32.xlu0 %v3407, 32
        %v4532 = vpop.permute.xlu0 %4531
        %4533 = vrot.lane.b32.xlu0 %v3474, 32
        %v4534 = vpop.permute.xlu0 %4533
        %4541 = vrot.lane.b32.xlu0 %v3272, 64
        %v4542 = vpop.permute.xlu0 %4541
        %4543 = vrot.lane.b32.xlu0 %v3408, 64
        %v4544 = vpop.permute.xlu0 %4543
        %4545 = vrot.lane.b32.xlu0 %v3471, 64
        %v4546 = vpop.permute.xlu0 %4545
        %4553 = vrot.lane.b32.xlu0 %v3273, 96
        %v4554 = vpop.permute.xlu0 %4553
        %4555 = vrot.lane.b32.xlu0 %v3409, 96
        %v4556 = vpop.permute.xlu0 %4555
        %4557 = vrot.lane.b32.xlu0 %v3475, 96
        %v4558 = vpop.permute.xlu0 %4557
        %4565 = vrot.lane.b32.xlu0 %v3605, 32
        %v4566 = vpop.permute.xlu0 %4565
        %4567 = vrot.lane.b32.xlu0 %v3741, 32
        %v4568 = vpop.permute.xlu0 %4567
        %4569 = vrot.lane.b32.xlu0 %v3810, 32
        %v4570 = vpop.permute.xlu0 %4569
        %4577 = vrot.lane.b32.xlu0 %v3606, 64
        %v4578 = vpop.permute.xlu0 %4577
        %4579 = vrot.lane.b32.xlu0 %v3742, 64
        %v4580 = vpop.permute.xlu0 %4579
        %4581 = vrot.lane.b32.xlu0 %v3793, 64
        %v4582 = vpop.permute.xlu0 %4581
        %4589 = vrot.lane.b32.xlu0 %v3607, 96
        %v4590 = vpop.permute.xlu0 %4589
        %4591 = vrot.lane.b32.xlu0 %v3743, 96
        %v4592 = vpop.permute.xlu0 %4591
        %4593 = vrot.lane.b32.xlu0 %v3811, 96
        %v4594 = vpop.permute.xlu0 %4593
        %4601 = vrot.lane.b32.xlu0 %v3609, 32
        %v4602 = vpop.permute.xlu0 %4601
        %4603 = vrot.lane.b32.xlu0 %v3745, 32
        %v4604 = vpop.permute.xlu0 %4603
        %4605 = vrot.lane.b32.xlu0 %v3812, 32
        %v4606 = vpop.permute.xlu0 %4605
        %4613 = vrot.lane.b32.xlu0 %v3610, 64
        %v4614 = vpop.permute.xlu0 %4613
        %4615 = vrot.lane.b32.xlu0 %v3746, 64
        %v4616 = vpop.permute.xlu0 %4615
        %4617 = vrot.lane.b32.xlu0 %v3809, 64
        %v4618 = vpop.permute.xlu0 %4617
        %4625 = vrot.lane.b32.xlu0 %v3611, 96
        %v4626 = vpop.permute.xlu0 %4625
        %4627 = vrot.lane.b32.xlu0 %v3747, 96
        %v4628 = vpop.permute.xlu0 %4627
        %4629 = vrot.lane.b32.xlu0 %v3813, 96
        %v4630 = vpop.permute.xlu0 %4629
        %4637 = vrot.lane.b32.xlu0 %v3943, 32
        %v4638 = vpop.permute.xlu0 %4637
        %4639 = vrot.lane.b32.xlu0 %v4079, 32
        %v4640 = vpop.permute.xlu0 %4639
        %4641 = vrot.lane.b32.xlu0 %v4148, 32
        %v4642 = vpop.permute.xlu0 %4641
        %4649 = vrot.lane.b32.xlu0 %v3944, 64
        %v4650 = vpop.permute.xlu0 %4649
        %4651 = vrot.lane.b32.xlu0 %v4080, 64
        %v4652 = vpop.permute.xlu0 %4651
        %4653 = vrot.lane.b32.xlu0 %v4131, 64
        %v4654 = vpop.permute.xlu0 %4653
        %4661 = vrot.lane.b32.xlu0 %v3945, 96
        %v4662 = vpop.permute.xlu0 %4661
        %4663 = vrot.lane.b32.xlu0 %v4081, 96
        %v4664 = vpop.permute.xlu0 %4663
        %4665 = vrot.lane.b32.xlu0 %v4149, 96
        %v4666 = vpop.permute.xlu0 %4665
        %4673 = vrot.lane.b32.xlu0 %v3947, 32
        %v4674 = vpop.permute.xlu0 %4673
        %4675 = vrot.lane.b32.xlu0 %v4083, 32
        %v4676 = vpop.permute.xlu0 %4675
        %4677 = vrot.lane.b32.xlu0 %v4150, 32
        %v4678 = vpop.permute.xlu0 %4677
        %4685 = vrot.lane.b32.xlu0 %v3948, 64
        %v4686 = vpop.permute.xlu0 %4685
        %4687 = vrot.lane.b32.xlu0 %v4084, 64
        %v4688 = vpop.permute.xlu0 %4687
        %4689 = vrot.lane.b32.xlu0 %v4147, 64
        %v4690 = vpop.permute.xlu0 %4689
        %4697 = vrot.lane.b32.xlu0 %v3949, 96
        %v4698 = vpop.permute.xlu0 %4697
        %4699 = vrot.lane.b32.xlu0 %v4085, 96
        %v4700 = vpop.permute.xlu0 %4699
        %4701 = vrot.lane.b32.xlu0 %v4151, 96
        %v4702 = vpop.permute.xlu0 %4701
        %4709 = vrot.lane.b32.xlu0 %v4281, 32
        %v4710 = vpop.permute.xlu0 %4709
        %4711 = vrot.lane.b32.xlu0 %v4417, 32
        %v4712 = vpop.permute.xlu0 %4711
        %4713 = vrot.lane.b32.xlu0 %v4486, 32
        %v4714 = vpop.permute.xlu0 %4713
        %4721 = vrot.lane.b32.xlu0 %v4282, 64
        %v4722 = vpop.permute.xlu0 %4721
        %4723 = vrot.lane.b32.xlu0 %v4418, 64
        %v4724 = vpop.permute.xlu0 %4723
        %4725 = vrot.lane.b32.xlu0 %v4469, 64
        %v4726 = vpop.permute.xlu0 %4725
        %4733 = vrot.lane.b32.xlu0 %v4283, 96
        %v4734 = vpop.permute.xlu0 %4733
        %4735 = vrot.lane.b32.xlu0 %v4419, 96
        %v4736 = vpop.permute.xlu0 %4735
        %4737 = vrot.lane.b32.xlu0 %v4487, 96
        %v4738 = vpop.permute.xlu0 %4737
        %4745 = vrot.lane.b32.xlu0 %v4285, 32
        %v4746 = vpop.permute.xlu0 %4745
        %4747 = vrot.lane.b32.xlu0 %v4421, 32
        %v4748 = vpop.permute.xlu0 %4747
        %4749 = vrot.lane.b32.xlu0 %v4488, 32
        %v4750 = vpop.permute.xlu0 %4749
        %4757 = vrot.lane.b32.xlu0 %v4286, 64
        %v4758 = vpop.permute.xlu0 %4757
        %4759 = vrot.lane.b32.xlu0 %v4422, 64
        %v4760 = vpop.permute.xlu0 %4759
        %4761 = vrot.lane.b32.xlu0 %v4485, 64
        %v4762 = vpop.permute.xlu0 %4761
        %4769 = vrot.lane.b32.xlu0 %v4287, 96
        %v4770 = vpop.permute.xlu0 %4769
        %4771 = vrot.lane.b32.xlu0 %v4423, 96
        %v4772 = vpop.permute.xlu0 %4771
        %4773 = vrot.lane.b32.xlu0 %v4489, 96
        %v4774 = vpop.permute.xlu0 %4773
        %v4778 = vsel %vm2187, %v3266, %v4494
        %v4779 = vsel %vm2187, %v3402, %v4496
        %v4780 = vsel %vm2187, %v3448, %v4498
        %v4781 = vsel %vm2199, %v4778, %v4506
        %v4782 = vsel %vm2199, %v4779, %v4508
        %v4783 = vsel %vm2199, %v4780, %v4510
        %v4784 = vsel %vm2211, %v4781, %v4518
        %v4785 = vsel %vm2211, %v4782, %v4520
        %v4786 = vsel %vm2211, %v4783, %v4522
        %v4787 = vsel %vm2187, %v3270, %v4530
        %v4788 = vsel %vm2187, %v3406, %v4532
        %v4789 = vsel %vm2187, %v3464, %v4534
        %v4790 = vsel %vm2199, %v4787, %v4542
        %v4791 = vsel %vm2199, %v4788, %v4544
        %v4792 = vsel %vm2199, %v4789, %v4546
        %v4793 = vsel %vm2211, %v4790, %v4554
        %v4794 = vsel %vm2211, %v4791, %v4556
        %v4795 = vsel %vm2211, %v4792, %v4558
        %v4796 = vsel %vm2187, %v3604, %v4566
        %v4797 = vsel %vm2187, %v3740, %v4568
        %v4798 = vsel %vm2187, %v3786, %v4570
        %v4799 = vsel %vm2199, %v4796, %v4578
        %v4800 = vsel %vm2199, %v4797, %v4580
        %v4801 = vsel %vm2199, %v4798, %v4582
        %v4802 = vsel %vm2211, %v4799, %v4590
        %v4803 = vsel %vm2211, %v4800, %v4592
        %v4804 = vsel %vm2211, %v4801, %v4594
        %v4805 = vsel %vm2187, %v3608, %v4602
        %v4806 = vsel %vm2187, %v3744, %v4604
        %v4807 = vsel %vm2187, %v3802, %v4606
        %v4808 = vsel %vm2199, %v4805, %v4614
        %v4809 = vsel %vm2199, %v4806, %v4616
        %v4810 = vsel %vm2199, %v4807, %v4618
        %v4811 = vsel %vm2211, %v4808, %v4626
        %v4812 = vsel %vm2211, %v4809, %v4628
        %v4813 = vsel %vm2211, %v4810, %v4630
        %v4814 = vsel %vm2187, %v3942, %v4638
        %v4815 = vsel %vm2187, %v4078, %v4640
        %v4816 = vsel %vm2187, %v4124, %v4642
        %v4817 = vsel %vm2199, %v4814, %v4650
        %v4818 = vsel %vm2199, %v4815, %v4652
        %v4819 = vsel %vm2199, %v4816, %v4654
        %v4820 = vsel %vm2211, %v4817, %v4662
        %v4821 = vsel %vm2211, %v4818, %v4664
        %v4822 = vsel %vm2211, %v4819, %v4666
        %v4823 = vsel %vm2187, %v3946, %v4674
        %v4824 = vsel %vm2187, %v4082, %v4676
        %v4825 = vsel %vm2187, %v4140, %v4678
        %v4826 = vsel %vm2199, %v4823, %v4686
        %v4827 = vsel %vm2199, %v4824, %v4688
        %v4828 = vsel %vm2199, %v4825, %v4690
        %v4829 = vsel %vm2211, %v4826, %v4698
        %v4830 = vsel %vm2211, %v4827, %v4700
        %v4831 = vsel %vm2211, %v4828, %v4702
        %v4832 = vsel %vm2187, %v4280, %v4710
        %v4833 = vsel %vm2187, %v4416, %v4712
        %v4834 = vsel %vm2187, %v4462, %v4714
        %v4835 = vsel %vm2199, %v4832, %v4722
        %v4836 = vsel %vm2199, %v4833, %v4724
        %v4837 = vsel %vm2199, %v4834, %v4726
        %v4838 = vsel %vm2211, %v4835, %v4734
        %v4839 = vsel %vm2211, %v4836, %v4736
        %v4840 = vsel %vm2211, %v4837, %v4738
        %v4841 = vsel %vm2187, %v4284, %v4746
        %v4842 = vsel %vm2187, %v4420, %v4748
        %v4843 = vsel %vm2187, %v4478, %v4750
        %v4844 = vsel %vm2199, %v4841, %v4758
        %v4845 = vsel %vm2199, %v4842, %v4760
        %v4846 = vsel %vm2199, %v4843, %v4762
        %v4847 = vsel %vm2211, %v4844, %v4770
        %v4848 = vsel %vm2211, %v4845, %v4772
        %v4849 = vsel %vm2211, %v4846, %v4774
        %4851 = vset.pattern.permute.xlu0 0
        %4852 = vperm.xlu0 %4851, %v2843
        %v4853 = vpop.permute.xlu0 %4852
        %4856 = vset.pattern.permute.xlu0 0
        %4857 = vperm.xlu0 %4856, %v2844
        %v4858 = vpop.permute.xlu0 %4857
        %4861 = vset.pattern.permute.xlu0 0
        %4862 = vperm.xlu0 %4861, %v2845
        %v4863 = vpop.permute.xlu0 %4862
        %4866 = vset.pattern.permute.xlu0 0
        %4867 = vperm.xlu0 %4866, %v2846
        %v4868 = vpop.permute.xlu0 %4867
        %vm4870 = vcmask 146432
        %v4872 = vsel %vm4870, %v2839, 0
        %v4875 = vsel %vm4870, %v2840, 0
        %v4878 = vsel %vm4870, %v2841, 0
        %v4881 = vsel %vm4870, %v2842, 0
        %vm4883 = vcmask 1041408
        %v4885 = vsel %vm4883, %v4786, 0
        %v4888 = vsel %vm4883, %v4795, 0
        %v4891 = vsel %vm4883, %v4804, 0
        %v4894 = vsel %vm4883, %v4813, 0
        %v4897 = vsel %vm4883, %v4822, 0
        %v4900 = vsel %vm4883, %v4831, 0
        %v4903 = vsel %vm4883, %v4840, 0
        %v4906 = vsel %vm4883, %v4849, 0
        %4908 = vmatprep.subr.mxu0 %v4793
        %4909 = vmatpush1.msra.mxu0 %v4784
        %4910 = vmatprep.subr.mxu0 %v4794
        %4911 = vmatpush1.msra.mxu0 %v4785
        %4912 = vmatprep.subr.mxu0 %v4888
        %4913 = vmatpush1.msra.mxu0 %v4885
        %4914 = vmatprep.subr.mxu0 0.0
        %4915 = vmatpush1.msra.mxu0 0.0
        %4916 = vmatprep.subr.mxu0 0.0
        %4917 = vmatpush1.msra.mxu0 0.0
        %4918 = vmatprep.subr.mxu0 0.0
        %4919 = vmatpush1.msra.mxu0 0.0
        %4920 = vmatprep.subr.mxu0 0.0
        %4921 = vmatpush1.msra.mxu0 0.0
        %4922 = vmatprep.subr.mxu0 0.0
        %4923 = vmatpush1.msra.mxu0 0.0
        %4924 = vmatprep.subr.mxu0 0.0
        %4925 = vmatpush1.msra.mxu0 0.0
        %4926 = vmatprep.subr.mxu0 0.0
        %4927 = vmatpush1.msra.mxu0 0.0
        %4928 = vmatprep.subr.mxu0 0.0
        %4929 = vmatpush1.msra.mxu0 0.0
        %4930 = vmatprep.subr.mxu0 0.0
        %4931 = vmatpush1.msra.mxu0 0.0
        %4932 = vmatprep.subr.mxu0 0.0
        %4933 = vmatpush1.msra.mxu0 0.0
        %4934 = vmatprep.subr.mxu0 0.0
        %4935 = vmatpush1.msra.mxu0 0.0
        %4936 = vmatprep.subr.mxu0 0.0
        %4937 = vmatpush1.msra.mxu0 0.0
        %4938 = vmatprep.subr.mxu0 0.0
        %4939 = vmatpush1.msra.mxu0 0.0
        %4940 = vmatprep.subr.mxu0 0.0
        %4941 = vmatpush1.msra.mxu0 0.0
        %4942 = vmatprep.subr.mxu0 0.0
        %4943 = vmatpush1.msra.mxu0 0.0
        %4944 = vmatprep.subr.mxu0 0.0
        %4945 = vmatpush1.msra.mxu0 0.0
        %4946 = vmatprep.subr.mxu0 0.0
        %4947 = vmatpush1.msra.mxu0 0.0
        %4948 = vmatprep.subr.mxu0 0.0
        %4949 = vmatpush1.msra.mxu0 0.0
        %4950 = vmatprep.subr.mxu0 0.0
        %4951 = vmatpush1.msra.mxu0 0.0
        %4952 = vmatprep.subr.mxu0 0.0
        %4953 = vmatpush1.msra.mxu0 0.0
        %4954 = vmatprep.subr.mxu0 0.0
        %4955 = vmatpush1.msra.mxu0 0.0
        %4956 = vmatprep.subr.mxu0 0.0
        %4957 = vmatpush1.msra.mxu0 0.0
        %4958 = vmatprep.subr.mxu0 0.0
        %4959 = vmatpush1.msra.mxu0 0.0
        %4960 = vmatprep.subr.mxu0 0.0
        %4961 = vmatpush1.msra.mxu0 0.0
        %4962 = vmatprep.subr.mxu0 0.0
        %4963 = vmatpush1.msra.mxu0 0.0
        %4964 = vmatprep.subr.mxu0 0.0
        %4965 = vmatpush1.msra.mxu0 0.0
        %4966 = vmatprep.subr.mxu0 0.0
        %4967 = vmatpush1.msra.mxu0 0.0
        %4968 = vmatprep.subr.mxu0 0.0
        %4969 = vmatpush1.msra.mxu0 0.0
        %4970 = vmatprep.subr.mxu0 0.0
        %4971 = vmatpush1.msra.mxu0 0.0
        %4972 = vmatprep.mubr.f32.mxu0 0.0
        %4973 = vmatmul.mubr.f32.gmra.mrb[0].mxu0 %v4872
        %v4974 = vpop.f32.mrb[0].mxu0
        %v4975 = vadd.f32 %v4853, %v4974
        %v4976 = vpop.f32.mrb[0].mxu0
        %v4977 = vadd.f32 %v4853, %v4976
        %4978 = vmatprep.mubr.f32.mxu0 0.0
        %4979 = vmatmul.mubr.f32.gmra.mrb[0].mxu0 %v4875
        %v4980 = vpop.f32.mrb[0].mxu0
        %v4981 = vadd.f32 %v4858, %v4980
        %v4982 = vpop.f32.mrb[0].mxu0
        %v4983 = vadd.f32 %v4858, %v4982
        %4984 = vmatprep.mubr.f32.mxu0 0.0
        %4985 = vmatmul.mubr.f32.gmra.mrb[0].mxu0 %v4878
        %v4986 = vpop.f32.mrb[0].mxu0
        %v4987 = vadd.f32 %v4863, %v4986
        %v4988 = vpop.f32.mrb[0].mxu0
        %v4989 = vadd.f32 %v4863, %v4988
        %4990 = vmatprep.mubr.f32.mxu0 0.0
        %4991 = vmatmul.mubr.f32.gmra.mrb[0].mxu0 %v4881
        %v4992 = vpop.f32.mrb[0].mxu0
        %v4993 = vadd.f32 %v4868, %v4992
        %v4994 = vpop.f32.mrb[0].mxu0
        %v4995 = vadd.f32 %v4868, %v4994
        %4996 = vdwg.mxu0
        %4997 = vmatprep.subr.mxu0 %v4811
        %4998 = vmatpush1.msra.mxu0 %v4802
        %4999 = vmatprep.subr.mxu0 %v4812
        %5000 = vmatpush1.msra.mxu0 %v4803
        %5001 = vmatprep.subr.mxu0 %v4894
        %5002 = vmatpush1.msra.mxu0 %v4891
        %5003 = vmatprep.subr.mxu0 0.0
        %5004 = vmatpush1.msra.mxu0 0.0
        %5005 = vmatprep.subr.mxu0 0.0
        %5006 = vmatpush1.msra.mxu0 0.0
        %5007 = vmatprep.subr.mxu0 0.0
        %5008 = vmatpush1.msra.mxu0 0.0
        %5009 = vmatprep.subr.mxu0 0.0
        %5010 = vmatpush1.msra.mxu0 0.0
        %5011 = vmatprep.subr.mxu0 0.0
        %5012 = vmatpush1.msra.mxu0 0.0
        %5013 = vmatprep.subr.mxu0 0.0
        %5014 = vmatpush1.msra.mxu0 0.0
        %5015 = vmatprep.subr.mxu0 0.0
        %5016 = vmatpush1.msra.mxu0 0.0
        %5017 = vmatprep.subr.mxu0 0.0
        %5018 = vmatpush1.msra.mxu0 0.0
        %5019 = vmatprep.subr.mxu0 0.0
        %5020 = vmatpush1.msra.mxu0 0.0
        %5021 = vmatprep.subr.mxu0 0.0
        %5022 = vmatpush1.msra.mxu0 0.0
        %5023 = vmatprep.subr.mxu0 0.0
        %5024 = vmatpush1.msra.mxu0 0.0
        %5025 = vmatprep.subr.mxu0 0.0
        %5026 = vmatpush1.msra.mxu0 0.0
        %5027 = vmatprep.subr.mxu0 0.0
        %5028 = vmatpush1.msra.mxu0 0.0
        %5029 = vmatprep.subr.mxu0 0.0
        %5030 = vmatpush1.msra.mxu0 0.0
        %5031 = vmatprep.subr.mxu0 0.0
        %5032 = vmatpush1.msra.mxu0 0.0
        %5033 = vmatprep.subr.mxu0 0.0
        %5034 = vmatpush1.msra.mxu0 0.0
        %5035 = vmatprep.subr.mxu0 0.0
        %5036 = vmatpush1.msra.mxu0 0.0
        %5037 = vmatprep.subr.mxu0 0.0
        %5038 = vmatpush1.msra.mxu0 0.0
        %5039 = vmatprep.subr.mxu0 0.0
        %5040 = vmatpush1.msra.mxu0 0.0
        %5041 = vmatprep.subr.mxu0 0.0
        %5042 = vmatpush1.msra.mxu0 0.0
        %5043 = vmatprep.subr.mxu0 0.0
        %5044 = vmatpush1.msra.mxu0 0.0
        %5045 = vmatprep.subr.mxu0 0.0
        %5046 = vmatpush1.msra.mxu0 0.0
        %5047 = vmatprep.subr.mxu0 0.0
        %5048 = vmatpush1.msra.mxu0 0.0
        %5049 = vmatprep.subr.mxu0 0.0
        %5050 = vmatpush1.msra.mxu0 0.0
        %5051 = vmatprep.subr.mxu0 0.0
        %5052 = vmatpush1.msra.mxu0 0.0
        %5053 = vmatprep.subr.mxu0 0.0
        %5054 = vmatpush1.msra.mxu0 0.0
        %5055 = vmatprep.subr.mxu0 0.0
        %5056 = vmatpush1.msra.mxu0 0.0
        %5057 = vmatprep.subr.mxu0 0.0
        %5058 = vmatpush1.msra.mxu0 0.0
        %5059 = vmatprep.subr.mxu0 0.0
        %5060 = vmatpush1.msra.mxu0 0.0
        %5061 = vmatprep.mubr.f32.mxu0 0.0
        %5062 = vmatmul.mubr.f32.gmra.mrb[0].mxu0 %v4872
        %v5063 = vpop.f32.mrb[0].mxu0
        %v5064 = vadd.f32 %v4853, %v5063
        %v5065 = vpop.f32.mrb[0].mxu0
        %v5066 = vadd.f32 %v4853, %v5065
        %5067 = vmatprep.mubr.f32.mxu0 0.0
        %5068 = vmatmul.mubr.f32.gmra.mrb[0].mxu0 %v4875
        %v5069 = vpop.f32.mrb[0].mxu0
        %v5070 = vadd.f32 %v4858, %v5069
        %v5071 = vpop.f32.mrb[0].mxu0
        %v5072 = vadd.f32 %v4858, %v5071
        %5073 = vmatprep.mubr.f32.mxu0 0.0
        %5074 = vmatmul.mubr.f32.gmra.mrb[0].mxu0 %v4878
        %v5075 = vpop.f32.mrb[0].mxu0
        %v5076 = vadd.f32 %v4863, %v5075
        %v5077 = vpop.f32.mrb[0].mxu0
        %v5078 = vadd.f32 %v4863, %v5077
        %5079 = vmatprep.mubr.f32.mxu0 0.0
        %5080 = vmatmul.mubr.f32.gmra.mrb[0].mxu0 %v4881
        %v5081 = vpop.f32.mrb[0].mxu0
        %v5082 = vadd.f32 %v4868, %v5081
        %v5083 = vpop.f32.mrb[0].mxu0
        %v5084 = vadd.f32 %v4868, %v5083
        %5085 = vdwg.mxu0
        %5086 = vmatprep.subr.mxu0 %v4829
        %5087 = vmatpush1.msra.mxu0 %v4820
        %5088 = vmatprep.subr.mxu0 %v4830
        %5089 = vmatpush1.msra.mxu0 %v4821
        %5090 = vmatprep.subr.mxu0 %v4900
        %5091 = vmatpush1.msra.mxu0 %v4897
        %5092 = vmatprep.subr.mxu0 0.0
        %5093 = vmatpush1.msra.mxu0 0.0
        %5094 = vmatprep.subr.mxu0 0.0
        %5095 = vmatpush1.msra.mxu0 0.0
        %5096 = vmatprep.subr.mxu0 0.0
        %5097 = vmatpush1.msra.mxu0 0.0
        %5098 = vmatprep.subr.mxu0 0.0
        %5099 = vmatpush1.msra.mxu0 0.0
        %5100 = vmatprep.subr.mxu0 0.0
        %5101 = vmatpush1.msra.mxu0 0.0
        %5102 = vmatprep.subr.mxu0 0.0
        %5103 = vmatpush1.msra.mxu0 0.0
        %5104 = vmatprep.subr.mxu0 0.0
        %5105 = vmatpush1.msra.mxu0 0.0
        %5106 = vmatprep.subr.mxu0 0.0
        %5107 = vmatpush1.msra.mxu0 0.0
        %5108 = vmatprep.subr.mxu0 0.0
        %5109 = vmatpush1.msra.mxu0 0.0
        %5110 = vmatprep.subr.mxu0 0.0
        %5111 = vmatpush1.msra.mxu0 0.0
        %5112 = vmatprep.subr.mxu0 0.0
        %5113 = vmatpush1.msra.mxu0 0.0
        %5114 = vmatprep.subr.mxu0 0.0
        %5115 = vmatpush1.msra.mxu0 0.0
        %5116 = vmatprep.subr.mxu0 0.0
        %5117 = vmatpush1.msra.mxu0 0.0
        %5118 = vmatprep.subr.mxu0 0.0
        %5119 = vmatpush1.msra.mxu0 0.0
        %5120 = vmatprep.subr.mxu0 0.0
        %5121 = vmatpush1.msra.mxu0 0.0
        %5122 = vmatprep.subr.mxu0 0.0
        %5123 = vmatpush1.msra.mxu0 0.0
        %5124 = vmatprep.subr.mxu0 0.0
        %5125 = vmatpush1.msra.mxu0 0.0
        %5126 = vmatprep.subr.mxu0 0.0
        %5127 = vmatpush1.msra.mxu0 0.0
        %5128 = vmatprep.subr.mxu0 0.0
        %5129 = vmatpush1.msra.mxu0 0.0
        %5130 = vmatprep.subr.mxu0 0.0
        %5131 = vmatpush1.msra.mxu0 0.0
        %5132 = vmatprep.subr.mxu0 0.0
        %5133 = vmatpush1.msra.mxu0 0.0
        %5134 = vmatprep.subr.mxu0 0.0
        %5135 = vmatpush1.msra.mxu0 0.0
        %5136 = vmatprep.subr.mxu0 0.0
        %5137 = vmatpush1.msra.mxu0 0.0
        %5138 = vmatprep.subr.mxu0 0.0
        %5139 = vmatpush1.msra.mxu0 0.0
        %5140 = vmatprep.subr.mxu0 0.0
        %5141 = vmatpush1.msra.mxu0 0.0
        %5142 = vmatprep.subr.mxu0 0.0
        %5143 = vmatpush1.msra.mxu0 0.0
        %5144 = vmatprep.subr.mxu0 0.0
        %5145 = vmatpush1.msra.mxu0 0.0
        %5146 = vmatprep.subr.mxu0 0.0
        %5147 = vmatpush1.msra.mxu0 0.0
        %5148 = vmatprep.subr.mxu0 0.0
        %5149 = vmatpush1.msra.mxu0 0.0
        %5150 = vmatprep.mubr.f32.mxu0 0.0
        %5151 = vmatmul.mubr.f32.gmra.mrb[0].mxu0 %v4872
        %v5152 = vpop.f32.mrb[0].mxu0
        %v5153 = vadd.f32 %v4853, %v5152
        %v5154 = vpop.f32.mrb[0].mxu0
        %v5155 = vadd.f32 %v4853, %v5154
        %5156 = vmatprep.mubr.f32.mxu0 0.0
        %5157 = vmatmul.mubr.f32.gmra.mrb[0].mxu0 %v4875
        %v5158 = vpop.f32.mrb[0].mxu0
        %v5159 = vadd.f32 %v4858, %v5158
        %v5160 = vpop.f32.mrb[0].mxu0
        %v5161 = vadd.f32 %v4858, %v5160
        %5162 = vmatprep.mubr.f32.mxu0 0.0
        %5163 = vmatmul.mubr.f32.gmra.mrb[0].mxu0 %v4878
        %v5164 = vpop.f32.mrb[0].mxu0
        %v5165 = vadd.f32 %v4863, %v5164
        %v5166 = vpop.f32.mrb[0].mxu0
        %v5167 = vadd.f32 %v4863, %v5166
        %5168 = vmatprep.mubr.f32.mxu0 0.0
        %5169 = vmatmul.mubr.f32.gmra.mrb[0].mxu0 %v4881
        %v5170 = vpop.f32.mrb[0].mxu0
        %v5171 = vadd.f32 %v4868, %v5170
        %v5172 = vpop.f32.mrb[0].mxu0
        %v5173 = vadd.f32 %v4868, %v5172
        %5174 = vdwg.mxu0
        %5175 = vmatprep.subr.mxu0 %v4847
        %5176 = vmatpush1.msra.mxu0 %v4838
        %5177 = vmatprep.subr.mxu0 %v4848
        %5178 = vmatpush1.msra.mxu0 %v4839
        %5179 = vmatprep.subr.mxu0 %v4906
        %5180 = vmatpush1.msra.mxu0 %v4903
        %5181 = vmatprep.subr.mxu0 0.0
        %5182 = vmatpush1.msra.mxu0 0.0
        %5183 = vmatprep.subr.mxu0 0.0
        %5184 = vmatpush1.msra.mxu0 0.0
        %5185 = vmatprep.subr.mxu0 0.0
        %5186 = vmatpush1.msra.mxu0 0.0
        %5187 = vmatprep.subr.mxu0 0.0
        %5188 = vmatpush1.msra.mxu0 0.0
        %5189 = vmatprep.subr.mxu0 0.0
        %5190 = vmatpush1.msra.mxu0 0.0
        %5191 = vmatprep.subr.mxu0 0.0
        %5192 = vmatpush1.msra.mxu0 0.0
        %5193 = vmatprep.subr.mxu0 0.0
        %5194 = vmatpush1.msra.mxu0 0.0
        %5195 = vmatprep.subr.mxu0 0.0
        %5196 = vmatpush1.msra.mxu0 0.0
        %5197 = vmatprep.subr.mxu0 0.0
        %5198 = vmatpush1.msra.mxu0 0.0
        %5199 = vmatprep.subr.mxu0 0.0
        %5200 = vmatpush1.msra.mxu0 0.0
        %5201 = vmatprep.subr.mxu0 0.0
        %5202 = vmatpush1.msra.mxu0 0.0
        %5203 = vmatprep.subr.mxu0 0.0
        %5204 = vmatpush1.msra.mxu0 0.0
        %5205 = vmatprep.subr.mxu0 0.0
        %5206 = vmatpush1.msra.mxu0 0.0
        %5207 = vmatprep.subr.mxu0 0.0
        %5208 = vmatpush1.msra.mxu0 0.0
        %5209 = vmatprep.subr.mxu0 0.0
        %5210 = vmatpush1.msra.mxu0 0.0
        %5211 = vmatprep.subr.mxu0 0.0
        %5212 = vmatpush1.msra.mxu0 0.0
        %5213 = vmatprep.subr.mxu0 0.0
        %5214 = vmatpush1.msra.mxu0 0.0
        %5215 = vmatprep.subr.mxu0 0.0
        %5216 = vmatpush1.msra.mxu0 0.0
        %5217 = vmatprep.subr.mxu0 0.0
        %5218 = vmatpush1.msra.mxu0 0.0
        %5219 = vmatprep.subr.mxu0 0.0
        %5220 = vmatpush1.msra.mxu0 0.0
        %5221 = vmatprep.subr.mxu0 0.0
        %5222 = vmatpush1.msra.mxu0 0.0
        %5223 = vmatprep.subr.mxu0 0.0
        %5224 = vmatpush1.msra.mxu0 0.0
        %5225 = vmatprep.subr.mxu0 0.0
        %5226 = vmatpush1.msra.mxu0 0.0
        %5227 = vmatprep.subr.mxu0 0.0
        %5228 = vmatpush1.msra.mxu0 0.0
        %5229 = vmatprep.subr.mxu0 0.0
        %5230 = vmatpush1.msra.mxu0 0.0
        %5231 = vmatprep.subr.mxu0 0.0
        %5232 = vmatpush1.msra.mxu0 0.0
        %5233 = vmatprep.subr.mxu0 0.0
        %5234 = vmatpush1.msra.mxu0 0.0
        %5235 = vmatprep.subr.mxu0 0.0
        %5236 = vmatpush1.msra.mxu0 0.0
        %5237 = vmatprep.subr.mxu0 0.0
        %5238 = vmatpush1.msra.mxu0 0.0
        %5239 = vmatprep.mubr.f32.mxu0 0.0
        %5240 = vmatmul.mubr.f32.gmra.mrb[0].mxu0 %v4872
        %v5241 = vpop.f32.mrb[0].mxu0
        %v5242 = vadd.f32 %v4853, %v5241
        %v5243 = vpop.f32.mrb[0].mxu0
        %v5244 = vadd.f32 %v4853, %v5243
        %5245 = vmatprep.mubr.f32.mxu0 0.0
        %5246 = vmatmul.mubr.f32.gmra.mrb[0].mxu0 %v4875
        %v5247 = vpop.f32.mrb[0].mxu0
        %v5248 = vadd.f32 %v4858, %v5247
        %v5249 = vpop.f32.mrb[0].mxu0
        %v5250 = vadd.f32 %v4858, %v5249
        %5251 = vmatprep.mubr.f32.mxu0 0.0
        %5252 = vmatmul.mubr.f32.gmra.mrb[0].mxu0 %v4878
        %v5253 = vpop.f32.mrb[0].mxu0
        %v5254 = vadd.f32 %v4863, %v5253
        %v5255 = vpop.f32.mrb[0].mxu0
        %v5256 = vadd.f32 %v4863, %v5255
        %5257 = vmatprep.mubr.f32.mxu0 0.0
        %5258 = vmatmul.mubr.f32.gmra.mrb[0].mxu0 %v4881
        %v5259 = vpop.f32.mrb[0].mxu0
        %v5260 = vadd.f32 %v4868, %v5259
        %v5261 = vpop.f32.mrb[0].mxu0
        %v5262 = vadd.f32 %v4868, %v5261
        %5263 = vdwg.mxu0
        %v5264 = vmax.f32 %v4975, 0.0
        %v5265 = vmax.f32 %v4977, 0.0
        %v5266 = vmax.f32 %v5064, 0.0
        %v5267 = vmax.f32 %v5066, 0.0
        %v5268 = vmax.f32 %v5153, 0.0
        %v5269 = vmax.f32 %v5155, 0.0
        %v5270 = vmax.f32 %v5242, 0.0
        %v5271 = vmax.f32 %v5244, 0.0
        %v5272 = vmax.f32 %v4981, 0.0
        %v5273 = vmax.f32 %v4983, 0.0
        %v5274 = vmax.f32 %v5070, 0.0
        %v5275 = vmax.f32 %v5072, 0.0
        %v5276 = vmax.f32 %v5159, 0.0
        %v5277 = vmax.f32 %v5161, 0.0
        %v5278 = vmax.f32 %v5248, 0.0
        %v5279 = vmax.f32 %v5250, 0.0
        %v5280 = vmax.f32 %v4987, 0.0
        %v5281 = vmax.f32 %v4989, 0.0
        %v5282 = vmax.f32 %v5076, 0.0
        %v5283 = vmax.f32 %v5078, 0.0
        %v5284 = vmax.f32 %v5165, 0.0
        %v5285 = vmax.f32 %v5167, 0.0
        %v5286 = vmax.f32 %v5254, 0.0
        %v5287 = vmax.f32 %v5256, 0.0
        %v5288 = vmax.f32 %v4993, 0.0
        %v5289 = vmax.f32 %v4995, 0.0
        %v5290 = vmax.f32 %v5082, 0.0
        %v5291 = vmax.f32 %v5084, 0.0
        %v5292 = vmax.f32 %v5171, 0.0
        %v5293 = vmax.f32 %v5173, 0.0
        %v5294 = vmax.f32 %v5260, 0.0
        %v5295 = vmax.f32 %v5262, 0.0
        %v5296 = vld [vmem:[%s5] sm:$0x7]
        %v5297 = vld [vmem:[%s6] sm:$0x7]
        %5299 = vset.pattern.permute.xlu0 0
        %5300 = vperm.xlu0 %5299, %v5297
        %v5301 = vpop.permute.xlu0 %5300
        %v5304 = vsel %vm2187, %v5296, 0
        %5306 = vmatprep.subr.mxu0 %v5265
        %5307 = vmatpush1.msra.mxu0 %v5264
        %5308 = vmatprep.subr.mxu0 %v5273
        %5309 = vmatpush1.msra.mxu0 %v5272
        %5310 = vmatprep.subr.mxu0 %v5281
        %5311 = vmatpush1.msra.mxu0 %v5280
        %5312 = vmatprep.subr.mxu0 %v5289
        %5313 = vmatpush1.msra.mxu0 %v5288
        %5314 = vmatprep.subr.mxu0 0.0
        %5315 = vmatpush1.msra.mxu0 0.0
        %5316 = vmatprep.subr.mxu0 0.0
        %5317 = vmatpush1.msra.mxu0 0.0
        %5318 = vmatprep.subr.mxu0 0.0
        %5319 = vmatpush1.msra.mxu0 0.0
        %5320 = vmatprep.subr.mxu0 0.0
        %5321 = vmatpush1.msra.mxu0 0.0
        %5322 = vmatprep.subr.mxu0 0.0
        %5323 = vmatpush1.msra.mxu0 0.0
        %5324 = vmatprep.subr.mxu0 0.0
        %5325 = vmatpush1.msra.mxu0 0.0
        %5326 = vmatprep.subr.mxu0 0.0
        %5327 = vmatpush1.msra.mxu0 0.0
        %5328 = vmatprep.subr.mxu0 0.0
        %5329 = vmatpush1.msra.mxu0 0.0
        %5330 = vmatprep.subr.mxu0 0.0
        %5331 = vmatpush1.msra.mxu0 0.0
        %5332 = vmatprep.subr.mxu0 0.0
        %5333 = vmatpush1.msra.mxu0 0.0
        %5334 = vmatprep.subr.mxu0 0.0
        %5335 = vmatpush1.msra.mxu0 0.0
        %5336 = vmatprep.subr.mxu0 0.0
        %5337 = vmatpush1.msra.mxu0 0.0
        %5338 = vmatprep.subr.mxu0 0.0
        %5339 = vmatpush1.msra.mxu0 0.0
        %5340 = vmatprep.subr.mxu0 0.0
        %5341 = vmatpush1.msra.mxu0 0.0
        %5342 = vmatprep.subr.mxu0 0.0
        %5343 = vmatpush1.msra.mxu0 0.0
        %5344 = vmatprep.subr.mxu0 0.0
        %5345 = vmatpush1.msra.mxu0 0.0
        %5346 = vmatprep.subr.mxu0 0.0
        %5347 = vmatpush1.msra.mxu0 0.0
        %5348 = vmatprep.subr.mxu0 0.0
        %5349 = vmatpush1.msra.mxu0 0.0
        %5350 = vmatprep.subr.mxu0 0.0
        %5351 = vmatpush1.msra.mxu0 0.0
        %5352 = vmatprep.subr.mxu0 0.0
        %5353 = vmatpush1.msra.mxu0 0.0
        %5354 = vmatprep.subr.mxu0 0.0
        %5355 = vmatpush1.msra.mxu0 0.0
        %5356 = vmatprep.subr.mxu0 0.0
        %5357 = vmatpush1.msra.mxu0 0.0
        %5358 = vmatprep.subr.mxu0 0.0
        %5359 = vmatpush1.msra.mxu0 0.0
        %5360 = vmatprep.subr.mxu0 0.0
        %5361 = vmatpush1.msra.mxu0 0.0
        %5362 = vmatprep.subr.mxu0 0.0
        %5363 = vmatpush1.msra.mxu0 0.0
        %5364 = vmatprep.subr.mxu0 0.0
        %5365 = vmatpush1.msra.mxu0 0.0
        %5366 = vmatprep.subr.mxu0 0.0
        %5367 = vmatpush1.msra.mxu0 0.0
        %5368 = vmatprep.subr.mxu0 0.0
        %5369 = vmatpush1.msra.mxu0 0.0
        %5370 = vmatprep.mubr.f32.mxu0 0.0
        %5371 = vmatmul.mubr.f32.gmra.mrb[0].mxu0 %v5304
        %v5372 = vpop.f32.mrb[0].mxu0
        %v5373 = vadd.f32 %v5301, %v5372
        %v5374 = vpop.f32.mrb[0].mxu0
        %v5375 = vadd.f32 %v5301, %v5374
        %5376 = vdwg.mxu0
        %5377 = vmatprep.subr.mxu0 %v5267
        %5378 = vmatpush1.msra.mxu0 %v5266
        %5379 = vmatprep.subr.mxu0 %v5275
        %5380 = vmatpush1.msra.mxu0 %v5274
        %5381 = vmatprep.subr.mxu0 %v5283
        %5382 = vmatpush1.msra.mxu0 %v5282
        %5383 = vmatprep.subr.mxu0 %v5291
        %5384 = vmatpush1.msra.mxu0 %v5290
        %5385 = vmatprep.subr.mxu0 0.0
        %5386 = vmatpush1.msra.mxu0 0.0
        %5387 = vmatprep.subr.mxu0 0.0
        %5388 = vmatpush1.msra.mxu0 0.0
        %5389 = vmatprep.subr.mxu0 0.0
        %5390 = vmatpush1.msra.mxu0 0.0
        %5391 = vmatprep.subr.mxu0 0.0
        %5392 = vmatpush1.msra.mxu0 0.0
        %5393 = vmatprep.subr.mxu0 0.0
        %5394 = vmatpush1.msra.mxu0 0.0
        %5395 = vmatprep.subr.mxu0 0.0
        %5396 = vmatpush1.msra.mxu0 0.0
        %5397 = vmatprep.subr.mxu0 0.0
        %5398 = vmatpush1.msra.mxu0 0.0
        %5399 = vmatprep.subr.mxu0 0.0
        %5400 = vmatpush1.msra.mxu0 0.0
        %5401 = vmatprep.subr.mxu0 0.0
        %5402 = vmatpush1.msra.mxu0 0.0
        %5403 = vmatprep.subr.mxu0 0.0
        %5404 = vmatpush1.msra.mxu0 0.0
        %5405 = vmatprep.subr.mxu0 0.0
        %5406 = vmatpush1.msra.mxu0 0.0
        %5407 = vmatprep.subr.mxu0 0.0
        %5408 = vmatpush1.msra.mxu0 0.0
        %5409 = vmatprep.subr.mxu0 0.0
        %5410 = vmatpush1.msra.mxu0 0.0
        %5411 = vmatprep.subr.mxu0 0.0
        %5412 = vmatpush1.msra.mxu0 0.0
        %5413 = vmatprep.subr.mxu0 0.0
        %5414 = vmatpush1.msra.mxu0 0.0
        %5415 = vmatprep.subr.mxu0 0.0
        %5416 = vmatpush1.msra.mxu0 0.0
        %5417 = vmatprep.subr.mxu0 0.0
        %5418 = vmatpush1.msra.mxu0 0.0
        %5419 = vmatprep.subr.mxu0 0.0
        %5420 = vmatpush1.msra.mxu0 0.0
        %5421 = vmatprep.subr.mxu0 0.0
        %5422 = vmatpush1.msra.mxu0 0.0
        %5423 = vmatprep.subr.mxu0 0.0
        %5424 = vmatpush1.msra.mxu0 0.0
        %5425 = vmatprep.subr.mxu0 0.0
        %5426 = vmatpush1.msra.mxu0 0.0
        %5427 = vmatprep.subr.mxu0 0.0
        %5428 = vmatpush1.msra.mxu0 0.0
        %5429 = vmatprep.subr.mxu0 0.0
        %5430 = vmatpush1.msra.mxu0 0.0
        %5431 = vmatprep.subr.mxu0 0.0
        %5432 = vmatpush1.msra.mxu0 0.0
        %5433 = vmatprep.subr.mxu0 0.0
        %5434 = vmatpush1.msra.mxu0 0.0
        %5435 = vmatprep.subr.mxu0 0.0
        %5436 = vmatpush1.msra.mxu0 0.0
        %5437 = vmatprep.subr.mxu0 0.0
        %5438 = vmatpush1.msra.mxu0 0.0
        %5439 = vmatprep.subr.mxu0 0.0
        %5440 = vmatpush1.msra.mxu0 0.0
        %5441 = vmatprep.mubr.f32.mxu0 0.0
        %5442 = vmatmul.mubr.f32.gmra.mrb[0].mxu0 %v5304
        %v5443 = vpop.f32.mrb[0].mxu0
        %v5444 = vadd.f32 %v5301, %v5443
        %v5445 = vpop.f32.mrb[0].mxu0
        %v5446 = vadd.f32 %v5301, %v5445
        %5447 = vdwg.mxu0
        %5448 = vmatprep.subr.mxu0 %v5269
        %5449 = vmatpush1.msra.mxu0 %v5268
        %5450 = vmatprep.subr.mxu0 %v5277
        %5451 = vmatpush1.msra.mxu0 %v5276
        %5452 = vmatprep.subr.mxu0 %v5285
        %5453 = vmatpush1.msra.mxu0 %v5284
        %5454 = vmatprep.subr.mxu0 %v5293
        %5455 = vmatpush1.msra.mxu0 %v5292
        %5456 = vmatprep.subr.mxu0 0.0
        %5457 = vmatpush1.msra.mxu0 0.0
        %5458 = vmatprep.subr.mxu0 0.0
        %5459 = vmatpush1.msra.mxu0 0.0
        %5460 = vmatprep.subr.mxu0 0.0
        %5461 = vmatpush1.msra.mxu0 0.0
        %5462 = vmatprep.subr.mxu0 0.0
        %5463 = vmatpush1.msra.mxu0 0.0
        %5464 = vmatprep.subr.mxu0 0.0
        %5465 = vmatpush1.msra.mxu0 0.0
        %5466 = vmatprep.subr.mxu0 0.0
        %5467 = vmatpush1.msra.mxu0 0.0
        %5468 = vmatprep.subr.mxu0 0.0
        %5469 = vmatpush1.msra.mxu0 0.0
        %5470 = vmatprep.subr.mxu0 0.0
        %5471 = vmatpush1.msra.mxu0 0.0
        %5472 = vmatprep.subr.mxu0 0.0
        %5473 = vmatpush1.msra.mxu0 0.0
        %5474 = vmatprep.subr.mxu0 0.0
        %5475 = vmatpush1.msra.mxu0 0.0
        %5476 = vmatprep.subr.mxu0 0.0
        %5477 = vmatpush1.msra.mxu0 0.0
        %5478 = vmatprep.subr.mxu0 0.0
        %5479 = vmatpush1.msra.mxu0 0.0
        %5480 = vmatprep.subr.mxu0 0.0
        %5481 = vmatpush1.msra.mxu0 0.0
        %5482 = vmatprep.subr.mxu0 0.0
        %5483 = vmatpush1.msra.mxu0 0.0
        %5484 = vmatprep.subr.mxu0 0.0
        %5485 = vmatpush1.msra.mxu0 0.0
        %5486 = vmatprep.subr.mxu0 0.0
        %5487 = vmatpush1.msra.mxu0 0.0
        %5488 = vmatprep.subr.mxu0 0.0
        %5489 = vmatpush1.msra.mxu0 0.0
        %5490 = vmatprep.subr.mxu0 0.0
        %5491 = vmatpush1.msra.mxu0 0.0
        %5492 = vmatprep.subr.mxu0 0.0
        %5493 = vmatpush1.msra.mxu0 0.0
        %5494 = vmatprep.subr.mxu0 0.0
        %5495 = vmatpush1.msra.mxu0 0.0
        %5496 = vmatprep.subr.mxu0 0.0
        %5497 = vmatpush1.msra.mxu0 0.0
        %5498 = vmatprep.subr.mxu0 0.0
        %5499 = vmatpush1.msra.mxu0 0.0
        %5500 = vmatprep.subr.mxu0 0.0
        %5501 = vmatpush1.msra.mxu0 0.0
        %5502 = vmatprep.subr.mxu0 0.0
        %5503 = vmatpush1.msra.mxu0 0.0
        %5504 = vmatprep.subr.mxu0 0.0
        %5505 = vmatpush1.msra.mxu0 0.0
        %5506 = vmatprep.subr.mxu0 0.0
        %5507 = vmatpush1.msra.mxu0 0.0
        %5508 = vmatprep.subr.mxu0 0.0
        %5509 = vmatpush1.msra.mxu0 0.0
        %5510 = vmatprep.subr.mxu0 0.0
        %5511 = vmatpush1.msra.mxu0 0.0
        %5512 = vmatprep.mubr.f32.mxu0 0.0
        %5513 = vmatmul.mubr.f32.gmra.mrb[0].mxu0 %v5304
        %v5514 = vpop.f32.mrb[0].mxu0
        %v5515 = vadd.f32 %v5301, %v5514
        %v5516 = vpop.f32.mrb[0].mxu0
        %v5517 = vadd.f32 %v5301, %v5516
        %5518 = vdwg.mxu0
        %5519 = vmatprep.subr.mxu0 %v5271
        %5520 = vmatpush1.msra.mxu0 %v5270
        %5521 = vmatprep.subr.mxu0 %v5279
        %5522 = vmatpush1.msra.mxu0 %v5278
        %5523 = vmatprep.subr.mxu0 %v5287
        %5524 = vmatpush1.msra.mxu0 %v5286
        %5525 = vmatprep.subr.mxu0 %v5295
        %5526 = vmatpush1.msra.mxu0 %v5294
        %5527 = vmatprep.subr.mxu0 0.0
        %5528 = vmatpush1.msra.mxu0 0.0
        %5529 = vmatprep.subr.mxu0 0.0
        %5530 = vmatpush1.msra.mxu0 0.0
        %5531 = vmatprep.subr.mxu0 0.0
        %5532 = vmatpush1.msra.mxu0 0.0
        %5533 = vmatprep.subr.mxu0 0.0
        %5534 = vmatpush1.msra.mxu0 0.0
        %5535 = vmatprep.subr.mxu0 0.0
        %5536 = vmatpush1.msra.mxu0 0.0
        %5537 = vmatprep.subr.mxu0 0.0
        %5538 = vmatpush1.msra.mxu0 0.0
        %5539 = vmatprep.subr.mxu0 0.0
        %5540 = vmatpush1.msra.mxu0 0.0
        %5541 = vmatprep.subr.mxu0 0.0
        %5542 = vmatpush1.msra.mxu0 0.0
        %5543 = vmatprep.subr.mxu0 0.0
        %5544 = vmatpush1.msra.mxu0 0.0
        %5545 = vmatprep.subr.mxu0 0.0
        %5546 = vmatpush1.msra.mxu0 0.0
        %5547 = vmatprep.subr.mxu0 0.0
        %5548 = vmatpush1.msra.mxu0 0.0
        %5549 = vmatprep.subr.mxu0 0.0
        %5550 = vmatpush1.msra.mxu0 0.0
        %5551 = vmatprep.subr.mxu0 0.0
        %5552 = vmatpush1.msra.mxu0 0.0
        %5553 = vmatprep.subr.mxu0 0.0
        %5554 = vmatpush1.msra.mxu0 0.0
        %5555 = vmatprep.subr.mxu0 0.0
        %5556 = vmatpush1.msra.mxu0 0.0
        %5557 = vmatprep.subr.mxu0 0.0
        %5558 = vmatpush1.msra.mxu0 0.0
        %5559 = vmatprep.subr.mxu0 0.0
        %5560 = vmatpush1.msra.mxu0 0.0
        %5561 = vmatprep.subr.mxu0 0.0
        %5562 = vmatpush1.msra.mxu0 0.0
        %5563 = vmatprep.subr.mxu0 0.0
        %5564 = vmatpush1.msra.mxu0 0.0
        %5565 = vmatprep.subr.mxu0 0.0
        %5566 = vmatpush1.msra.mxu0 0.0
        %5567 = vmatprep.subr.mxu0 0.0
        %5568 = vmatpush1.msra.mxu0 0.0
        %5569 = vmatprep.subr.mxu0 0.0
        %5570 = vmatpush1.msra.mxu0 0.0
        %5571 = vmatprep.subr.mxu0 0.0
        %5572 = vmatpush1.msra.mxu0 0.0
        %5573 = vmatprep.subr.mxu0 0.0
        %5574 = vmatpush1.msra.mxu0 0.0
        %5575 = vmatprep.subr.mxu0 0.0
        %5576 = vmatpush1.msra.mxu0 0.0
        %5577 = vmatprep.subr.mxu0 0.0
        %5578 = vmatpush1.msra.mxu0 0.0
        %5579 = vmatprep.subr.mxu0 0.0
        %5580 = vmatpush1.msra.mxu0 0.0
        %5581 = vmatprep.subr.mxu0 0.0
        %5582 = vmatpush1.msra.mxu0 0.0
        %5583 = vmatprep.mubr.f32.mxu0 0.0
        %5584 = vmatmul.mubr.f32.gmra.mrb[0].mxu0 %v5304
        %v5585 = vpop.f32.mrb[0].mxu0
        %v5586 = vadd.f32 %v5301, %v5585
        %v5587 = vpop.f32.mrb[0].mxu0
        %v5588 = vadd.f32 %v5301, %v5587
        %5589 = vdwg.mxu0
        %v5590 = vmax.f32 %v5373, 0.0
        %v5591 = vmax.f32 %v5375, 0.0
        %v5592 = vmax.f32 %v5444, 0.0
        %v5593 = vmax.f32 %v5446, 0.0
        %v5594 = vmax.f32 %v5515, 0.0
        %v5595 = vmax.f32 %v5517, 0.0
        %v5596 = vmax.f32 %v5586, 0.0
        %v5597 = vmax.f32 %v5588, 0.0
        %v5606 = vcombine.low %v5590, %v5591
        %v5607 = vcombine.low %v5592, %v5593
        %v5608 = vcombine.low %v5594, %v5595
        %v5609 = vcombine.low %v5596, %v5597
        %5614 = vst [vmem:[%s345] sm:$0x77] %v5606
        %5615 = vst [vmem:[%s345 + $0x8] sm:$0x77] %v5607
        %5616 = vst [vmem:[%s345 + $0x10] sm:$0x77] %v5608
        %5617 = vst [vmem:[%s345 + $0x18] sm:$0x77] %v5609
        %p5618 = scmp.lt.s32.totalorder %s21, 1
        %s5619 = scalar_select %p5618, %s21, 1
        %s5620 = smul.addr %s5619, 8
        %s5621 = smul.addr %s5620, 4
        %s5622 = scalar_lea.vmem %s9, %s5621
        // Predicated region
        $region61: #{tpu_custom_call.1} parent=55 // pred_check
          %p5623 = pneg %p233
        $region62: #{tpu_custom_call.1} parent=55 // pred_check_branch
          %5625 = sbr.rel (%p5623) target = $region64
        $region63: #{tpu_custom_call.1} parent=55 // pred_region
          _
        $region64: #{tpu_custom_call.1} parent=55 // pred_fallthru
          _
      $region56: #{tpu_custom_call.1} parent=5 // pred_fallthru
        _
      %p5626 = scmp.le.s32.totalorder 2, %s16
      // Predicated region
      $region65: #{tpu_custom_call.1} parent=5 // pred_check
        %p5627 = pneg %p5626
      $region66: #{tpu_custom_call.1} parent=5 // pred_check_branch
        %5629 = sbr.rel (%p5627) target = $region68
      $region67: #{tpu_custom_call.1} parent=5 // pred_region
        %s5630 = ssub.s32 %s16, 2
        // Predicated region
        $region69: #{tpu_custom_call.1} parent=67 // pred_check
          %p5631 = pneg %p239
        $region70: #{tpu_custom_call.1} parent=67 // pred_check_branch
          %5633 = sbr.rel (%p5631) target = $region72
        $region71: #{tpu_custom_call.1} parent=67 // pred_region
          %p5634 = scmp.lt.s32.totalorder %s22, 1
          %s5635 = scalar_select %p5634, %s22, 1
          %s5636 = smul.addr %s5635, 8
          %s5637 = smul.addr %s5636, 4
          %s5638 = scalar_lea.vmem %s9, %s5637
        $region72: #{tpu_custom_call.1} parent=67 // pred_fallthru
          _
      $region68: #{tpu_custom_call.1} parent=5 // pred_fallthru
        _
    $region6: #{tpu_custom_call.1} parent=1 // loop_footer
      %s20 = sadd.s32 1, %s16
    $region7: #{tpu_custom_call.1} parent=1 // loop_footer_branch
      %15 = sbr.rel target = $region3
    $region8: #{tpu_custom_call.1} parent=1 // loop_exit
      _
    %5639 = vsyncpa [#allocation3], 1
    %s5640 = scalar_lea.sflag [#allocation3], 1
    %5641 = vsyncpa %s5640, 1

</llo_original>
